<compile_context>
chip_gen: v7x
topology: tpu7x:2x2x1
jax: 0.10.0
libtpu: 0.0.40
codegen_flags: <defaults>
</compile_context>

<pallas_src>
import jax
import jax.numpy as jnp
from jax.experimental import pallas as pl
from jax.experimental.pallas import tpu as pltpu

# Explicit precision decision (see review): bf16 MXU operands, f32 accumulation.
# Set to jnp.float32 to trade ~2x operand DMA bytes for tighter numerics.
MXU_DTYPE = jnp.bfloat16


# ----------------------------------------------------------------------------
# Pallas kernels
# ----------------------------------------------------------------------------
def _conv_relu_pool_kernel(p_ref, w_ref, b_ref, o_ref):
    """Fused conv(as matmul) + bias + ReLU + 2x2 max-pool.

    p_ref: (4, TG, Kp)  im2col patches; leading axis = the 4 positions of a 2x2
                        pooling window, rows = pooled output pixels, Kp padded
                        to a multiple of 128.
    w_ref: (Kp, C)      packed conv weights (out-channels zero-padded to C).
    b_ref: (1, C)       bias (f32, zero-padded).
    o_ref: (TG, C)      pooled activation (row = (b, i, j), col = channel).
    """
    four, tg, kp = p_ref.shape
    w = w_ref[...]
    pack = 32 // jnp.dtype(p_ref.dtype).itemsize   # sublane packing: 8 f32 / 16 bf16
    if tg % pack == 0:
        # One long MXU feed (M = 4*TG), then max-reduce over the 4 pool positions.
        acc = jnp.dot(p_ref[...].reshape(four * tg, kp), w,
                      preferred_element_type=jnp.float32)
        acc = jnp.max(acc.reshape(four, tg, -1), axis=0)
    else:
        # Unaligned edge tile: fall back to 4 separate matmuls (still correct).
        acc = jnp.dot(p_ref[0], w, preferred_element_type=jnp.float32)
        for q in range(1, four):
            acc = jnp.maximum(
                acc, jnp.dot(p_ref[q], w, preferred_element_type=jnp.float32))
    # max_q(relu(x_q + b)) == relu(max_q(x_q) + b): bias/ReLU applied once, post-pool.
    o_ref[...] = jnp.maximum(acc + b_ref[...], 0.0).astype(o_ref.dtype)


def _fc3_fused_kernel(x_ref, w1_ref, b1_ref, w2_ref, b2_ref, w3_ref, b3_ref, o_ref):
    """fc1+ReLU -> fc2+ReLU -> fc3; all weights resident in VMEM, one launch."""
    dt = w1_ref.dtype
    h = jnp.dot(x_ref[...], w1_ref[...], preferred_element_type=jnp.float32) + b1_ref[...]
    h = jnp.maximum(h, 0.0).astype(dt)
    h = jnp.dot(h, w2_ref[...], preferred_element_type=jnp.float32) + b2_ref[...]
    h = jnp.maximum(h, 0.0).astype(dt)
    o_ref[...] = (jnp.dot(h, w3_ref[...], preferred_element_type=jnp.float32)
                  + b3_ref[...]).astype(o_ref.dtype)


# ----------------------------------------------------------------------------
# Tiling helpers
# ----------------------------------------------------------------------------
def _round_up(x, m):
    return ((x + m - 1) // m) * m


def _row_tile(total, target):
    """(tile, nblk): tile is a multiple of 16 (or the full dim), bounded by
    `target` rows (VMEM), and chosen so there are >=2 grid blocks whenever the
    row count allows it (keeps both v7x TensorCores busy).  nblk uses cdiv, so
    edge blocks may be partial — Pallas masks the out-of-range rows."""
    t = min(target, _round_up(pl.cdiv(total, 2), 16))
    if t >= total:
        return total, 1
    return t, pl.cdiv(total, t)


# ----------------------------------------------------------------------------
# Pallas wrappers
# ----------------------------------------------------------------------------
def conv_relu_pool(p4, w_mat, b_row, *, tile_rows=2048):
    """p4: (4, G, Kp) pool-grouped im2col patches -> (G, C) pooled activation."""
    _, G, Kp = p4.shape
    C = w_mat.shape[1]
    tg, nblk = _row_tile(G, tile_rows)
    itemsize = p4.dtype.itemsize
    flops = 2 * 4 * G * Kp * C
    bytes_acc = (4 * G * Kp + Kp * C + G * C) * itemsize + 4 * C
    return pl.pallas_call(
        _conv_relu_pool_kernel,
        out_shape=jax.ShapeDtypeStruct((G, C), p4.dtype),
        grid=(nblk,),
        in_specs=[
            pl.BlockSpec((4, tg, Kp), lambda g: (0, g, 0)),
            pl.BlockSpec((Kp, C), lambda g: (0, 0)),      # weights resident
            pl.BlockSpec((1, C), lambda g: (0, 0)),       # bias resident
        ],
        out_specs=pl.BlockSpec((tg, C), lambda g: (g, 0)),
        compiler_params=pltpu.CompilerParams(dimension_semantics=("parallel",)),
        cost_estimate=pl.CostEstimate(flops=flops, transcendentals=0,
                                      bytes_accessed=int(bytes_acc)),
    )(p4, w_mat, b_row)


def fc_fused(x, w1, b1, w2, b2, w3, b3, *, tile_rows=2048):
    """(B, 400) -> (B, 10); fc1+fc2+fc3 with ReLUs fused into one kernel."""
    B, K1 = x.shape
    H1, H2, NO = w1.shape[1], w2.shape[1], w3.shape[1]
    tb, nblk = _row_tile(B, tile_rows)
    flops = 2 * B * (K1 * H1 + H1 * H2 + H2 * NO)
    bytes_acc = ((B * K1 + K1 * H1 + H1 * H2 + H2 * NO) * x.dtype.itemsize
                 + 4 * B * NO)
    return pl.pallas_call(
        _fc3_fused_kernel,
        out_shape=jax.ShapeDtypeStruct((B, NO), jnp.float32),
        grid=(nblk,),
        in_specs=[
            pl.BlockSpec((tb, K1), lambda i: (i, 0)),
            pl.BlockSpec(w1.shape, lambda i: (0, 0)),
            pl.BlockSpec((1, H1), lambda i: (0, 0)),
            pl.BlockSpec(w2.shape, lambda i: (0, 0)),
            pl.BlockSpec((1, H2), lambda i: (0, 0)),
            pl.BlockSpec(w3.shape, lambda i: (0, 0)),
            pl.BlockSpec((1, NO), lambda i: (0, 0)),
        ],
        out_specs=pl.BlockSpec((tb, NO), lambda i: (i, 0)),
        compiler_params=pltpu.CompilerParams(dimension_semantics=("parallel",)),
        cost_estimate=pl.CostEstimate(flops=flops, transcendentals=0,
                                      bytes_accessed=int(bytes_acc)),
    )(x, w1, b1, w2, b2, w3, b3)


# ----------------------------------------------------------------------------
# Plain-JAX glue (patch extraction) + offline weight packing
# ----------------------------------------------------------------------------
def _im2col_pool_groups(x, K, k_pad):
    """x: (B, H, W, C) NHWC -> (4, B*Ho2*Wo2, k_pad).

    Leading axis indexes the 4 positions of each 2x2 pooling window (the fused
    kernel pools via an elementwise max over it), rows are (b, i, j) of the
    pooled output, and patch columns are ordered (di, dj, ci) to match the
    packed conv weights; the contraction dim is zero-padded to k_pad.
    """
    B, H, W, C = x.shape
    Ho, Wo = H - K + 1, W - K + 1
    Ho2, Wo2 = Ho // 2, Wo // 2
    cols = [x[:, di:di + Ho, dj:dj + Wo, :] for di in range(K) for dj in range(K)]
    p = jnp.stack(cols, axis=3).reshape(B, Ho, Wo, K * K * C)
    p = p[:, :Ho2 * 2, :Wo2 * 2, :]
    p = p.reshape(B, Ho2, 2, Wo2, 2, K * K * C)
    p = jnp.transpose(p, (2, 4, 0, 1, 3, 5))            # (r, c, b, i, j, cols)
    p = p.reshape(4, B * Ho2 * Wo2, K * K * C)
    if k_pad > K * K * C:
        p = jnp.pad(p, ((0, 0), (0, 0), (0, k_pad - K * K * C)))
    return p


def init_params(key):
    """Deterministic PyTorch-default-style uniform init (+-1/sqrt(fan_in))."""
    def uinit(k, shape, fan_in):
        bound = 1.0 / jnp.sqrt(fan_in)
        return jax.random.uniform(k, shape, jnp.float32, -bound, bound)

    ks = jax.random.split(key, 10)
    p = {}
    p["conv1_w"] = uinit(ks[0], (6, 3, 5, 5), 3 * 5 * 5)
    p["conv1_b"] = uinit(ks[1], (6,), 3 * 5 * 5)
    p["conv2_w"] = uinit(ks[2], (16, 6, 5, 5), 6 * 5 * 5)
    p["conv2_b"] = uinit(ks[3], (16,), 6 * 5 * 5)
    p["fc1_w"] = uinit(ks[4], (120, 400), 400)
    p["fc1_b"] = uinit(ks[5], (120,), 400)
    p["fc2_w"] = uinit(ks[6], (84, 120), 120)
    p["fc2_b"] = uinit(ks[7], (84,), 120)
    p["fc3_w"] = uinit(ks[8], (10, 84), 84)
    p["fc3_b"] = uinit(ks[9], (10,), 84)
    return p


def prepare_inference_weights(params, dtype=MXU_DTYPE):
    """One-time packing: conv weights -> (Kpad, Cpad); FC weights pre-transposed,
    the torch-NCHW flatten permutation folded into fc1; everything cast to the
    MXU operand dtype.  Padded rows/cols are zero, so padded lanes stay exactly
    zero through the whole network."""
    def pad_to(m, rows, cols):
        m = jnp.pad(m, ((0, rows - m.shape[0]), (0, cols - m.shape[1])))
        return m.astype(dtype)

    def bias_row(v, cols):
        return jnp.pad(v, (0, cols - v.shape[0])).reshape(1, cols).astype(jnp.float32)

    # conv1: (6,3,5,5) -> (KH,KW,Cin,Cout) -> (75,6) -> (128,8)
    w1 = jnp.transpose(params["conv1_w"], (2, 3, 1, 0)).reshape(75, 6)
    # conv2: (16,6,5,5) -> (KH,KW,Cin,Cout), pad Cin 6->8 -> (200,16) -> (256,16)
    w2 = jnp.transpose(params["conv2_w"], (2, 3, 1, 0))
    w2 = jnp.pad(w2, ((0, 0), (0, 0), (0, 2), (0, 0))).reshape(200, 16)
    # fc1: torch feature index = c*25 + p (NCHW flatten); ours = p*16 + c (NHWC).
    f1 = params["fc1_w"].reshape(120, 16, 25)            # (o, c, p)
    f1 = jnp.transpose(f1, (2, 1, 0)).reshape(400, 120)  # row = p*16 + c
    f2 = params["fc2_w"].T                               # (120, 84)
    f3 = params["fc3_w"].T                               # (84, 10)
    return {
        "conv1_w": pad_to(w1, 128, 8),    "conv1_b": bias_row(params["conv1_b"], 8),
        "conv2_w": pad_to(w2, 256, 16),   "conv2_b": bias_row(params["conv2_b"], 16),
        "fc1_w": pad_to(f1, 400, 128),    "fc1_b": bias_row(params["fc1_b"], 128),
        "fc2_w": pad_to(f2, 128, 128),    "fc2_b": bias_row(params["fc2_b"], 128),
        "fc3_w": pad_to(f3, 128, 10),     "fc3_b": bias_row(params["fc3_b"], 10),
    }


def forward(prep, x_nchw):
    B = x_nchw.shape[0]
    x = jnp.transpose(x_nchw, (0, 2, 3, 1)).astype(MXU_DTYPE)    # NHWC (B,32,32,3)

    # stage 1: conv1(5x5, 3->6) + ReLU + 2x2 maxpool, one fused Pallas kernel
    p1 = _im2col_pool_groups(x, 5, k_pad=128)                    # (4, B*196, 128)
    y1 = conv_relu_pool(p1, prep["conv1_w"], prep["conv1_b"])    # (B*196, 8)
    y1 = y1.reshape(B, 14, 14, 8)                                # free reshape

    # stage 2: conv2(5x5, 6->16) + ReLU + 2x2 maxpool
    p2 = _im2col_pool_groups(y1, 5, k_pad=256)                   # (4, B*25, 256)
    y2 = conv_relu_pool(p2, prep["conv2_w"], prep["conv2_b"])    # (B*25, 16)

    # torch.flatten(x, 1) on NCHW is folded into fc1_w's row permutation, so the
    # FC stage consumes y2 via a free contiguous reshape — no transpose/slice.
    flat = y2.reshape(B, 400)

    # stage 3: fc1 + fc2 + fc3 (with ReLUs) fused in one kernel -> (B, 10) f32.
    return fc_fused(flat, prep["fc1_w"], prep["fc1_b"],
                    prep["fc2_w"], prep["fc2_b"],
                    prep["fc3_w"], prep["fc3_b"])


if __name__ == "__main__":
    key = jax.random.PRNGKey(0)
    k_params, k_x = jax.random.split(key)
    params = init_params(k_params)
    prep = prepare_inference_weights(params)
    # Spatial size is fixed to 32x32 by fc1 = 16*5*5 (LeNet on CIFAR-sized input).
    x = jax.random.normal(k_x, (2, 3, 32, 32), dtype=jnp.float32)

    out = jax.jit(forward)(prep, x)
    out = jax.block_until_ready(out)
    assert out.shape == (2, 10) and out.dtype == jnp.float32
    print("KERNEL_OK")
</pallas_src>

<mosaic_0001>
module attributes {stable_mosaic.version = 11 : i64} {
  func.func @_conv_relu_pool_kernel(%arg0: i32, %arg1: memref<4x208x128xbf16, #tpu.memory_space<vmem>>, %arg2: memref<128x8xbf16, #tpu.memory_space<vmem>>, %arg3: memref<1x8xf32, #tpu.memory_space<vmem>>, %arg4: memref<208x8xbf16, #tpu.memory_space<vmem>>) attributes {dimension_semantics = [#tpu.dimension_semantics<parallel>], iteration_bounds = array<i64: 2>, scalar_prefetch = 0 : i64, scratch_operands = 0 : i64, tpu.core_type = #tpu.core_type<tc>, window_params = [{transform_indices = @transform_0, window_bounds = array<i64: 4, 208, 128>}, {pipeline_mode = #tpu.pipeline_mode<synchronous>, transform_indices = @transform_1, window_bounds = array<i64: 128, 8>}, {pipeline_mode = #tpu.pipeline_mode<synchronous>, transform_indices = @transform_2, window_bounds = array<i64: 1, 8>}, {transform_indices = @transform_3, window_bounds = array<i64: 208, 8>}]} {
    %c0 = arith.constant 0 : index
    %c0_0 = arith.constant 0 : index
    %0 = vector.load %arg2[%c0, %c0_0] : memref<128x8xbf16, #tpu.memory_space<vmem>>, vector<128x8xbf16>
    %c0_1 = arith.constant 0 : index
    %c0_2 = arith.constant 0 : index
    %c0_3 = arith.constant 0 : index
    %1 = vector.load %arg1[%c0_1, %c0_2, %c0_3] : memref<4x208x128xbf16, #tpu.memory_space<vmem>>, vector<4x208x128xbf16>
    %2 = vector.shape_cast %1 : vector<4x208x128xbf16> to vector<832x128xbf16>
    %cst = arith.constant dense<0.000000e+00> : vector<832x8xf32>
    %3 = tpu.matmul %2, %0, %cst {dimension_numbers = #tpu.dot_dimension_numbers<[1], [0], [0], [1], [0, 0, 1, 1], [], []>} : vector<832x128xbf16>, vector<128x8xbf16>, vector<832x8xf32> -> vector<832x8xf32>
    %4 = vector.shape_cast %3 : vector<832x8xf32> to vector<4x208x8xf32>
    %cst_4 = arith.constant dense<0xFF800000> : vector<208x8xf32>
    %5 = vector.multi_reduction <maximumf>, %4, %cst_4 [0] : vector<4x208x8xf32> to vector<208x8xf32>
    %c0_5 = arith.constant 0 : index
    %c0_6 = arith.constant 0 : index
    %6 = vector.load %arg3[%c0_5, %c0_6] : memref<1x8xf32, #tpu.memory_space<vmem>>, vector<1x8xf32>
    %7 = vector.broadcast %6 : vector<1x8xf32> to vector<208x8xf32>
    %8 = arith.addf %5, %7 : vector<208x8xf32>
    %cst_7 = arith.constant 0.000000e+00 : f32
    %9 = vector.broadcast %cst_7 : f32 to vector<208x8xf32>
    %10 = arith.maximumf %8, %9 : vector<208x8xf32>
    %11 = arith.truncf %10 : vector<208x8xf32> to vector<208x8xbf16>
    %c0_8 = arith.constant 0 : index
    %c0_9 = arith.constant 0 : index
    %12 = vector.load %arg4[%c0_8, %c0_9] : memref<208x8xbf16, #tpu.memory_space<vmem>>, vector<208x8xbf16>
    tpu.vector_store %arg4[%c0_8, %c0_9], %11 {strides = array<i32>} : memref<208x8xbf16, #tpu.memory_space<vmem>>, vector<208x8xbf16>,
    return
  }
  func.func @transform_0(%arg0: i32) -> (i32, i32, i32) {
    %c0_i32 = arith.constant 0 : i32
    %c0_i32_0 = arith.constant 0 : i32
    %c0_i32_1 = arith.constant 0 : i32
    return %c0_i32, %arg0, %c0_i32_0 : i32, i32, i32
  }
  func.func @transform_1(%arg0: i32) -> (i32, i32) {
    %c0_i32 = arith.constant 0 : i32
    %c0_i32_0 = arith.constant 0 : i32
    %c0_i32_1 = arith.constant 0 : i32
    return %c0_i32, %c0_i32_0 : i32, i32
  }
  func.func @transform_2(%arg0: i32) -> (i32, i32) {
    %c0_i32 = arith.constant 0 : i32
    %c0_i32_0 = arith.constant 0 : i32
    %c0_i32_1 = arith.constant 0 : i32
    return %c0_i32, %c0_i32_0 : i32, i32
  }
  func.func @transform_3(%arg0: i32) -> (i32, i32) {
    %c0_i32 = arith.constant 0 : i32
    %c0_i32_0 = arith.constant 0 : i32
    return %arg0, %c0_i32 : i32, i32
  }
}

module attributes {stable_mosaic.version = 11 : i64} {
  func.func @_conv_relu_pool_kernel(%arg0: i32, %arg1: memref<4x32x256xbf16, #tpu.memory_space<vmem>>, %arg2: memref<256x16xbf16, #tpu.memory_space<vmem>>, %arg3: memref<1x16xf32, #tpu.memory_space<vmem>>, %arg4: memref<32x16xbf16, #tpu.memory_space<vmem>>) attributes {dimension_semantics = [#tpu.dimension_semantics<parallel>], iteration_bounds = array<i64: 2>, scalar_prefetch = 0 : i64, scratch_operands = 0 : i64, tpu.core_type = #tpu.core_type<tc>, window_params = [{transform_indices = @transform_0, window_bounds = array<i64: 4, 32, 256>}, {pipeline_mode = #tpu.pipeline_mode<synchronous>, transform_indices = @transform_1, window_bounds = array<i64: 256, 16>}, {pipeline_mode = #tpu.pipeline_mode<synchronous>, transform_indices = @transform_2, window_bounds = array<i64: 1, 16>}, {transform_indices = @transform_3, window_bounds = array<i64: 32, 16>}]} {
    %c0 = arith.constant 0 : index
    %c0_0 = arith.constant 0 : index
    %0 = vector.load %arg2[%c0, %c0_0] : memref<256x16xbf16, #tpu.memory_space<vmem>>, vector<256x16xbf16>
    %c0_1 = arith.constant 0 : index
    %c0_2 = arith.constant 0 : index
    %c0_3 = arith.constant 0 : index
    %1 = vector.load %arg1[%c0_1, %c0_2, %c0_3] : memref<4x32x256xbf16, #tpu.memory_space<vmem>>, vector<4x32x256xbf16>
    %2 = vector.shape_cast %1 : vector<4x32x256xbf16> to vector<128x256xbf16>
    %cst = arith.constant dense<0.000000e+00> : vector<128x16xf32>
    %3 = tpu.matmul %2, %0, %cst {dimension_numbers = #tpu.dot_dimension_numbers<[1], [0], [0], [1], [0, 0, 1, 1], [], []>} : vector<128x256xbf16>, vector<256x16xbf16>, vector<128x16xf32> -> vector<128x16xf32>
    %4 = vector.shape_cast %3 : vector<128x16xf32> to vector<4x32x16xf32>
    %cst_4 = arith.constant dense<0xFF800000> : vector<32x16xf32>
    %5 = vector.multi_reduction <maximumf>, %4, %cst_4 [0] : vector<4x32x16xf32> to vector<32x16xf32>
    %c0_5 = arith.constant 0 : index
    %c0_6 = arith.constant 0 : index
    %6 = vector.load %arg3[%c0_5, %c0_6] : memref<1x16xf32, #tpu.memory_space<vmem>>, vector<1x16xf32>
    %7 = vector.broadcast %6 : vector<1x16xf32> to vector<32x16xf32>
    %8 = arith.addf %5, %7 : vector<32x16xf32>
    %cst_7 = arith.constant 0.000000e+00 : f32
    %9 = vector.broadcast %cst_7 : f32 to vector<32x16xf32>
    %10 = arith.maximumf %8, %9 : vector<32x16xf32>
    %11 = arith.truncf %10 : vector<32x16xf32> to vector<32x16xbf16>
    %c0_8 = arith.constant 0 : index
    %c0_9 = arith.constant 0 : index
    %12 = vector.load %arg4[%c0_8, %c0_9] : memref<32x16xbf16, #tpu.memory_space<vmem>>, vector<32x16xbf16>
    tpu.vector_store %arg4[%c0_8, %c0_9], %11 {strides = array<i32>} : memref<32x16xbf16, #tpu.memory_space<vmem>>, vector<32x16xbf16>,
    return
  }
  func.func @transform_0(%arg0: i32) -> (i32, i32, i32) {
    %c0_i32 = arith.constant 0 : i32
    %c0_i32_0 = arith.constant 0 : i32
    %c0_i32_1 = arith.constant 0 : i32
    return %c0_i32, %arg0, %c0_i32_0 : i32, i32, i32
  }
  func.func @transform_1(%arg0: i32) -> (i32, i32) {
    %c0_i32 = arith.constant 0 : i32
    %c0_i32_0 = arith.constant 0 : i32
    %c0_i32_1 = arith.constant 0 : i32
    return %c0_i32, %c0_i32_0 : i32, i32
  }
  func.func @transform_2(%arg0: i32) -> (i32, i32) {
    %c0_i32 = arith.constant 0 : i32
    %c0_i32_0 = arith.constant 0 : i32
    %c0_i32_1 = arith.constant 0 : i32
    return %c0_i32, %c0_i32_0 : i32, i32
  }
  func.func @transform_3(%arg0: i32) -> (i32, i32) {
    %c0_i32 = arith.constant 0 : i32
    %c0_i32_0 = arith.constant 0 : i32
    return %arg0, %c0_i32 : i32, i32
  }
}

module attributes {stable_mosaic.version = 11 : i64} {
  func.func @_fc3_fused_kernel(%arg0: i32, %arg1: memref<2x400xbf16, #tpu.memory_space<vmem>>, %arg2: memref<400x128xbf16, #tpu.memory_space<vmem>>, %arg3: memref<1x128xf32, #tpu.memory_space<vmem>>, %arg4: memref<128x128xbf16, #tpu.memory_space<vmem>>, %arg5: memref<1x128xf32, #tpu.memory_space<vmem>>, %arg6: memref<128x10xbf16, #tpu.memory_space<vmem>>, %arg7: memref<1x10xf32, #tpu.memory_space<vmem>>, %arg8: memref<2x10xf32, #tpu.memory_space<vmem>>) attributes {dimension_semantics = [#tpu.dimension_semantics<parallel>], iteration_bounds = array<i64: 1>, scalar_prefetch = 0 : i64, scratch_operands = 0 : i64, tpu.core_type = #tpu.core_type<tc>, window_params = [{transform_indices = @transform_0, window_bounds = array<i64: 2, 400>}, {pipeline_mode = #tpu.pipeline_mode<synchronous>, transform_indices = @transform_1, window_bounds = array<i64: 400, 128>}, {pipeline_mode = #tpu.pipeline_mode<synchronous>, transform_indices = @transform_2, window_bounds = array<i64: 1, 128>}, {pipeline_mode = #tpu.pipeline_mode<synchronous>, transform_indices = @transform_3, window_bounds = array<i64: 128, 128>}, {pipeline_mode = #tpu.pipeline_mode<synchronous>, transform_indices = @transform_4, window_bounds = array<i64: 1, 128>}, {pipeline_mode = #tpu.pipeline_mode<synchronous>, transform_indices = @transform_5, window_bounds = array<i64: 128, 10>}, {pipeline_mode = #tpu.pipeline_mode<synchronous>, transform_indices = @transform_6, window_bounds = array<i64: 1, 10>}, {transform_indices = @transform_7, window_bounds = array<i64: 2, 10>}]} {
    %c0 = arith.constant 0 : index
    %c0_0 = arith.constant 0 : index
    %0 = vector.load %arg1[%c0, %c0_0] : memref<2x400xbf16, #tpu.memory_space<vmem>>, vector<2x400xbf16>
    %c0_1 = arith.constant 0 : index
    %c0_2 = arith.constant 0 : index
    %1 = vector.load %arg2[%c0_1, %c0_2] : memref<400x128xbf16, #tpu.memory_space<vmem>>, vector<400x128xbf16>
    %cst = arith.constant dense<0.000000e+00> : vector<2x128xf32>
    %2 = tpu.matmul %0, %1, %cst {dimension_numbers = #tpu.dot_dimension_numbers<[1], [0], [0], [1], [0, 0, 1, 1], [], []>} : vector<2x400xbf16>, vector<400x128xbf16>, vector<2x128xf32> -> vector<2x128xf32>
    %c0_3 = arith.constant 0 : index
    %c0_4 = arith.constant 0 : index
    %3 = vector.load %arg3[%c0_3, %c0_4] : memref<1x128xf32, #tpu.memory_space<vmem>>, vector<1x128xf32>
    %4 = vector.broadcast %3 : vector<1x128xf32> to vector<2x128xf32>
    %5 = arith.addf %2, %4 : vector<2x128xf32>
    %cst_5 = arith.constant 0.000000e+00 : f32
    %6 = vector.broadcast %cst_5 : f32 to vector<2x128xf32>
    %7 = arith.maximumf %5, %6 : vector<2x128xf32>
    %8 = arith.truncf %7 : vector<2x128xf32> to vector<2x128xbf16>
    %c0_6 = arith.constant 0 : index
    %c0_7 = arith.constant 0 : index
    %9 = vector.load %arg4[%c0_6, %c0_7] : memref<128x128xbf16, #tpu.memory_space<vmem>>, vector<128x128xbf16>
    %cst_8 = arith.constant dense<0.000000e+00> : vector<2x128xf32>
    %10 = tpu.matmul %8, %9, %cst_8 {dimension_numbers = #tpu.dot_dimension_numbers<[1], [0], [0], [1], [0, 0, 1, 1], [], []>} : vector<2x128xbf16>, vector<128x128xbf16>, vector<2x128xf32> -> vector<2x128xf32>
    %c0_9 = arith.constant 0 : index
    %c0_10 = arith.constant 0 : index
    %11 = vector.load %arg5[%c0_9, %c0_10] : memref<1x128xf32, #tpu.memory_space<vmem>>, vector<1x128xf32>
    %12 = vector.broadcast %11 : vector<1x128xf32> to vector<2x128xf32>
    %13 = arith.addf %10, %12 : vector<2x128xf32>
    %cst_11 = arith.constant 0.000000e+00 : f32
    %14 = vector.broadcast %cst_11 : f32 to vector<2x128xf32>
    %15 = arith.maximumf %13, %14 : vector<2x128xf32>
    %16 = arith.truncf %15 : vector<2x128xf32> to vector<2x128xbf16>
    %c0_12 = arith.constant 0 : index
    %c0_13 = arith.constant 0 : index
    %17 = vector.load %arg6[%c0_12, %c0_13] : memref<128x10xbf16, #tpu.memory_space<vmem>>, vector<128x10xbf16>
    %cst_14 = arith.constant dense<0.000000e+00> : vector<2x10xf32>
    %18 = tpu.matmul %16, %17, %cst_14 {dimension_numbers = #tpu.dot_dimension_numbers<[1], [0], [0], [1], [0, 0, 1, 1], [], []>} : vector<2x128xbf16>, vector<128x10xbf16>, vector<2x10xf32> -> vector<2x10xf32>
    %c0_15 = arith.constant 0 : index
    %c0_16 = arith.constant 0 : index
    %19 = vector.load %arg7[%c0_15, %c0_16] : memref<1x10xf32, #tpu.memory_space<vmem>>, vector<1x10xf32>
    %20 = vector.broadcast %19 : vector<1x10xf32> to vector<2x10xf32>
    %21 = arith.addf %18, %20 : vector<2x10xf32>
    %c0_17 = arith.constant 0 : index
    %c0_18 = arith.constant 0 : index
    %22 = vector.load %arg8[%c0_17, %c0_18] : memref<2x10xf32, #tpu.memory_space<vmem>>, vector<2x10xf32>
    tpu.vector_store %arg8[%c0_17, %c0_18], %21 {strides = array<i32>} : memref<2x10xf32, #tpu.memory_space<vmem>>, vector<2x10xf32>,
    return
  }
  func.func @transform_0(%arg0: i32) -> (i32, i32) {
    %c0_i32 = arith.constant 0 : i32
    %c0_i32_0 = arith.constant 0 : i32
    return %arg0, %c0_i32 : i32, i32
  }
  func.func @transform_1(%arg0: i32) -> (i32, i32) {
    %c0_i32 = arith.constant 0 : i32
    %c0_i32_0 = arith.constant 0 : i32
    %c0_i32_1 = arith.constant 0 : i32
    return %c0_i32, %c0_i32_0 : i32, i32
  }
  func.func @transform_2(%arg0: i32) -> (i32, i32) {
    %c0_i32 = arith.constant 0 : i32
    %c0_i32_0 = arith.constant 0 : i32
    %c0_i32_1 = arith.constant 0 : i32
    return %c0_i32, %c0_i32_0 : i32, i32
  }
  func.func @transform_3(%arg0: i32) -> (i32, i32) {
    %c0_i32 = arith.constant 0 : i32
    %c0_i32_0 = arith.constant 0 : i32
    %c0_i32_1 = arith.constant 0 : i32
    return %c0_i32, %c0_i32_0 : i32, i32
  }
  func.func @transform_4(%arg0: i32) -> (i32, i32) {
    %c0_i32 = arith.constant 0 : i32
    %c0_i32_0 = arith.constant 0 : i32
    %c0_i32_1 = arith.constant 0 : i32
    return %c0_i32, %c0_i32_0 : i32, i32
  }
  func.func @transform_5(%arg0: i32) -> (i32, i32) {
    %c0_i32 = arith.constant 0 : i32
    %c0_i32_0 = arith.constant 0 : i32
    %c0_i32_1 = arith.constant 0 : i32
    return %c0_i32, %c0_i32_0 : i32, i32
  }
  func.func @transform_6(%arg0: i32) -> (i32, i32) {
    %c0_i32 = arith.constant 0 : i32
    %c0_i32_0 = arith.constant 0 : i32
    %c0_i32_1 = arith.constant 0 : i32
    return %c0_i32, %c0_i32_0 : i32, i32
  }
  func.func @transform_7(%arg0: i32) -> (i32, i32) {
    %c0_i32 = arith.constant 0 : i32
    %c0_i32_0 = arith.constant 0 : i32
    return %arg0, %c0_i32 : i32, i32
  }
}

</mosaic_0001>

<llo_original>
// kernel: forward.3
$region0: #{forward.3}
  #allocation0 [shape = 'u32[]', space=smem, size = 0x4, offset = 0x4, fixed_abs, tag = 'smem constant byte address 0x4 - core index']
  #allocation1 [shape = 'u32[144,128]{1,0:T(1,128)}', space=vmem, size = 0x12000, scoped, tag = 'internal scratch']
  %s0 = inlined_call_operand.vmem [shape: bf16[4,392,128], index: 0, kind: input, shape index: {}]
  %s1 = inlined_call_operand.vmem [shape: bf16[128,8], index: 1, kind: input, shape index: {}]
  %s2 = inlined_call_operand.vmem [shape: f32[1,8], index: 2, kind: input, shape index: {}]
  %s3 = inlined_call_operand.vmem [shape: bf16[392,8], index: 3, kind: output, shape index: {}]
  %s4 = sld [smem:[#allocation0]]
  $region151: #{forward.3} parent=0
    _
  %s6 = ssub.s32 1, %s4
  %s7 = scalar_select 0, %s6, %s4
  $region1: #{forward.3} parent=0
    #allocation2 [shape = 'u8[425984]{0}', space=vmem, size = 0x68000, scoped, tag = 'input window, operand 0']
    #allocation3 [shape = 'u8[106496]{0}', space=vmem, size = 0x1a000, scoped, tag = 'output window, operand 0']
    loop: start=0, step=1, limit=4
    $region2: #{forward.3} parent=1 // loop_pre_header
      _
    $region3: #{forward.3} parent=1 // loop_header
      %s9 = sphi 0, %s13
      %p10 = scmp.ge.s32.totalorder %s9, 4
      %s19 = sphi 0, %s21
      %s22 = sphi 0, %s19
      %s23 = sphi 0, %s22
      %s39 = sphi 0, %s23
      %s43 = sphi 0, %s43
      %s45 = sphi 0, %s43
      %s46 = sphi 0, %s45
      %s60 = sphi 0, %s46
      %s64 = sphi 0, %s64
      %s66 = sphi 0, %s64
      %s67 = sphi 0, %s66
      %s81 = sphi 0, %s67
      %s87 = sphi 0, %s89
      %s90 = sphi 0, %s87
      %s91 = sphi 0, %s90
      %s107 = sphi 0, %s91
    $region4: #{forward.3} parent=1 // loop_header_branch
      %12 = sbr.rel (%p10) target = $region8
    $region5: #{forward.3} parent=1 // loop_body
      %s14 = ssub.s32 %s9, 1
      %s15 = ssub.s32 %s9, 2
      %s16 = sadd.s32 %s9, 1
      %s17 = ssub.s32 %s9, %s16
      %p18 = scmp.eq.s32.totalorder %s17, 0
      %s20 = sadd.s32 %s19, 1
      %s21 = scalar_select %p18, %s19, %s20
      %p24 = pneg %p18
      %p25 = scmp.eq.s32.totalorder %s9, 1
      %p26 = por %p24, %p25
      %p27 = scmp.ne.s32.totalorder %s19, %s22
      %p28 = scmp.eq.s32.totalorder %s9, 0
      %p29 = por %p27, %p28
      %p30 = scmp.ne.s32.totalorder %s19, %s22
      %p31 = scmp.eq.s32.totalorder %s14, 1
      %p32 = por %p30, %p31
      %p33 = scmp.ne.s32.totalorder %s22, %s23
      %p34 = scmp.eq.s32.totalorder %s14, 0
      %p35 = por %p33, %p34
      %p36 = scmp.ne.s32.totalorder %s22, %s23
      %p37 = scmp.eq.s32.totalorder %s15, 1
      %p38 = por %p36, %p37
      %p40 = scmp.ne.s32.totalorder %s23, %s39
      %p41 = scmp.eq.s32.totalorder %s15, 0
      %p42 = por %p40, %p41
      %s44 = sadd.s32 %s43, 1
      %p47 = scmp.eq.s32.totalorder %s9, 1
      %p48 = scmp.ne.s32.totalorder %s43, %s45
      %p49 = scmp.eq.s32.totalorder %s9, 0
      %p50 = por %p48, %p49
      %p51 = scmp.ne.s32.totalorder %s43, %s45
      %p52 = scmp.eq.s32.totalorder %s14, 1
      %p53 = por %p51, %p52
      %p54 = scmp.ne.s32.totalorder %s45, %s46
      %p55 = scmp.eq.s32.totalorder %s14, 0
      %p56 = por %p54, %p55
      %p57 = scmp.ne.s32.totalorder %s45, %s46
      %p58 = scmp.eq.s32.totalorder %s15, 1
      %p59 = por %p57, %p58
      %p61 = scmp.ne.s32.totalorder %s46, %s60
      %p62 = scmp.eq.s32.totalorder %s15, 0
      %p63 = por %p61, %p62
      %s65 = sadd.s32 %s64, 1
      %p68 = scmp.eq.s32.totalorder %s9, 1
      %p69 = scmp.ne.s32.totalorder %s64, %s66
      %p70 = scmp.eq.s32.totalorder %s9, 0
      %p71 = por %p69, %p70
      %p72 = scmp.ne.s32.totalorder %s64, %s66
      %p73 = scmp.eq.s32.totalorder %s14, 1
      %p74 = por %p72, %p73
      %p75 = scmp.ne.s32.totalorder %s66, %s67
      %p76 = scmp.eq.s32.totalorder %s14, 0
      %p77 = por %p75, %p76
      %p78 = scmp.ne.s32.totalorder %s66, %s67
      %p79 = scmp.eq.s32.totalorder %s15, 1
      %p80 = por %p78, %p79
      %p82 = scmp.ne.s32.totalorder %s67, %s81
      %p83 = scmp.eq.s32.totalorder %s15, 0
      %p84 = por %p82, %p83
      %s85 = ssub.s32 %s9, %s16
      %p86 = scmp.eq.s32.totalorder %s85, 0
      %s88 = sadd.s32 %s87, 1
      %s89 = scalar_select %p86, %s87, %s88
      %p92 = pneg %p86
      %p93 = scmp.eq.s32.totalorder %s9, 1
      %p94 = por %p92, %p93
      %p95 = scmp.ne.s32.totalorder %s87, %s90
      %p96 = scmp.eq.s32.totalorder %s9, 0
      %p97 = por %p95, %p96
      %p98 = scmp.ne.s32.totalorder %s87, %s90
      %p99 = scmp.eq.s32.totalorder %s14, 1
      %p100 = por %p98, %p99
      %p101 = scmp.ne.s32.totalorder %s90, %s91
      %p102 = scmp.eq.s32.totalorder %s14, 0
      %p103 = por %p101, %p102
      %p104 = scmp.ne.s32.totalorder %s90, %s91
      %p105 = scmp.eq.s32.totalorder %s15, 1
      %p106 = por %p104, %p105
      %p108 = scmp.ne.s32.totalorder %s91, %s107
      %p109 = scmp.eq.s32.totalorder %s15, 0
      %p110 = por %p108, %p109
      %p111 = scmp.le.s32.totalorder 1, %s9
      %p112 = scmp.lt.s32.totalorder %s9, 3
      %p113 = pnand %p111, %p112
      %p114 = pneg %p113
      // Predicated region
      $region9: #{forward.3} parent=5 // pred_check
        _
      $region10: #{forward.3} parent=5 // pred_check_branch
        %116 = sbr.rel (%p113) target = $region12
      $region11: #{forward.3} parent=5 // pred_region
        %s117 = ssub.s32 %s9, 1
        // Predicated region
        $region13: #{forward.3} parent=11 // pred_check
          %p118 = pneg %p56
        $region14: #{forward.3} parent=11 // pred_check_branch
          %120 = sbr.rel (%p118) target = $region16
        $region15: #{forward.3} parent=11 // pred_region
          _
        $region16: #{forward.3} parent=11 // pred_fallthru
          _
        // Predicated region
        $region17: #{forward.3} parent=11 // pred_check
          %p121 = pneg %p77
        $region18: #{forward.3} parent=11 // pred_check_branch
          %123 = sbr.rel (%p121) target = $region20
        $region19: #{forward.3} parent=11 // pred_region
          _
        $region20: #{forward.3} parent=11 // pred_fallthru
          _
      $region12: #{forward.3} parent=5 // pred_fallthru
        _
      %p124 = scmp.lt.s32.totalorder %s9, 2
      // Predicated region
      $region21: #{forward.3} parent=5 // pred_check
        %p125 = pneg %p124
      $region22: #{forward.3} parent=5 // pred_check_branch
        %127 = sbr.rel (%p125) target = $region24
      $region23: #{forward.3} parent=5 // pred_region
        // Predicated region
        $region25: #{forward.3} parent=23 // pred_check
          %p128 = pneg %p29
        $region26: #{forward.3} parent=23 // pred_check_branch
          %130 = sbr.rel (%p128) target = $region28
        $region27: #{forward.3} parent=23 // pred_region
          %s131 = sand.u32 %s19, 1
          %s132 = sand.u32 %s19, 1
          %s133 = smul.addr %s132, 416
          %s134 = scalar_lea.vmem [#allocation2], %s133
          %s135 = smul.u32 26, %s9
          %s136 = ssub.s32 49, %s135
          %p137 = scmp.lt.s32.totalorder %s136, 26
          %s138 = scalar_select %p137, %s136, 26
          %s139 = smul.u32 256, %s138
          %p140 = scmp.ne.s32.totalorder 0, %s139
          %s141 = smul.addr %s135, 4
          %s142 = scalar_lea.vmem %s0, %s141
          // Predicated region
          $region29: #{forward.3} parent=27 // pred_check
            %p143 = pneg %p140
          $region30: #{forward.3} parent=27 // pred_check_branch
            %145 = sbr.rel (%p143) target = $region32
          $region31: #{forward.3} parent=27 // pred_region
            // Predicated region
            $region33: #{forward.3} parent=31 // pred_check
              _
            $region34: #{forward.3} parent=31 // pred_check_branch
              %147 = sbr.rel target = $region36
            $region35: #{forward.3} parent=31 // pred_region
              // Predicated region
              $region55: #{forward.3} parent=35 // pred_check
                _
              $region56: #{forward.3} parent=35 // pred_check_branch
                %328 = sbr.rel (0) target = $region58
              $region57: #{forward.3} parent=35 // pred_region
                %s329 = sdiv.u32.pop %s138, 26
                %s330 = srem.u32.pop %s138, 26
                // While loop
                $region59: #{forward.3} parent=57 // loop_pre_header
                  _
                $region60: #{forward.3} parent=57 // loop_header
                  %s332 = sphi 0, %s334
                  %p333 = scmp.ge.s32.totalorder %s332, %s329
                  %s337 = sphi 0, %s342
                  %s338 = sphi %s142, %s345
                  %s339 = sphi %s134, %s346
                $region61: #{forward.3} parent=57 // loop_header_branch
                  %336 = sbr.rel (%p333) target = $region65
                $region62: #{forward.3} parent=57 // loop_body
                  %s340 = sadd.s32 1, %s337
                  %p341 = scmp.ge.s32.totalorder %s340, %s329
                  %s342 = scalar_select %p341, 0, %s340
                  %s343 = smul.u32 %s342, 104
                  %s344 = smul.u32 %s342, 104
                  %s345 = scalar_lea.vmem %s142, %s343
                  %s346 = scalar_lea.vmem %s134, %s344 [#allocation2]
                $region63: #{forward.3} parent=57 // loop_footer
                  %s334 = sadd.s32 %s332, 1
                $region64: #{forward.3} parent=57 // loop_footer_branch
                  %331 = sbr.rel target = $region60
                $region65: #{forward.3} parent=57 // loop_exit
                  _
                %s347 = sdiv.u32.pop %s138, 26
                %s348 = srem.u32.pop %s138, 26
                %s349 = smul.u32 %s347, 26
                %s350 = smul.u32 4, %s349
                %s351 = scalar_lea.vmem %s142, %s350
                %s352 = smul.u32 4, %s349
                %s353 = scalar_lea.vmem %s134, %s352 [#allocation2]
                // While loop
                $region66: #{forward.3} parent=57 // loop_pre_header
                  _
                $region67: #{forward.3} parent=57 // loop_header
                  %s355 = sphi 0, %s357
                  %p356 = scmp.ge.s32.totalorder %s355, %s348
                  %s360 = sphi 0, %s365
                  %s361 = sphi %s351, %s368
                  %s362 = sphi %s353, %s369
                $region68: #{forward.3} parent=57 // loop_header_branch
                  %359 = sbr.rel (%p356) target = $region72
                $region69: #{forward.3} parent=57 // loop_body
                  %s363 = sadd.s32 1, %s360
                  %p364 = scmp.ge.s32.totalorder %s363, %s348
                  %s365 = scalar_select %p364, 0, %s363
                  %s366 = smul.u32 %s365, 4
                  %s367 = smul.u32 %s365, 4
                  %s368 = scalar_lea.vmem %s351, %s366
                  %s369 = scalar_lea.vmem %s353, %s367 [#allocation2]
                $region70: #{forward.3} parent=57 // loop_footer
                  %s357 = sadd.s32 %s355, 1
                $region71: #{forward.3} parent=57 // loop_footer_branch
                  %354 = sbr.rel target = $region67
                $region72: #{forward.3} parent=57 // loop_exit
                  _
                %s371 = sshrl.u32 %s138, 4
                // While loop
                $region73: #{forward.3} parent=57 // loop_pre_header
                  _
                $region74: #{forward.3} parent=57 // loop_header
                  %s373 = sphi 0, %s375
                  %p374 = scmp.ge.s32.totalorder %s373, %s371
                  %s378 = sphi 0, %s511
                  %s379 = sphi %s142, %s514
                  %s380 = sphi %s134, %s515
                $region75: #{forward.3} parent=57 // loop_header_branch
                  %377 = sbr.rel (%p374) target = $region79
                $region76: #{forward.3} parent=57 // loop_body
                  %v381 = vld [vmem:[%s379] sm:$0xf]
                  %382 = vst [vmem:[%s380] sm:$0xf] %v381
                  %v383 = vld [vmem:[%s379 + $0x4] sm:$0xf]
                  %384 = vst [vmem:[%s380 + $0x4] sm:$0xf] %v383
                  %v385 = vld [vmem:[%s379 + $0x8] sm:$0xf]
                  %386 = vst [vmem:[%s380 + $0x8] sm:$0xf] %v385
                  %v387 = vld [vmem:[%s379 + $0xc] sm:$0xf]
                  %388 = vst [vmem:[%s380 + $0xc] sm:$0xf] %v387
                  %v389 = vld [vmem:[%s379 + $0x10] sm:$0xf]
                  %390 = vst [vmem:[%s380 + $0x10] sm:$0xf] %v389
                  %v391 = vld [vmem:[%s379 + $0x14] sm:$0xf]
                  %392 = vst [vmem:[%s380 + $0x14] sm:$0xf] %v391
                  %v393 = vld [vmem:[%s379 + $0x18] sm:$0xf]
                  %394 = vst [vmem:[%s380 + $0x18] sm:$0xf] %v393
                  %v395 = vld [vmem:[%s379 + $0x1c] sm:$0xf]
                  %396 = vst [vmem:[%s380 + $0x1c] sm:$0xf] %v395
                  %v397 = vld [vmem:[%s379 + $0x20] sm:$0xf]
                  %398 = vst [vmem:[%s380 + $0x20] sm:$0xf] %v397
                  %v399 = vld [vmem:[%s379 + $0x24] sm:$0xf]
                  %400 = vst [vmem:[%s380 + $0x24] sm:$0xf] %v399
                  %v401 = vld [vmem:[%s379 + $0x28] sm:$0xf]
                  %402 = vst [vmem:[%s380 + $0x28] sm:$0xf] %v401
                  %v403 = vld [vmem:[%s379 + $0x2c] sm:$0xf]
                  %404 = vst [vmem:[%s380 + $0x2c] sm:$0xf] %v403
                  %v405 = vld [vmem:[%s379 + $0x30] sm:$0xf]
                  %406 = vst [vmem:[%s380 + $0x30] sm:$0xf] %v405
                  %v407 = vld [vmem:[%s379 + $0x34] sm:$0xf]
                  %408 = vst [vmem:[%s380 + $0x34] sm:$0xf] %v407
                  %v409 = vld [vmem:[%s379 + $0x38] sm:$0xf]
                  %410 = vst [vmem:[%s380 + $0x38] sm:$0xf] %v409
                  %v411 = vld [vmem:[%s379 + $0x3c] sm:$0xf]
                  %412 = vst [vmem:[%s380 + $0x3c] sm:$0xf] %v411
                  %v413 = vld [vmem:[%s379 + $0xc4] sm:$0xf]
                  %414 = vst [vmem:[%s380 + $0x68] sm:$0xf] %v413
                  %v415 = vld [vmem:[%s379 + $0xc8] sm:$0xf]
                  %416 = vst [vmem:[%s380 + $0x6c] sm:$0xf] %v415
                  %v417 = vld [vmem:[%s379 + $0xcc] sm:$0xf]
                  %418 = vst [vmem:[%s380 + $0x70] sm:$0xf] %v417
                  %v419 = vld [vmem:[%s379 + $0xd0] sm:$0xf]
                  %420 = vst [vmem:[%s380 + $0x74] sm:$0xf] %v419
                  %v421 = vld [vmem:[%s379 + $0xd4] sm:$0xf]
                  %422 = vst [vmem:[%s380 + $0x78] sm:$0xf] %v421
                  %v423 = vld [vmem:[%s379 + $0xd8] sm:$0xf]
                  %424 = vst [vmem:[%s380 + $0x7c] sm:$0xf] %v423
                  %v425 = vld [vmem:[%s379 + $0xdc] sm:$0xf]
                  %426 = vst [vmem:[%s380 + $0x80] sm:$0xf] %v425
                  %v427 = vld [vmem:[%s379 + $0xe0] sm:$0xf]
                  %428 = vst [vmem:[%s380 + $0x84] sm:$0xf] %v427
                  %v429 = vld [vmem:[%s379 + $0xe4] sm:$0xf]
                  %430 = vst [vmem:[%s380 + $0x88] sm:$0xf] %v429
                  %v431 = vld [vmem:[%s379 + $0xe8] sm:$0xf]
                  %432 = vst [vmem:[%s380 + $0x8c] sm:$0xf] %v431
                  %v433 = vld [vmem:[%s379 + $0xec] sm:$0xf]
                  %434 = vst [vmem:[%s380 + $0x90] sm:$0xf] %v433
                  %v435 = vld [vmem:[%s379 + $0xf0] sm:$0xf]
                  %436 = vst [vmem:[%s380 + $0x94] sm:$0xf] %v435
                  %v437 = vld [vmem:[%s379 + $0xf4] sm:$0xf]
                  %438 = vst [vmem:[%s380 + $0x98] sm:$0xf] %v437
                  %v439 = vld [vmem:[%s379 + $0xf8] sm:$0xf]
                  %440 = vst [vmem:[%s380 + $0x9c] sm:$0xf] %v439
                  %v441 = vld [vmem:[%s379 + $0xfc] sm:$0xf]
                  %442 = vst [vmem:[%s380 + $0xa0] sm:$0xf] %v441
                  %v443 = vld [vmem:[%s379 + $0x100] sm:$0xf]
                  %444 = vst [vmem:[%s380 + $0xa4] sm:$0xf] %v443
                  %v445 = vld [vmem:[%s379 + $0x188] sm:$0xf]
                  %446 = vst [vmem:[%s380 + $0xd0] sm:$0xf] %v445
                  %v447 = vld [vmem:[%s379 + $0x18c] sm:$0xf]
                  %448 = vst [vmem:[%s380 + $0xd4] sm:$0xf] %v447
                  %v449 = vld [vmem:[%s379 + $0x190] sm:$0xf]
                  %450 = vst [vmem:[%s380 + $0xd8] sm:$0xf] %v449
                  %v451 = vld [vmem:[%s379 + $0x194] sm:$0xf]
                  %452 = vst [vmem:[%s380 + $0xdc] sm:$0xf] %v451
                  %v453 = vld [vmem:[%s379 + $0x198] sm:$0xf]
                  %454 = vst [vmem:[%s380 + $0xe0] sm:$0xf] %v453
                  %v455 = vld [vmem:[%s379 + $0x19c] sm:$0xf]
                  %456 = vst [vmem:[%s380 + $0xe4] sm:$0xf] %v455
                  %v457 = vld [vmem:[%s379 + $0x1a0] sm:$0xf]
                  %458 = vst [vmem:[%s380 + $0xe8] sm:$0xf] %v457
                  %v459 = vld [vmem:[%s379 + $0x1a4] sm:$0xf]
                  %460 = vst [vmem:[%s380 + $0xec] sm:$0xf] %v459
                  %v461 = vld [vmem:[%s379 + $0x1a8] sm:$0xf]
                  %462 = vst [vmem:[%s380 + $0xf0] sm:$0xf] %v461
                  %v463 = vld [vmem:[%s379 + $0x1ac] sm:$0xf]
                  %464 = vst [vmem:[%s380 + $0xf4] sm:$0xf] %v463
                  %v465 = vld [vmem:[%s379 + $0x1b0] sm:$0xf]
                  %466 = vst [vmem:[%s380 + $0xf8] sm:$0xf] %v465
                  %v467 = vld [vmem:[%s379 + $0x1b4] sm:$0xf]
                  %468 = vst [vmem:[%s380 + $0xfc] sm:$0xf] %v467
                  %v469 = vld [vmem:[%s379 + $0x1b8] sm:$0xf]
                  %470 = vst [vmem:[%s380 + $0x100] sm:$0xf] %v469
                  %v471 = vld [vmem:[%s379 + $0x1bc] sm:$0xf]
                  %472 = vst [vmem:[%s380 + $0x104] sm:$0xf] %v471
                  %v473 = vld [vmem:[%s379 + $0x1c0] sm:$0xf]
                  %474 = vst [vmem:[%s380 + $0x108] sm:$0xf] %v473
                  %v475 = vld [vmem:[%s379 + $0x1c4] sm:$0xf]
                  %476 = vst [vmem:[%s380 + $0x10c] sm:$0xf] %v475
                  %v477 = vld [vmem:[%s379 + $0x24c] sm:$0xf]
                  %478 = vst [vmem:[%s380 + $0x138] sm:$0xf] %v477
                  %v479 = vld [vmem:[%s379 + $0x250] sm:$0xf]
                  %480 = vst [vmem:[%s380 + $0x13c] sm:$0xf] %v479
                  %v481 = vld [vmem:[%s379 + $0x254] sm:$0xf]
                  %482 = vst [vmem:[%s380 + $0x140] sm:$0xf] %v481
                  %v483 = vld [vmem:[%s379 + $0x258] sm:$0xf]
                  %484 = vst [vmem:[%s380 + $0x144] sm:$0xf] %v483
                  %v485 = vld [vmem:[%s379 + $0x25c] sm:$0xf]
                  %486 = vst [vmem:[%s380 + $0x148] sm:$0xf] %v485
                  %v487 = vld [vmem:[%s379 + $0x260] sm:$0xf]
                  %488 = vst [vmem:[%s380 + $0x14c] sm:$0xf] %v487
                  %v489 = vld [vmem:[%s379 + $0x264] sm:$0xf]
                  %490 = vst [vmem:[%s380 + $0x150] sm:$0xf] %v489
                  %v491 = vld [vmem:[%s379 + $0x268] sm:$0xf]
                  %492 = vst [vmem:[%s380 + $0x154] sm:$0xf] %v491
                  %v493 = vld [vmem:[%s379 + $0x26c] sm:$0xf]
                  %494 = vst [vmem:[%s380 + $0x158] sm:$0xf] %v493
                  %v495 = vld [vmem:[%s379 + $0x270] sm:$0xf]
                  %496 = vst [vmem:[%s380 + $0x15c] sm:$0xf] %v495
                  %v497 = vld [vmem:[%s379 + $0x274] sm:$0xf]
                  %498 = vst [vmem:[%s380 + $0x160] sm:$0xf] %v497
                  %v499 = vld [vmem:[%s379 + $0x278] sm:$0xf]
                  %500 = vst [vmem:[%s380 + $0x164] sm:$0xf] %v499
                  %v501 = vld [vmem:[%s379 + $0x27c] sm:$0xf]
                  %502 = vst [vmem:[%s380 + $0x168] sm:$0xf] %v501
                  %v503 = vld [vmem:[%s379 + $0x280] sm:$0xf]
                  %504 = vst [vmem:[%s380 + $0x16c] sm:$0xf] %v503
                  %v505 = vld [vmem:[%s379 + $0x284] sm:$0xf]
                  %506 = vst [vmem:[%s380 + $0x170] sm:$0xf] %v505
                  %v507 = vld [vmem:[%s379 + $0x288] sm:$0xf]
                  %508 = vst [vmem:[%s380 + $0x174] sm:$0xf] %v507
                  %s509 = sadd.s32 1, %s378
                  %p510 = scmp.ge.s32.totalorder %s509, %s371
                  %s511 = scalar_select %p510, 0, %s509
                  %s512 = smul.u32 %s511, 64
                  %s513 = smul.u32 %s511, 64
                  %s514 = scalar_lea.vmem %s142, %s512
                  %s515 = scalar_lea.vmem %s134, %s513 [#allocation2]
                $region77: #{forward.3} parent=57 // loop_footer
                  %s375 = sadd.s32 %s373, 1
                $region78: #{forward.3} parent=57 // loop_footer_branch
                  %372 = sbr.rel target = $region74
                $region79: #{forward.3} parent=57 // loop_exit
                  _
                %s516 = sshrl.u32 %s138, 4
                %s517 = sand.u32 %s138, 15
                %s518 = smul.u32 %s516, 16
                %s519 = smul.u32 4, %s518
                %s520 = scalar_lea.vmem %s142, %s519
                %s521 = smul.u32 4, %s518
                %s522 = scalar_lea.vmem %s134, %s521 [#allocation2]
                // While loop
                $region80: #{forward.3} parent=57 // loop_pre_header
                  _
                $region81: #{forward.3} parent=57 // loop_header
                  %s524 = sphi 0, %s526
                  %p525 = scmp.ge.s32.totalorder %s524, %s517
                  %s529 = sphi 0, %s542
                  %s530 = sphi %s520, %s545
                  %s531 = sphi %s522, %s546
                $region82: #{forward.3} parent=57 // loop_header_branch
                  %528 = sbr.rel (%p525) target = $region86
                $region83: #{forward.3} parent=57 // loop_body
                  %v532 = vld [vmem:[%s530] sm:$0xf]
                  %533 = vst [vmem:[%s531] sm:$0xf] %v532
                  %v534 = vld [vmem:[%s530 + $0xc4] sm:$0xf]
                  %535 = vst [vmem:[%s531 + $0x68] sm:$0xf] %v534
                  %v536 = vld [vmem:[%s530 + $0x188] sm:$0xf]
                  %537 = vst [vmem:[%s531 + $0xd0] sm:$0xf] %v536
                  %v538 = vld [vmem:[%s530 + $0x24c] sm:$0xf]
                  %539 = vst [vmem:[%s531 + $0x138] sm:$0xf] %v538
                  %s540 = sadd.s32 1, %s529
                  %p541 = scmp.ge.s32.totalorder %s540, %s517
                  %s542 = scalar_select %p541, 0, %s540
                  %s543 = smul.u32 %s542, 4
                  %s544 = smul.u32 %s542, 4
                  %s545 = scalar_lea.vmem %s520, %s543
                  %s546 = scalar_lea.vmem %s522, %s544 [#allocation2]
                $region84: #{forward.3} parent=57 // loop_footer
                  %s526 = sadd.s32 %s524, 1
                $region85: #{forward.3} parent=57 // loop_footer_branch
                  %523 = sbr.rel target = $region81
                $region86: #{forward.3} parent=57 // loop_exit
                  _
              $region58: #{forward.3} parent=35 // pred_fallthru
                _
            $region36: #{forward.3} parent=31 // pred_fallthru
              _
            // Predicated region
            $region37: #{forward.3} parent=31 // pred_check
              _
            $region38: #{forward.3} parent=31 // pred_check_branch
              %149 = sbr.rel (0) target = $region40
            $region39: #{forward.3} parent=31 // pred_region
              %s151 = sshrl.u32 %s138, 4
              // While loop
              $region41: #{forward.3} parent=39 // loop_pre_header
                _
              $region42: #{forward.3} parent=39 // loop_header
                %s153 = sphi 0, %s155
                %p154 = scmp.ge.s32.totalorder %s153, %s151
                %s158 = sphi 0, %s291
                %s159 = sphi %s142, %s294
                %s160 = sphi %s134, %s295
              $region43: #{forward.3} parent=39 // loop_header_branch
                %157 = sbr.rel (%p154) target = $region47
              $region44: #{forward.3} parent=39 // loop_body
                %v161 = vld [vmem:[%s159] sm:$0xf]
                %162 = vst [vmem:[%s160] sm:$0xf] %v161
                %v163 = vld [vmem:[%s159 + $0x4] sm:$0xf]
                %164 = vst [vmem:[%s160 + $0x4] sm:$0xf] %v163
                %v165 = vld [vmem:[%s159 + $0x8] sm:$0xf]
                %166 = vst [vmem:[%s160 + $0x8] sm:$0xf] %v165
                %v167 = vld [vmem:[%s159 + $0xc] sm:$0xf]
                %168 = vst [vmem:[%s160 + $0xc] sm:$0xf] %v167
                %v169 = vld [vmem:[%s159 + $0x10] sm:$0xf]
                %170 = vst [vmem:[%s160 + $0x10] sm:$0xf] %v169
                %v171 = vld [vmem:[%s159 + $0x14] sm:$0xf]
                %172 = vst [vmem:[%s160 + $0x14] sm:$0xf] %v171
                %v173 = vld [vmem:[%s159 + $0x18] sm:$0xf]
                %174 = vst [vmem:[%s160 + $0x18] sm:$0xf] %v173
                %v175 = vld [vmem:[%s159 + $0x1c] sm:$0xf]
                %176 = vst [vmem:[%s160 + $0x1c] sm:$0xf] %v175
                %v177 = vld [vmem:[%s159 + $0x20] sm:$0xf]
                %178 = vst [vmem:[%s160 + $0x20] sm:$0xf] %v177
                %v179 = vld [vmem:[%s159 + $0x24] sm:$0xf]
                %180 = vst [vmem:[%s160 + $0x24] sm:$0xf] %v179
                %v181 = vld [vmem:[%s159 + $0x28] sm:$0xf]
                %182 = vst [vmem:[%s160 + $0x28] sm:$0xf] %v181
                %v183 = vld [vmem:[%s159 + $0x2c] sm:$0xf]
                %184 = vst [vmem:[%s160 + $0x2c] sm:$0xf] %v183
                %v185 = vld [vmem:[%s159 + $0x30] sm:$0xf]
                %186 = vst [vmem:[%s160 + $0x30] sm:$0xf] %v185
                %v187 = vld [vmem:[%s159 + $0x34] sm:$0xf]
                %188 = vst [vmem:[%s160 + $0x34] sm:$0xf] %v187
                %v189 = vld [vmem:[%s159 + $0x38] sm:$0xf]
                %190 = vst [vmem:[%s160 + $0x38] sm:$0xf] %v189
                %v191 = vld [vmem:[%s159 + $0x3c] sm:$0xf]
                %192 = vst [vmem:[%s160 + $0x3c] sm:$0xf] %v191
                %v193 = vld [vmem:[%s159 + $0xc4] sm:$0xf]
                %194 = vst [vmem:[%s160 + $0x68] sm:$0xf] %v193
                %v195 = vld [vmem:[%s159 + $0xc8] sm:$0xf]
                %196 = vst [vmem:[%s160 + $0x6c] sm:$0xf] %v195
                %v197 = vld [vmem:[%s159 + $0xcc] sm:$0xf]
                %198 = vst [vmem:[%s160 + $0x70] sm:$0xf] %v197
                %v199 = vld [vmem:[%s159 + $0xd0] sm:$0xf]
                %200 = vst [vmem:[%s160 + $0x74] sm:$0xf] %v199
                %v201 = vld [vmem:[%s159 + $0xd4] sm:$0xf]
                %202 = vst [vmem:[%s160 + $0x78] sm:$0xf] %v201
                %v203 = vld [vmem:[%s159 + $0xd8] sm:$0xf]
                %204 = vst [vmem:[%s160 + $0x7c] sm:$0xf] %v203
                %v205 = vld [vmem:[%s159 + $0xdc] sm:$0xf]
                %206 = vst [vmem:[%s160 + $0x80] sm:$0xf] %v205
                %v207 = vld [vmem:[%s159 + $0xe0] sm:$0xf]
                %208 = vst [vmem:[%s160 + $0x84] sm:$0xf] %v207
                %v209 = vld [vmem:[%s159 + $0xe4] sm:$0xf]
                %210 = vst [vmem:[%s160 + $0x88] sm:$0xf] %v209
                %v211 = vld [vmem:[%s159 + $0xe8] sm:$0xf]
                %212 = vst [vmem:[%s160 + $0x8c] sm:$0xf] %v211
                %v213 = vld [vmem:[%s159 + $0xec] sm:$0xf]
                %214 = vst [vmem:[%s160 + $0x90] sm:$0xf] %v213
                %v215 = vld [vmem:[%s159 + $0xf0] sm:$0xf]
                %216 = vst [vmem:[%s160 + $0x94] sm:$0xf] %v215
                %v217 = vld [vmem:[%s159 + $0xf4] sm:$0xf]
                %218 = vst [vmem:[%s160 + $0x98] sm:$0xf] %v217
                %v219 = vld [vmem:[%s159 + $0xf8] sm:$0xf]
                %220 = vst [vmem:[%s160 + $0x9c] sm:$0xf] %v219
                %v221 = vld [vmem:[%s159 + $0xfc] sm:$0xf]
                %222 = vst [vmem:[%s160 + $0xa0] sm:$0xf] %v221
                %v223 = vld [vmem:[%s159 + $0x100] sm:$0xf]
                %224 = vst [vmem:[%s160 + $0xa4] sm:$0xf] %v223
                %v225 = vld [vmem:[%s159 + $0x188] sm:$0xf]
                %226 = vst [vmem:[%s160 + $0xd0] sm:$0xf] %v225
                %v227 = vld [vmem:[%s159 + $0x18c] sm:$0xf]
                %228 = vst [vmem:[%s160 + $0xd4] sm:$0xf] %v227
                %v229 = vld [vmem:[%s159 + $0x190] sm:$0xf]
                %230 = vst [vmem:[%s160 + $0xd8] sm:$0xf] %v229
                %v231 = vld [vmem:[%s159 + $0x194] sm:$0xf]
                %232 = vst [vmem:[%s160 + $0xdc] sm:$0xf] %v231
                %v233 = vld [vmem:[%s159 + $0x198] sm:$0xf]
                %234 = vst [vmem:[%s160 + $0xe0] sm:$0xf] %v233
                %v235 = vld [vmem:[%s159 + $0x19c] sm:$0xf]
                %236 = vst [vmem:[%s160 + $0xe4] sm:$0xf] %v235
                %v237 = vld [vmem:[%s159 + $0x1a0] sm:$0xf]
                %238 = vst [vmem:[%s160 + $0xe8] sm:$0xf] %v237
                %v239 = vld [vmem:[%s159 + $0x1a4] sm:$0xf]
                %240 = vst [vmem:[%s160 + $0xec] sm:$0xf] %v239
                %v241 = vld [vmem:[%s159 + $0x1a8] sm:$0xf]
                %242 = vst [vmem:[%s160 + $0xf0] sm:$0xf] %v241
                %v243 = vld [vmem:[%s159 + $0x1ac] sm:$0xf]
                %244 = vst [vmem:[%s160 + $0xf4] sm:$0xf] %v243
                %v245 = vld [vmem:[%s159 + $0x1b0] sm:$0xf]
                %246 = vst [vmem:[%s160 + $0xf8] sm:$0xf] %v245
                %v247 = vld [vmem:[%s159 + $0x1b4] sm:$0xf]
                %248 = vst [vmem:[%s160 + $0xfc] sm:$0xf] %v247
                %v249 = vld [vmem:[%s159 + $0x1b8] sm:$0xf]
                %250 = vst [vmem:[%s160 + $0x100] sm:$0xf] %v249
                %v251 = vld [vmem:[%s159 + $0x1bc] sm:$0xf]
                %252 = vst [vmem:[%s160 + $0x104] sm:$0xf] %v251
                %v253 = vld [vmem:[%s159 + $0x1c0] sm:$0xf]
                %254 = vst [vmem:[%s160 + $0x108] sm:$0xf] %v253
                %v255 = vld [vmem:[%s159 + $0x1c4] sm:$0xf]
                %256 = vst [vmem:[%s160 + $0x10c] sm:$0xf] %v255
                %v257 = vld [vmem:[%s159 + $0x24c] sm:$0xf]
                %258 = vst [vmem:[%s160 + $0x138] sm:$0xf] %v257
                %v259 = vld [vmem:[%s159 + $0x250] sm:$0xf]
                %260 = vst [vmem:[%s160 + $0x13c] sm:$0xf] %v259
                %v261 = vld [vmem:[%s159 + $0x254] sm:$0xf]
                %262 = vst [vmem:[%s160 + $0x140] sm:$0xf] %v261
                %v263 = vld [vmem:[%s159 + $0x258] sm:$0xf]
                %264 = vst [vmem:[%s160 + $0x144] sm:$0xf] %v263
                %v265 = vld [vmem:[%s159 + $0x25c] sm:$0xf]
                %266 = vst [vmem:[%s160 + $0x148] sm:$0xf] %v265
                %v267 = vld [vmem:[%s159 + $0x260] sm:$0xf]
                %268 = vst [vmem:[%s160 + $0x14c] sm:$0xf] %v267
                %v269 = vld [vmem:[%s159 + $0x264] sm:$0xf]
                %270 = vst [vmem:[%s160 + $0x150] sm:$0xf] %v269
                %v271 = vld [vmem:[%s159 + $0x268] sm:$0xf]
                %272 = vst [vmem:[%s160 + $0x154] sm:$0xf] %v271
                %v273 = vld [vmem:[%s159 + $0x26c] sm:$0xf]
                %274 = vst [vmem:[%s160 + $0x158] sm:$0xf] %v273
                %v275 = vld [vmem:[%s159 + $0x270] sm:$0xf]
                %276 = vst [vmem:[%s160 + $0x15c] sm:$0xf] %v275
                %v277 = vld [vmem:[%s159 + $0x274] sm:$0xf]
                %278 = vst [vmem:[%s160 + $0x160] sm:$0xf] %v277
                %v279 = vld [vmem:[%s159 + $0x278] sm:$0xf]
                %280 = vst [vmem:[%s160 + $0x164] sm:$0xf] %v279
                %v281 = vld [vmem:[%s159 + $0x27c] sm:$0xf]
                %282 = vst [vmem:[%s160 + $0x168] sm:$0xf] %v281
                %v283 = vld [vmem:[%s159 + $0x280] sm:$0xf]
                %284 = vst [vmem:[%s160 + $0x16c] sm:$0xf] %v283
                %v285 = vld [vmem:[%s159 + $0x284] sm:$0xf]
                %286 = vst [vmem:[%s160 + $0x170] sm:$0xf] %v285
                %v287 = vld [vmem:[%s159 + $0x288] sm:$0xf]
                %288 = vst [vmem:[%s160 + $0x174] sm:$0xf] %v287
                %s289 = sadd.s32 1, %s158
                %p290 = scmp.ge.s32.totalorder %s289, %s151
                %s291 = scalar_select %p290, 0, %s289
                %s292 = smul.u32 %s291, 64
                %s293 = smul.u32 %s291, 64
                %s294 = scalar_lea.vmem %s142, %s292
                %s295 = scalar_lea.vmem %s134, %s293 [#allocation2]
              $region45: #{forward.3} parent=39 // loop_footer
                %s155 = sadd.s32 %s153, 1
              $region46: #{forward.3} parent=39 // loop_footer_branch
                %152 = sbr.rel target = $region42
              $region47: #{forward.3} parent=39 // loop_exit
                _
              %s296 = sshrl.u32 %s138, 4
              %s297 = sand.u32 %s138, 15
              %s298 = smul.u32 %s296, 16
              %s299 = smul.u32 4, %s298
              %s300 = scalar_lea.vmem %s142, %s299
              %s301 = smul.u32 4, %s298
              %s302 = scalar_lea.vmem %s134, %s301 [#allocation2]
              // While loop
              $region48: #{forward.3} parent=39 // loop_pre_header
                _
              $region49: #{forward.3} parent=39 // loop_header
                %s304 = sphi 0, %s306
                %p305 = scmp.ge.s32.totalorder %s304, %s297
                %s309 = sphi 0, %s322
                %s310 = sphi %s300, %s325
                %s311 = sphi %s302, %s326
              $region50: #{forward.3} parent=39 // loop_header_branch
                %308 = sbr.rel (%p305) target = $region54
              $region51: #{forward.3} parent=39 // loop_body
                %v312 = vld [vmem:[%s310] sm:$0xf]
                %313 = vst [vmem:[%s311] sm:$0xf] %v312
                %v314 = vld [vmem:[%s310 + $0xc4] sm:$0xf]
                %315 = vst [vmem:[%s311 + $0x68] sm:$0xf] %v314
                %v316 = vld [vmem:[%s310 + $0x188] sm:$0xf]
                %317 = vst [vmem:[%s311 + $0xd0] sm:$0xf] %v316
                %v318 = vld [vmem:[%s310 + $0x24c] sm:$0xf]
                %319 = vst [vmem:[%s311 + $0x138] sm:$0xf] %v318
                %s320 = sadd.s32 1, %s309
                %p321 = scmp.ge.s32.totalorder %s320, %s297
                %s322 = scalar_select %p321, 0, %s320
                %s323 = smul.u32 %s322, 4
                %s324 = smul.u32 %s322, 4
                %s325 = scalar_lea.vmem %s300, %s323
                %s326 = scalar_lea.vmem %s302, %s324 [#allocation2]
              $region52: #{forward.3} parent=39 // loop_footer
                %s306 = sadd.s32 %s304, 1
              $region53: #{forward.3} parent=39 // loop_footer_branch
                %303 = sbr.rel target = $region49
              $region54: #{forward.3} parent=39 // loop_exit
                _
            $region40: #{forward.3} parent=31 // pred_fallthru
              _
          $region32: #{forward.3} parent=27 // pred_fallthru
            _
          %547 = vnop
        $region28: #{forward.3} parent=23 // pred_fallthru
          _
      $region24: #{forward.3} parent=5 // pred_fallthru
        _
      %p548 = scmp.le.s32.totalorder 1, %s9
      %p549 = scmp.lt.s32.totalorder %s9, 3
      %p550 = pnand %p548, %p549
      %p551 = pneg %p550
      // Predicated region
      $region87: #{forward.3} parent=5 // pred_check
        _
      $region88: #{forward.3} parent=5 // pred_check_branch
        %553 = sbr.rel (%p550) target = $region90
      $region89: #{forward.3} parent=5 // pred_region
        %s554 = ssub.s32 %s9, 1
        %s555 = sand.u32 %s22, 1
        %s556 = sand.u32 %s22, 1
        %s557 = smul.addr %s556, 416
        %s558 = scalar_lea.vmem [#allocation2], %s557
        // Predicated region
        $region91: #{forward.3} parent=89 // pred_check
          %p559 = pneg %p35
        $region92: #{forward.3} parent=89 // pred_check_branch
          %561 = sbr.rel (%p559) target = $region94
        $region93: #{forward.3} parent=89 // pred_region
          _
        $region94: #{forward.3} parent=89 // pred_fallthru
          _
        %s562 = sand.u32 %s22, 1
        %s563 = sand.u32 %s22, 1
        %s564 = smul.addr %s563, 416
        %s565 = scalar_lea.vmem [#allocation2], %s564
        %p566 = pneg %p35
        %p567 = pneg %p32
        %p568 = pneg %p56
        %p569 = pneg %p53
        %p570 = pneg %p77
        %p571 = pneg %p74
        %p572 = pneg %p103
        %p573 = pneg %p100
        %s574 = sand.u32 %s90, 1
        %s575 = sand.u32 %s90, 1
        %s576 = smul.addr %s575, 104
        %s577 = scalar_lea.vmem [#allocation3], %s576
        %s578 = smul.u32 26, %s14
        %s579 = ssub.s32 49, %s578
        %p580 = scmp.lt.s32.totalorder %s579, 26
        %s581 = scalar_select %p580, %s579, 26
        %s582 = smul.u32 256, %s581
        %s583 = smul.u32 26, %s14
        %s584 = ssub.s32 49, %s583
        %p585 = scmp.lt.s32.totalorder %s584, 26
        %s586 = scalar_select %p585, %s584, 26
        %s587 = smul.u32 64, %s586
        %v589 = vld [vmem:[%s1] sm:$0xf]
        %v590 = vld [vmem:[%s1 + $0x4] sm:$0xf]
        %v591 = vld [vmem:[%s1 + $0x8] sm:$0xf]
        %v592 = vld [vmem:[%s1 + $0xc] sm:$0xf]
        %v593 = vld [vmem:[%s1 + $0x10] sm:$0xf]
        %v594 = vld [vmem:[%s1 + $0x14] sm:$0xf]
        %v595 = vld [vmem:[%s1 + $0x18] sm:$0xf]
        %v596 = vld [vmem:[%s1 + $0x1c] sm:$0xf]
        %v597 = vld [vmem:[%s1 + $0x20] sm:$0xf]
        %v598 = vld [vmem:[%s1 + $0x24] sm:$0xf]
        %v599 = vld [vmem:[%s1 + $0x28] sm:$0xf]
        %v600 = vld [vmem:[%s1 + $0x2c] sm:$0xf]
        %v601 = vld [vmem:[%s1 + $0x30] sm:$0xf]
        %v602 = vld [vmem:[%s1 + $0x34] sm:$0xf]
        %v603 = vld [vmem:[%s1 + $0x38] sm:$0xf]
        %v604 = vld [vmem:[%s1 + $0x3c] sm:$0xf]
        %v605 = vld [vmem:[%s558] sm:$0xf]
        %v606 = vld [vmem:[%s558 + $0x4] sm:$0xf]
        %v607 = vld [vmem:[%s558 + $0x8] sm:$0xf]
        %v608 = vld [vmem:[%s558 + $0xc] sm:$0xf]
        %v609 = vld [vmem:[%s558 + $0x10] sm:$0xf]
        %v610 = vld [vmem:[%s558 + $0x14] sm:$0xf]
        %v611 = vld [vmem:[%s558 + $0x18] sm:$0xf]
        %v612 = vld [vmem:[%s558 + $0x1c] sm:$0xf]
        %v613 = vld [vmem:[%s558 + $0x20] sm:$0xf]
        %v614 = vld [vmem:[%s558 + $0x24] sm:$0xf]
        %v615 = vld [vmem:[%s558 + $0x28] sm:$0xf]
        %v616 = vld [vmem:[%s558 + $0x2c] sm:$0xf]
        %v617 = vld [vmem:[%s558 + $0x30] sm:$0xf]
        %v618 = vld [vmem:[%s558 + $0x34] sm:$0xf]
        %v619 = vld [vmem:[%s558 + $0x38] sm:$0xf]
        %v620 = vld [vmem:[%s558 + $0x3c] sm:$0xf]
        %v621 = vld [vmem:[%s558 + $0x40] sm:$0xf]
        %v622 = vld [vmem:[%s558 + $0x44] sm:$0xf]
        %v623 = vld [vmem:[%s558 + $0x48] sm:$0xf]
        %v624 = vld [vmem:[%s558 + $0x4c] sm:$0xf]
        %v625 = vld [vmem:[%s558 + $0x50] sm:$0xf]
        %v626 = vld [vmem:[%s558 + $0x54] sm:$0xf]
        %v627 = vld [vmem:[%s558 + $0x58] sm:$0xf]
        %v628 = vld [vmem:[%s558 + $0x5c] sm:$0xf]
        %v629 = vld [vmem:[%s558 + $0x60] sm:$0xf]
        %v630 = vld [vmem:[%s558 + $0x64] sm:$0xf]
        %v631 = vld [vmem:[%s558 + $0x68] sm:$0xf]
        %v632 = vld [vmem:[%s558 + $0x6c] sm:$0xf]
        %v633 = vld [vmem:[%s558 + $0x70] sm:$0xf]
        %v634 = vld [vmem:[%s558 + $0x74] sm:$0xf]
        %v635 = vld [vmem:[%s558 + $0x78] sm:$0xf]
        %v636 = vld [vmem:[%s558 + $0x7c] sm:$0xf]
        %v637 = vld [vmem:[%s558 + $0x80] sm:$0xf]
        %v638 = vld [vmem:[%s558 + $0x84] sm:$0xf]
        %v639 = vld [vmem:[%s558 + $0x88] sm:$0xf]
        %v640 = vld [vmem:[%s558 + $0x8c] sm:$0xf]
        %v641 = vld [vmem:[%s558 + $0x90] sm:$0xf]
        %v642 = vld [vmem:[%s558 + $0x94] sm:$0xf]
        %v643 = vld [vmem:[%s558 + $0x98] sm:$0xf]
        %v644 = vld [vmem:[%s558 + $0x9c] sm:$0xf]
        %v645 = vld [vmem:[%s558 + $0xa0] sm:$0xf]
        %v646 = vld [vmem:[%s558 + $0xa4] sm:$0xf]
        %v647 = vld [vmem:[%s558 + $0xa8] sm:$0xf]
        %v648 = vld [vmem:[%s558 + $0xac] sm:$0xf]
        %v649 = vld [vmem:[%s558 + $0xb0] sm:$0xf]
        %v650 = vld [vmem:[%s558 + $0xb4] sm:$0xf]
        %v651 = vld [vmem:[%s558 + $0xb8] sm:$0xf]
        %v652 = vld [vmem:[%s558 + $0xbc] sm:$0xf]
        %v653 = vld [vmem:[%s558 + $0xc0] sm:$0xf]
        %v654 = vld [vmem:[%s558 + $0xc4] sm:$0xf]
        %v655 = vld [vmem:[%s558 + $0xc8] sm:$0xf]
        %v656 = vld [vmem:[%s558 + $0xcc] sm:$0xf]
        %v657 = vld [vmem:[%s558 + $0xd0] sm:$0xf]
        %v658 = vld [vmem:[%s558 + $0xd4] sm:$0xf]
        %v659 = vld [vmem:[%s558 + $0xd8] sm:$0xf]
        %v660 = vld [vmem:[%s558 + $0xdc] sm:$0xf]
        %v661 = vld [vmem:[%s558 + $0xe0] sm:$0xf]
        %v662 = vld [vmem:[%s558 + $0xe4] sm:$0xf]
        %v663 = vld [vmem:[%s558 + $0xe8] sm:$0xf]
        %v664 = vld [vmem:[%s558 + $0xec] sm:$0xf]
        %v665 = vld [vmem:[%s558 + $0xf0] sm:$0xf]
        %v666 = vld [vmem:[%s558 + $0xf4] sm:$0xf]
        %v667 = vld [vmem:[%s558 + $0xf8] sm:$0xf]
        %v668 = vld [vmem:[%s558 + $0xfc] sm:$0xf]
        %v669 = vld [vmem:[%s558 + $0x100] sm:$0xf]
        %v670 = vld [vmem:[%s558 + $0x104] sm:$0xf]
        %v671 = vld [vmem:[%s558 + $0x108] sm:$0xf]
        %v672 = vld [vmem:[%s558 + $0x10c] sm:$0xf]
        %v673 = vld [vmem:[%s558 + $0x110] sm:$0xf]
        %v674 = vld [vmem:[%s558 + $0x114] sm:$0xf]
        %v675 = vld [vmem:[%s558 + $0x118] sm:$0xf]
        %v676 = vld [vmem:[%s558 + $0x11c] sm:$0xf]
        %v677 = vld [vmem:[%s558 + $0x120] sm:$0xf]
        %v678 = vld [vmem:[%s558 + $0x124] sm:$0xf]
        %v679 = vld [vmem:[%s558 + $0x128] sm:$0xf]
        %v680 = vld [vmem:[%s558 + $0x12c] sm:$0xf]
        %v681 = vld [vmem:[%s558 + $0x130] sm:$0xf]
        %v682 = vld [vmem:[%s558 + $0x134] sm:$0xf]
        %v683 = vld [vmem:[%s558 + $0x138] sm:$0xf]
        %v684 = vld [vmem:[%s558 + $0x13c] sm:$0xf]
        %v685 = vld [vmem:[%s558 + $0x140] sm:$0xf]
        %v686 = vld [vmem:[%s558 + $0x144] sm:$0xf]
        %v687 = vld [vmem:[%s558 + $0x148] sm:$0xf]
        %v688 = vld [vmem:[%s558 + $0x14c] sm:$0xf]
        %v689 = vld [vmem:[%s558 + $0x150] sm:$0xf]
        %v690 = vld [vmem:[%s558 + $0x154] sm:$0xf]
        %v691 = vld [vmem:[%s558 + $0x158] sm:$0xf]
        %v692 = vld [vmem:[%s558 + $0x15c] sm:$0xf]
        %v693 = vld [vmem:[%s558 + $0x160] sm:$0xf]
        %v694 = vld [vmem:[%s558 + $0x164] sm:$0xf]
        %v695 = vld [vmem:[%s558 + $0x168] sm:$0xf]
        %v696 = vld [vmem:[%s558 + $0x16c] sm:$0xf]
        %v697 = vld [vmem:[%s558 + $0x170] sm:$0xf]
        %v698 = vld [vmem:[%s558 + $0x174] sm:$0xf]
        %v699 = vld [vmem:[%s558 + $0x178] sm:$0xf]
        %v700 = vld [vmem:[%s558 + $0x17c] sm:$0xf]
        %v701 = vld [vmem:[%s558 + $0x180] sm:$0xf]
        %v702 = vld [vmem:[%s558 + $0x184] sm:$0xf]
        %v703 = vld [vmem:[%s558 + $0x188] sm:$0xf]
        %v704 = vld [vmem:[%s558 + $0x18c] sm:$0xf]
        %v705 = vld [vmem:[%s558 + $0x190] sm:$0xf]
        %v706 = vld [vmem:[%s558 + $0x194] sm:$0xf]
        %v707 = vld [vmem:[%s558 + $0x198] sm:$0xf]
        %v708 = vld [vmem:[%s558 + $0x19c] sm:$0xf]
        %v813 = vunpack.c.l.b16 %v605
        %v814 = vunpack.c.l.b16 %v606
        %v815 = vunpack.c.l.b16 %v607
        %v816 = vunpack.c.l.b16 %v608
        %v817 = vunpack.c.l.b16 %v609
        %v818 = vunpack.c.l.b16 %v610
        %v819 = vunpack.c.l.b16 %v611
        %v820 = vunpack.c.l.b16 %v612
        %v821 = vunpack.c.l.b16 %v613
        %v822 = vunpack.c.l.b16 %v614
        %v823 = vunpack.c.l.b16 %v615
        %v824 = vunpack.c.l.b16 %v616
        %v825 = vunpack.c.l.b16 %v617
        %v826 = vunpack.c.l.b16 %v618
        %v827 = vunpack.c.l.b16 %v619
        %v828 = vunpack.c.l.b16 %v620
        %v829 = vunpack.c.l.b16 %v621
        %v830 = vunpack.c.l.b16 %v622
        %v831 = vunpack.c.l.b16 %v623
        %v832 = vunpack.c.l.b16 %v624
        %v833 = vunpack.c.l.b16 %v625
        %v834 = vunpack.c.l.b16 %v626
        %v835 = vunpack.c.l.b16 %v627
        %v836 = vunpack.c.l.b16 %v628
        %v837 = vunpack.c.l.b16 %v629
        %v838 = vunpack.c.l.b16 %v630
        %v839 = vunpack.c.l.b16 %v631
        %v840 = vunpack.c.l.b16 %v632
        %v841 = vunpack.c.l.b16 %v633
        %v842 = vunpack.c.l.b16 %v634
        %v843 = vunpack.c.l.b16 %v635
        %v844 = vunpack.c.l.b16 %v636
        %v845 = vunpack.c.l.b16 %v637
        %v846 = vunpack.c.l.b16 %v638
        %v847 = vunpack.c.l.b16 %v639
        %v848 = vunpack.c.l.b16 %v640
        %v849 = vunpack.c.l.b16 %v641
        %v850 = vunpack.c.l.b16 %v642
        %v851 = vunpack.c.l.b16 %v643
        %v852 = vunpack.c.l.b16 %v644
        %v853 = vunpack.c.l.b16 %v645
        %v854 = vunpack.c.l.b16 %v646
        %v855 = vunpack.c.l.b16 %v647
        %v856 = vunpack.c.l.b16 %v648
        %v857 = vunpack.c.l.b16 %v649
        %v858 = vunpack.c.l.b16 %v650
        %v859 = vunpack.c.l.b16 %v651
        %v860 = vunpack.c.l.b16 %v652
        %v861 = vunpack.c.l.b16 %v653
        %v862 = vunpack.c.l.b16 %v654
        %v863 = vunpack.c.l.b16 %v655
        %v864 = vunpack.c.l.b16 %v656
        %v865 = vunpack.c.l.b16 %v657
        %v866 = vunpack.c.l.b16 %v658
        %v867 = vunpack.c.l.b16 %v659
        %v868 = vunpack.c.l.b16 %v660
        %v869 = vunpack.c.l.b16 %v661
        %v870 = vunpack.c.l.b16 %v662
        %v871 = vunpack.c.l.b16 %v663
        %v872 = vunpack.c.l.b16 %v664
        %v873 = vunpack.c.l.b16 %v665
        %v874 = vunpack.c.l.b16 %v666
        %v875 = vunpack.c.l.b16 %v667
        %v876 = vunpack.c.l.b16 %v668
        %v877 = vunpack.c.l.b16 %v669
        %v878 = vunpack.c.l.b16 %v670
        %v879 = vunpack.c.l.b16 %v671
        %v880 = vunpack.c.l.b16 %v672
        %v881 = vunpack.c.l.b16 %v673
        %v882 = vunpack.c.l.b16 %v674
        %v883 = vunpack.c.l.b16 %v675
        %v884 = vunpack.c.l.b16 %v676
        %v885 = vunpack.c.l.b16 %v677
        %v886 = vunpack.c.l.b16 %v678
        %v887 = vunpack.c.l.b16 %v679
        %v888 = vunpack.c.l.b16 %v680
        %v889 = vunpack.c.l.b16 %v681
        %v890 = vunpack.c.l.b16 %v682
        %v891 = vunpack.c.l.b16 %v683
        %v892 = vunpack.c.l.b16 %v684
        %v893 = vunpack.c.l.b16 %v685
        %v894 = vunpack.c.l.b16 %v686
        %v895 = vunpack.c.l.b16 %v687
        %v896 = vunpack.c.l.b16 %v688
        %v897 = vunpack.c.l.b16 %v689
        %v898 = vunpack.c.l.b16 %v690
        %v899 = vunpack.c.l.b16 %v691
        %v900 = vunpack.c.l.b16 %v692
        %v901 = vunpack.c.l.b16 %v693
        %v902 = vunpack.c.l.b16 %v694
        %v903 = vunpack.c.l.b16 %v695
        %v904 = vunpack.c.l.b16 %v696
        %v905 = vunpack.c.l.b16 %v697
        %v906 = vunpack.c.l.b16 %v698
        %v907 = vunpack.c.l.b16 %v699
        %v908 = vunpack.c.l.b16 %v700
        %v909 = vunpack.c.l.b16 %v701
        %v910 = vunpack.c.l.b16 %v702
        %v911 = vunpack.c.l.b16 %v703
        %v912 = vunpack.c.l.b16 %v704
        %v913 = vunpack.c.l.b16 %v705
        %v914 = vunpack.c.l.b16 %v706
        %v915 = vunpack.c.l.b16 %v707
        %v916 = vunpack.c.l.b16 %v708
        %v917 = vpack.c.b16 %v814, %v813
        %v918 = vpack.c.b16 %v816, %v815
        %v919 = vpack.c.b16 %v818, %v817
        %v920 = vpack.c.b16 %v820, %v819
        %v921 = vpack.c.b16 %v822, %v821
        %v922 = vpack.c.b16 %v824, %v823
        %v923 = vpack.c.b16 %v826, %v825
        %v924 = vpack.c.b16 %v828, %v827
        %v925 = vpack.c.b16 %v830, %v829
        %v926 = vpack.c.b16 %v832, %v831
        %v927 = vpack.c.b16 %v834, %v833
        %v928 = vpack.c.b16 %v836, %v835
        %v929 = vpack.c.b16 %v838, %v837
        %v930 = vpack.c.b16 %v840, %v839
        %v931 = vpack.c.b16 %v842, %v841
        %v932 = vpack.c.b16 %v844, %v843
        %v933 = vpack.c.b16 %v846, %v845
        %v934 = vpack.c.b16 %v848, %v847
        %v935 = vpack.c.b16 %v850, %v849
        %v936 = vpack.c.b16 %v852, %v851
        %v937 = vpack.c.b16 %v854, %v853
        %v938 = vpack.c.b16 %v856, %v855
        %v939 = vpack.c.b16 %v858, %v857
        %v940 = vpack.c.b16 %v860, %v859
        %v941 = vpack.c.b16 %v862, %v861
        %v942 = vpack.c.b16 %v864, %v863
        %v943 = vpack.c.b16 %v866, %v865
        %v944 = vpack.c.b16 %v868, %v867
        %v945 = vpack.c.b16 %v870, %v869
        %v946 = vpack.c.b16 %v872, %v871
        %v947 = vpack.c.b16 %v874, %v873
        %v948 = vpack.c.b16 %v876, %v875
        %v949 = vpack.c.b16 %v878, %v877
        %v950 = vpack.c.b16 %v880, %v879
        %v951 = vpack.c.b16 %v882, %v881
        %v952 = vpack.c.b16 %v884, %v883
        %v953 = vpack.c.b16 %v886, %v885
        %v954 = vpack.c.b16 %v888, %v887
        %v955 = vpack.c.b16 %v890, %v889
        %v956 = vpack.c.b16 %v892, %v891
        %v957 = vpack.c.b16 %v894, %v893
        %v958 = vpack.c.b16 %v896, %v895
        %v959 = vpack.c.b16 %v898, %v897
        %v960 = vpack.c.b16 %v900, %v899
        %v961 = vpack.c.b16 %v902, %v901
        %v962 = vpack.c.b16 %v904, %v903
        %v963 = vpack.c.b16 %v906, %v905
        %v964 = vpack.c.b16 %v908, %v907
        %v965 = vpack.c.b16 %v910, %v909
        %v966 = vpack.c.b16 %v912, %v911
        %v967 = vpack.c.b16 %v914, %v913
        %v968 = vpack.c.b16 %v916, %v915
        %v1037 = vunpack.c.l.b16 %v589
        %v1038 = vunpack.c.l.b16 %v590
        %v1039 = vunpack.c.l.b16 %v591
        %v1040 = vunpack.c.l.b16 %v592
        %v1041 = vunpack.c.l.b16 %v593
        %v1042 = vunpack.c.l.b16 %v594
        %v1043 = vunpack.c.l.b16 %v595
        %v1044 = vunpack.c.l.b16 %v596
        %v1045 = vunpack.c.l.b16 %v597
        %v1046 = vunpack.c.l.b16 %v598
        %v1047 = vunpack.c.l.b16 %v599
        %v1048 = vunpack.c.l.b16 %v600
        %v1049 = vunpack.c.l.b16 %v601
        %v1050 = vunpack.c.l.b16 %v602
        %v1051 = vunpack.c.l.b16 %v603
        %v1052 = vunpack.c.l.b16 %v604
        %v1053 = vpack.c.b16 %v1038, %v1037
        %v1054 = vpack.c.b16 %v1040, %v1039
        %v1055 = vpack.c.b16 %v1042, %v1041
        %v1056 = vpack.c.b16 %v1044, %v1043
        %v1057 = vpack.c.b16 %v1046, %v1045
        %v1058 = vpack.c.b16 %v1048, %v1047
        %v1059 = vpack.c.b16 %v1050, %v1049
        %v1060 = vpack.c.b16 %v1052, %v1051
        %1069 = vmatprep.subr.bf16.mxu0 0
        %1070 = vmatpush1.bf16.msra.mxu0 %v1053
        %1071 = vmatprep.subr.bf16.mxu0 0
        %1072 = vmatpush1.bf16.msra.mxu0 %v1054
        %1073 = vmatprep.subr.bf16.mxu0 0
        %1074 = vmatpush1.bf16.msra.mxu0 %v1055
        %1075 = vmatprep.subr.bf16.mxu0 0
        %1076 = vmatpush1.bf16.msra.mxu0 %v1056
        %1077 = vmatprep.subr.bf16.mxu0 0
        %1078 = vmatpush1.bf16.msra.mxu0 %v1057
        %1079 = vmatprep.subr.bf16.mxu0 0
        %1080 = vmatpush1.bf16.msra.mxu0 %v1058
        %1081 = vmatprep.subr.bf16.mxu0 0
        %1082 = vmatpush1.bf16.msra.mxu0 %v1059
        %1083 = vmatprep.subr.bf16.mxu0 0
        %1084 = vmatpush1.bf16.msra.mxu0 %v1060
        %1085 = vmatprep.subr.bf16.mxu0 0
        %1086 = vmatpush1.bf16.msra.mxu0 0
        %1087 = vmatprep.subr.bf16.mxu0 0
        %1088 = vmatpush1.bf16.msra.mxu0 0
        %1089 = vmatprep.subr.bf16.mxu0 0
        %1090 = vmatpush1.bf16.msra.mxu0 0
        %1091 = vmatprep.subr.bf16.mxu0 0
        %1092 = vmatpush1.bf16.msra.mxu0 0
        %1093 = vmatprep.subr.bf16.mxu0 0
        %1094 = vmatpush1.bf16.msra.mxu0 0
        %1095 = vmatprep.subr.bf16.mxu0 0
        %1096 = vmatpush1.bf16.msra.mxu0 0
        %1097 = vmatprep.subr.bf16.mxu0 0
        %1098 = vmatpush1.bf16.msra.mxu0 0
        %1099 = vmatprep.subr.bf16.mxu0 0
        %1100 = vmatpush1.bf16.msra.mxu0 0
        %1101 = vmatprep.mubr.bf16.mxu0 0
        %1102 = vmatmul.mubr.bf16.gmra.mrb[0].mxu0 %v917
        %v1103 = vpop.f32.mrb[0].mxu0
        %v1104 = vadd.f32 0.0, %v1103
        %v1105 = vpop.f32.mrb[0].mxu0
        %v1106 = vpop.f32.mrb[0].mxu0
        %v1107 = vadd.f32 0.0, %v1106
        %v1108 = vpop.f32.mrb[0].mxu0
        %1109 = vmatprep.mubr.bf16.mxu0 0
        %1110 = vmatmul.mubr.bf16.gmra.mrb[0].mxu0 %v918
        %v1111 = vpop.f32.mrb[0].mxu0
        %v1112 = vadd.f32 0.0, %v1111
        %v1113 = vpop.f32.mrb[0].mxu0
        %v1114 = vpop.f32.mrb[0].mxu0
        %v1115 = vadd.f32 0.0, %v1114
        %v1116 = vpop.f32.mrb[0].mxu0
        %1117 = vmatprep.mubr.bf16.mxu0 0
        %1118 = vmatmul.mubr.bf16.gmra.mrb[0].mxu0 %v919
        %v1119 = vpop.f32.mrb[0].mxu0
        %v1120 = vadd.f32 0.0, %v1119
        %v1121 = vpop.f32.mrb[0].mxu0
        %v1122 = vpop.f32.mrb[0].mxu0
        %v1123 = vadd.f32 0.0, %v1122
        %v1124 = vpop.f32.mrb[0].mxu0
        %1125 = vmatprep.mubr.bf16.mxu0 0
        %1126 = vmatmul.mubr.bf16.gmra.mrb[0].mxu0 %v920
        %v1127 = vpop.f32.mrb[0].mxu0
        %v1128 = vadd.f32 0.0, %v1127
        %v1129 = vpop.f32.mrb[0].mxu0
        %v1130 = vpop.f32.mrb[0].mxu0
        %v1131 = vadd.f32 0.0, %v1130
        %v1132 = vpop.f32.mrb[0].mxu0
        %1133 = vmatprep.mubr.bf16.mxu0 0
        %1134 = vmatmul.mubr.bf16.gmra.mrb[0].mxu0 %v921
        %v1135 = vpop.f32.mrb[0].mxu0
        %v1136 = vadd.f32 0.0, %v1135
        %v1137 = vpop.f32.mrb[0].mxu0
        %v1138 = vpop.f32.mrb[0].mxu0
        %v1139 = vadd.f32 0.0, %v1138
        %v1140 = vpop.f32.mrb[0].mxu0
        %1141 = vmatprep.mubr.bf16.mxu0 0
        %1142 = vmatmul.mubr.bf16.gmra.mrb[0].mxu0 %v922
        %v1143 = vpop.f32.mrb[0].mxu0
        %v1144 = vadd.f32 0.0, %v1143
        %v1145 = vpop.f32.mrb[0].mxu0
        %v1146 = vpop.f32.mrb[0].mxu0
        %v1147 = vadd.f32 0.0, %v1146
        %v1148 = vpop.f32.mrb[0].mxu0
        %1149 = vmatprep.mubr.bf16.mxu0 0
        %1150 = vmatmul.mubr.bf16.gmra.mrb[0].mxu0 %v923
        %v1151 = vpop.f32.mrb[0].mxu0
        %v1152 = vadd.f32 0.0, %v1151
        %v1153 = vpop.f32.mrb[0].mxu0
        %v1154 = vpop.f32.mrb[0].mxu0
        %v1155 = vadd.f32 0.0, %v1154
        %v1156 = vpop.f32.mrb[0].mxu0
        %1157 = vmatprep.mubr.bf16.mxu0 0
        %1158 = vmatmul.mubr.bf16.gmra.mrb[0].mxu0 %v924
        %v1159 = vpop.f32.mrb[0].mxu0
        %v1160 = vadd.f32 0.0, %v1159
        %v1161 = vpop.f32.mrb[0].mxu0
        %v1162 = vpop.f32.mrb[0].mxu0
        %v1163 = vadd.f32 0.0, %v1162
        %v1164 = vpop.f32.mrb[0].mxu0
        %1165 = vmatprep.mubr.bf16.mxu0 0
        %1166 = vmatmul.mubr.bf16.gmra.mrb[0].mxu0 %v925
        %v1167 = vpop.f32.mrb[0].mxu0
        %v1168 = vadd.f32 0.0, %v1167
        %v1169 = vpop.f32.mrb[0].mxu0
        %v1170 = vpop.f32.mrb[0].mxu0
        %v1171 = vadd.f32 0.0, %v1170
        %v1172 = vpop.f32.mrb[0].mxu0
        %1173 = vmatprep.mubr.bf16.mxu0 0
        %1174 = vmatmul.mubr.bf16.gmra.mrb[0].mxu0 %v926
        %v1175 = vpop.f32.mrb[0].mxu0
        %v1176 = vadd.f32 0.0, %v1175
        %v1177 = vpop.f32.mrb[0].mxu0
        %v1178 = vpop.f32.mrb[0].mxu0
        %v1179 = vadd.f32 0.0, %v1178
        %v1180 = vpop.f32.mrb[0].mxu0
        %1181 = vmatprep.mubr.bf16.mxu0 0
        %1182 = vmatmul.mubr.bf16.gmra.mrb[0].mxu0 %v927
        %v1183 = vpop.f32.mrb[0].mxu0
        %v1184 = vadd.f32 0.0, %v1183
        %v1185 = vpop.f32.mrb[0].mxu0
        %v1186 = vpop.f32.mrb[0].mxu0
        %v1187 = vadd.f32 0.0, %v1186
        %v1188 = vpop.f32.mrb[0].mxu0
        %1189 = vmatprep.mubr.bf16.mxu0 0
        %1190 = vmatmul.mubr.bf16.gmra.mrb[0].mxu0 %v928
        %v1191 = vpop.f32.mrb[0].mxu0
        %v1192 = vadd.f32 0.0, %v1191
        %v1193 = vpop.f32.mrb[0].mxu0
        %v1194 = vpop.f32.mrb[0].mxu0
        %v1195 = vadd.f32 0.0, %v1194
        %v1196 = vpop.f32.mrb[0].mxu0
        %1197 = vmatprep.mubr.bf16.mxu0 0
        %1198 = vmatmul.mubr.bf16.gmra.mrb[0].mxu0 %v929
        %v1199 = vpop.f32.mrb[0].mxu0
        %v1200 = vadd.f32 0.0, %v1199
        %v1201 = vpop.f32.mrb[0].mxu0
        %v1202 = vpop.f32.mrb[0].mxu0
        %v1203 = vadd.f32 0.0, %v1202
        %v1204 = vpop.f32.mrb[0].mxu0
        %1205 = vmatprep.mubr.bf16.mxu0 0
        %1206 = vmatmul.mubr.bf16.gmra.mrb[0].mxu0 %v930
        %v1207 = vpop.f32.mrb[0].mxu0
        %v1208 = vadd.f32 0.0, %v1207
        %v1209 = vpop.f32.mrb[0].mxu0
        %v1210 = vpop.f32.mrb[0].mxu0
        %v1211 = vadd.f32 0.0, %v1210
        %v1212 = vpop.f32.mrb[0].mxu0
        %1213 = vmatprep.mubr.bf16.mxu0 0
        %1214 = vmatmul.mubr.bf16.gmra.mrb[0].mxu0 %v931
        %v1215 = vpop.f32.mrb[0].mxu0
        %v1216 = vadd.f32 0.0, %v1215
        %v1217 = vpop.f32.mrb[0].mxu0
        %v1218 = vpop.f32.mrb[0].mxu0
        %v1219 = vadd.f32 0.0, %v1218
        %v1220 = vpop.f32.mrb[0].mxu0
        %1221 = vmatprep.mubr.bf16.mxu0 0
        %1222 = vmatmul.mubr.bf16.gmra.mrb[0].mxu0 %v932
        %v1223 = vpop.f32.mrb[0].mxu0
        %v1224 = vadd.f32 0.0, %v1223
        %v1225 = vpop.f32.mrb[0].mxu0
        %v1226 = vpop.f32.mrb[0].mxu0
        %v1227 = vadd.f32 0.0, %v1226
        %v1228 = vpop.f32.mrb[0].mxu0
        %1229 = vmatprep.mubr.bf16.mxu0 0
        %1230 = vmatmul.mubr.bf16.gmra.mrb[0].mxu0 %v933
        %v1231 = vpop.f32.mrb[0].mxu0
        %v1232 = vadd.f32 0.0, %v1231
        %v1233 = vpop.f32.mrb[0].mxu0
        %v1234 = vpop.f32.mrb[0].mxu0
        %v1235 = vadd.f32 0.0, %v1234
        %v1236 = vpop.f32.mrb[0].mxu0
        %1237 = vmatprep.mubr.bf16.mxu0 0
        %1238 = vmatmul.mubr.bf16.gmra.mrb[0].mxu0 %v934
        %v1239 = vpop.f32.mrb[0].mxu0
        %v1240 = vadd.f32 0.0, %v1239
        %v1241 = vpop.f32.mrb[0].mxu0
        %v1242 = vpop.f32.mrb[0].mxu0
        %v1243 = vadd.f32 0.0, %v1242
        %v1244 = vpop.f32.mrb[0].mxu0
        %1245 = vmatprep.mubr.bf16.mxu0 0
        %1246 = vmatmul.mubr.bf16.gmra.mrb[0].mxu0 %v935
        %v1247 = vpop.f32.mrb[0].mxu0
        %v1248 = vadd.f32 0.0, %v1247
        %v1249 = vpop.f32.mrb[0].mxu0
        %v1250 = vpop.f32.mrb[0].mxu0
        %v1251 = vadd.f32 0.0, %v1250
        %v1252 = vpop.f32.mrb[0].mxu0
        %1253 = vmatprep.mubr.bf16.mxu0 0
        %1254 = vmatmul.mubr.bf16.gmra.mrb[0].mxu0 %v936
        %v1255 = vpop.f32.mrb[0].mxu0
        %v1256 = vadd.f32 0.0, %v1255
        %v1257 = vpop.f32.mrb[0].mxu0
        %v1258 = vpop.f32.mrb[0].mxu0
        %v1259 = vadd.f32 0.0, %v1258
        %v1260 = vpop.f32.mrb[0].mxu0
        %1261 = vmatprep.mubr.bf16.mxu0 0
        %1262 = vmatmul.mubr.bf16.gmra.mrb[0].mxu0 %v937
        %v1263 = vpop.f32.mrb[0].mxu0
        %v1264 = vadd.f32 0.0, %v1263
        %v1265 = vpop.f32.mrb[0].mxu0
        %v1266 = vpop.f32.mrb[0].mxu0
        %v1267 = vadd.f32 0.0, %v1266
        %v1268 = vpop.f32.mrb[0].mxu0
        %1269 = vmatprep.mubr.bf16.mxu0 0
        %1270 = vmatmul.mubr.bf16.gmra.mrb[0].mxu0 %v938
        %v1271 = vpop.f32.mrb[0].mxu0
        %v1272 = vadd.f32 0.0, %v1271
        %v1273 = vpop.f32.mrb[0].mxu0
        %v1274 = vpop.f32.mrb[0].mxu0
        %v1275 = vadd.f32 0.0, %v1274
        %v1276 = vpop.f32.mrb[0].mxu0
        %1277 = vmatprep.mubr.bf16.mxu0 0
        %1278 = vmatmul.mubr.bf16.gmra.mrb[0].mxu0 %v939
        %v1279 = vpop.f32.mrb[0].mxu0
        %v1280 = vadd.f32 0.0, %v1279
        %v1281 = vpop.f32.mrb[0].mxu0
        %v1282 = vpop.f32.mrb[0].mxu0
        %v1283 = vadd.f32 0.0, %v1282
        %v1284 = vpop.f32.mrb[0].mxu0
        %1285 = vmatprep.mubr.bf16.mxu0 0
        %1286 = vmatmul.mubr.bf16.gmra.mrb[0].mxu0 %v940
        %v1287 = vpop.f32.mrb[0].mxu0
        %v1288 = vadd.f32 0.0, %v1287
        %v1289 = vpop.f32.mrb[0].mxu0
        %v1290 = vpop.f32.mrb[0].mxu0
        %v1291 = vadd.f32 0.0, %v1290
        %v1292 = vpop.f32.mrb[0].mxu0
        %1293 = vmatprep.mubr.bf16.mxu0 0
        %1294 = vmatmul.mubr.bf16.gmra.mrb[0].mxu0 %v941
        %v1295 = vpop.f32.mrb[0].mxu0
        %v1296 = vadd.f32 0.0, %v1295
        %v1297 = vpop.f32.mrb[0].mxu0
        %v1298 = vpop.f32.mrb[0].mxu0
        %v1299 = vadd.f32 0.0, %v1298
        %v1300 = vpop.f32.mrb[0].mxu0
        %1301 = vmatprep.mubr.bf16.mxu0 0
        %1302 = vmatmul.mubr.bf16.gmra.mrb[0].mxu0 %v942
        %v1303 = vpop.f32.mrb[0].mxu0
        %v1304 = vadd.f32 0.0, %v1303
        %v1305 = vpop.f32.mrb[0].mxu0
        %v1306 = vpop.f32.mrb[0].mxu0
        %v1307 = vadd.f32 0.0, %v1306
        %v1308 = vpop.f32.mrb[0].mxu0
        %1309 = vmatprep.mubr.bf16.mxu0 0
        %1310 = vmatmul.mubr.bf16.gmra.mrb[0].mxu0 %v943
        %v1311 = vpop.f32.mrb[0].mxu0
        %v1312 = vadd.f32 0.0, %v1311
        %v1313 = vpop.f32.mrb[0].mxu0
        %v1314 = vpop.f32.mrb[0].mxu0
        %v1315 = vadd.f32 0.0, %v1314
        %v1316 = vpop.f32.mrb[0].mxu0
        %1317 = vmatprep.mubr.bf16.mxu0 0
        %1318 = vmatmul.mubr.bf16.gmra.mrb[0].mxu0 %v944
        %v1319 = vpop.f32.mrb[0].mxu0
        %v1320 = vadd.f32 0.0, %v1319
        %v1321 = vpop.f32.mrb[0].mxu0
        %v1322 = vpop.f32.mrb[0].mxu0
        %v1323 = vadd.f32 0.0, %v1322
        %v1324 = vpop.f32.mrb[0].mxu0
        %1325 = vmatprep.mubr.bf16.mxu0 0
        %1326 = vmatmul.mubr.bf16.gmra.mrb[0].mxu0 %v945
        %v1327 = vpop.f32.mrb[0].mxu0
        %v1328 = vadd.f32 0.0, %v1327
        %v1329 = vpop.f32.mrb[0].mxu0
        %v1330 = vpop.f32.mrb[0].mxu0
        %v1331 = vadd.f32 0.0, %v1330
        %v1332 = vpop.f32.mrb[0].mxu0
        %1333 = vmatprep.mubr.bf16.mxu0 0
        %1334 = vmatmul.mubr.bf16.gmra.mrb[0].mxu0 %v946
        %v1335 = vpop.f32.mrb[0].mxu0
        %v1336 = vadd.f32 0.0, %v1335
        %v1337 = vpop.f32.mrb[0].mxu0
        %v1338 = vpop.f32.mrb[0].mxu0
        %v1339 = vadd.f32 0.0, %v1338
        %v1340 = vpop.f32.mrb[0].mxu0
        %1341 = vmatprep.mubr.bf16.mxu0 0
        %1342 = vmatmul.mubr.bf16.gmra.mrb[0].mxu0 %v947
        %v1343 = vpop.f32.mrb[0].mxu0
        %v1344 = vadd.f32 0.0, %v1343
        %v1345 = vpop.f32.mrb[0].mxu0
        %v1346 = vpop.f32.mrb[0].mxu0
        %v1347 = vadd.f32 0.0, %v1346
        %v1348 = vpop.f32.mrb[0].mxu0
        %1349 = vmatprep.mubr.bf16.mxu0 0
        %1350 = vmatmul.mubr.bf16.gmra.mrb[0].mxu0 %v948
        %v1351 = vpop.f32.mrb[0].mxu0
        %v1352 = vadd.f32 0.0, %v1351
        %v1353 = vpop.f32.mrb[0].mxu0
        %v1354 = vpop.f32.mrb[0].mxu0
        %v1355 = vadd.f32 0.0, %v1354
        %v1356 = vpop.f32.mrb[0].mxu0
        %1357 = vmatprep.mubr.bf16.mxu0 0
        %1358 = vmatmul.mubr.bf16.gmra.mrb[0].mxu0 %v949
        %v1359 = vpop.f32.mrb[0].mxu0
        %v1360 = vadd.f32 0.0, %v1359
        %v1361 = vpop.f32.mrb[0].mxu0
        %v1362 = vpop.f32.mrb[0].mxu0
        %v1363 = vadd.f32 0.0, %v1362
        %v1364 = vpop.f32.mrb[0].mxu0
        %1365 = vmatprep.mubr.bf16.mxu0 0
        %1366 = vmatmul.mubr.bf16.gmra.mrb[0].mxu0 %v950
        %v1367 = vpop.f32.mrb[0].mxu0
        %v1368 = vadd.f32 0.0, %v1367
        %v1369 = vpop.f32.mrb[0].mxu0
        %v1370 = vpop.f32.mrb[0].mxu0
        %v1371 = vadd.f32 0.0, %v1370
        %v1372 = vpop.f32.mrb[0].mxu0
        %1373 = vmatprep.mubr.bf16.mxu0 0
        %1374 = vmatmul.mubr.bf16.gmra.mrb[0].mxu0 %v951
        %v1375 = vpop.f32.mrb[0].mxu0
        %v1376 = vadd.f32 0.0, %v1375
        %v1377 = vpop.f32.mrb[0].mxu0
        %v1378 = vpop.f32.mrb[0].mxu0
        %v1379 = vadd.f32 0.0, %v1378
        %v1380 = vpop.f32.mrb[0].mxu0
        %1381 = vmatprep.mubr.bf16.mxu0 0
        %1382 = vmatmul.mubr.bf16.gmra.mrb[0].mxu0 %v952
        %v1383 = vpop.f32.mrb[0].mxu0
        %v1384 = vadd.f32 0.0, %v1383
        %v1385 = vpop.f32.mrb[0].mxu0
        %v1386 = vpop.f32.mrb[0].mxu0
        %v1387 = vadd.f32 0.0, %v1386
        %v1388 = vpop.f32.mrb[0].mxu0
        %1389 = vmatprep.mubr.bf16.mxu0 0
        %1390 = vmatmul.mubr.bf16.gmra.mrb[0].mxu0 %v953
        %v1391 = vpop.f32.mrb[0].mxu0
        %v1392 = vadd.f32 0.0, %v1391
        %v1393 = vpop.f32.mrb[0].mxu0
        %v1394 = vpop.f32.mrb[0].mxu0
        %v1395 = vadd.f32 0.0, %v1394
        %v1396 = vpop.f32.mrb[0].mxu0
        %1397 = vmatprep.mubr.bf16.mxu0 0
        %1398 = vmatmul.mubr.bf16.gmra.mrb[0].mxu0 %v954
        %v1399 = vpop.f32.mrb[0].mxu0
        %v1400 = vadd.f32 0.0, %v1399
        %v1401 = vpop.f32.mrb[0].mxu0
        %v1402 = vpop.f32.mrb[0].mxu0
        %v1403 = vadd.f32 0.0, %v1402
        %v1404 = vpop.f32.mrb[0].mxu0
        %1405 = vmatprep.mubr.bf16.mxu0 0
        %1406 = vmatmul.mubr.bf16.gmra.mrb[0].mxu0 %v955
        %v1407 = vpop.f32.mrb[0].mxu0
        %v1408 = vadd.f32 0.0, %v1407
        %v1409 = vpop.f32.mrb[0].mxu0
        %v1410 = vpop.f32.mrb[0].mxu0
        %v1411 = vadd.f32 0.0, %v1410
        %v1412 = vpop.f32.mrb[0].mxu0
        %1413 = vmatprep.mubr.bf16.mxu0 0
        %1414 = vmatmul.mubr.bf16.gmra.mrb[0].mxu0 %v956
        %v1415 = vpop.f32.mrb[0].mxu0
        %v1416 = vadd.f32 0.0, %v1415
        %v1417 = vpop.f32.mrb[0].mxu0
        %v1418 = vpop.f32.mrb[0].mxu0
        %v1419 = vadd.f32 0.0, %v1418
        %v1420 = vpop.f32.mrb[0].mxu0
        %1421 = vmatprep.mubr.bf16.mxu0 0
        %1422 = vmatmul.mubr.bf16.gmra.mrb[0].mxu0 %v957
        %v1423 = vpop.f32.mrb[0].mxu0
        %v1424 = vadd.f32 0.0, %v1423
        %v1425 = vpop.f32.mrb[0].mxu0
        %v1426 = vpop.f32.mrb[0].mxu0
        %v1427 = vadd.f32 0.0, %v1426
        %v1428 = vpop.f32.mrb[0].mxu0
        %1429 = vmatprep.mubr.bf16.mxu0 0
        %1430 = vmatmul.mubr.bf16.gmra.mrb[0].mxu0 %v958
        %v1431 = vpop.f32.mrb[0].mxu0
        %v1432 = vadd.f32 0.0, %v1431
        %v1433 = vpop.f32.mrb[0].mxu0
        %v1434 = vpop.f32.mrb[0].mxu0
        %v1435 = vadd.f32 0.0, %v1434
        %v1436 = vpop.f32.mrb[0].mxu0
        %1437 = vmatprep.mubr.bf16.mxu0 0
        %1438 = vmatmul.mubr.bf16.gmra.mrb[0].mxu0 %v959
        %v1439 = vpop.f32.mrb[0].mxu0
        %v1440 = vadd.f32 0.0, %v1439
        %v1441 = vpop.f32.mrb[0].mxu0
        %v1442 = vpop.f32.mrb[0].mxu0
        %v1443 = vadd.f32 0.0, %v1442
        %v1444 = vpop.f32.mrb[0].mxu0
        %1445 = vmatprep.mubr.bf16.mxu0 0
        %1446 = vmatmul.mubr.bf16.gmra.mrb[0].mxu0 %v960
        %v1447 = vpop.f32.mrb[0].mxu0
        %v1448 = vadd.f32 0.0, %v1447
        %v1449 = vpop.f32.mrb[0].mxu0
        %v1450 = vpop.f32.mrb[0].mxu0
        %v1451 = vadd.f32 0.0, %v1450
        %v1452 = vpop.f32.mrb[0].mxu0
        %1453 = vmatprep.mubr.bf16.mxu0 0
        %1454 = vmatmul.mubr.bf16.gmra.mrb[0].mxu0 %v961
        %v1455 = vpop.f32.mrb[0].mxu0
        %v1456 = vadd.f32 0.0, %v1455
        %v1457 = vpop.f32.mrb[0].mxu0
        %v1458 = vpop.f32.mrb[0].mxu0
        %v1459 = vadd.f32 0.0, %v1458
        %v1460 = vpop.f32.mrb[0].mxu0
        %1461 = vmatprep.mubr.bf16.mxu0 0
        %1462 = vmatmul.mubr.bf16.gmra.mrb[0].mxu0 %v962
        %v1463 = vpop.f32.mrb[0].mxu0
        %v1464 = vadd.f32 0.0, %v1463
        %v1465 = vpop.f32.mrb[0].mxu0
        %v1466 = vpop.f32.mrb[0].mxu0
        %v1467 = vadd.f32 0.0, %v1466
        %v1468 = vpop.f32.mrb[0].mxu0
        %1469 = vmatprep.mubr.bf16.mxu0 0
        %1470 = vmatmul.mubr.bf16.gmra.mrb[0].mxu0 %v963
        %v1471 = vpop.f32.mrb[0].mxu0
        %v1472 = vadd.f32 0.0, %v1471
        %v1473 = vpop.f32.mrb[0].mxu0
        %v1474 = vpop.f32.mrb[0].mxu0
        %v1475 = vadd.f32 0.0, %v1474
        %v1476 = vpop.f32.mrb[0].mxu0
        %1477 = vmatprep.mubr.bf16.mxu0 0
        %1478 = vmatmul.mubr.bf16.gmra.mrb[0].mxu0 %v964
        %v1479 = vpop.f32.mrb[0].mxu0
        %v1480 = vadd.f32 0.0, %v1479
        %v1481 = vpop.f32.mrb[0].mxu0
        %v1482 = vpop.f32.mrb[0].mxu0
        %v1483 = vadd.f32 0.0, %v1482
        %v1484 = vpop.f32.mrb[0].mxu0
        %1485 = vmatprep.mubr.bf16.mxu0 0
        %1486 = vmatmul.mubr.bf16.gmra.mrb[0].mxu0 %v965
        %v1487 = vpop.f32.mrb[0].mxu0
        %v1488 = vadd.f32 0.0, %v1487
        %v1489 = vpop.f32.mrb[0].mxu0
        %v1490 = vpop.f32.mrb[0].mxu0
        %v1491 = vadd.f32 0.0, %v1490
        %v1492 = vpop.f32.mrb[0].mxu0
        %1493 = vmatprep.mubr.bf16.mxu0 0
        %1494 = vmatmul.mubr.bf16.gmra.mrb[0].mxu0 %v966
        %v1495 = vpop.f32.mrb[0].mxu0
        %v1496 = vadd.f32 0.0, %v1495
        %v1497 = vpop.f32.mrb[0].mxu0
        %v1498 = vpop.f32.mrb[0].mxu0
        %v1499 = vadd.f32 0.0, %v1498
        %v1500 = vpop.f32.mrb[0].mxu0
        %1501 = vmatprep.mubr.bf16.mxu0 0
        %1502 = vmatmul.mubr.bf16.gmra.mrb[0].mxu0 %v967
        %v1503 = vpop.f32.mrb[0].mxu0
        %v1504 = vadd.f32 0.0, %v1503
        %v1505 = vpop.f32.mrb[0].mxu0
        %v1506 = vpop.f32.mrb[0].mxu0
        %v1507 = vadd.f32 0.0, %v1506
        %v1508 = vpop.f32.mrb[0].mxu0
        %1509 = vmatprep.mubr.bf16.mxu0 0
        %1510 = vmatmul.mubr.bf16.gmra.mrb[0].mxu0 %v968
        %v1511 = vpop.f32.mrb[0].mxu0
        %v1512 = vadd.f32 0.0, %v1511
        %v1513 = vpop.f32.mrb[0].mxu0
        %v1514 = vpop.f32.mrb[0].mxu0
        %v1515 = vadd.f32 0.0, %v1514
        %v1516 = vpop.f32.mrb[0].mxu0
        %1517 = vdwg.mxu0
        %vm1518 = vcmask 64512
        %v1519 = vsel %vm1518, %v1104, -inf
        %v1520 = vsel %vm1518, %v1208, -inf
        %v1521 = vmax.f32 %v1519, %v1520
        %v1522 = vsel %vm1518, %v1312, -inf
        %v1523 = vmax.f32 %v1521, %v1522
        %v1524 = vsel %vm1518, %v1416, -inf
        %v1525 = vmax.f32 %v1523, %v1524
        %v1526 = vsel %vm1518, %v1107, -inf
        %v1527 = vsel %vm1518, %v1211, -inf
        %v1528 = vmax.f32 %v1526, %v1527
        %v1529 = vsel %vm1518, %v1315, -inf
        %v1530 = vmax.f32 %v1528, %v1529
        %v1531 = vsel %vm1518, %v1419, -inf
        %v1532 = vmax.f32 %v1530, %v1531
        %v1533 = vsel %vm1518, %v1112, -inf
        %v1534 = vsel %vm1518, %v1216, -inf
        %v1535 = vmax.f32 %v1533, %v1534
        %v1536 = vsel %vm1518, %v1320, -inf
        %v1537 = vmax.f32 %v1535, %v1536
        %v1538 = vsel %vm1518, %v1424, -inf
        %v1539 = vmax.f32 %v1537, %v1538
        %v1540 = vsel %vm1518, %v1115, -inf
        %v1541 = vsel %vm1518, %v1219, -inf
        %v1542 = vmax.f32 %v1540, %v1541
        %v1543 = vsel %vm1518, %v1323, -inf
        %v1544 = vmax.f32 %v1542, %v1543
        %v1545 = vsel %vm1518, %v1427, -inf
        %v1546 = vmax.f32 %v1544, %v1545
        %v1547 = vsel %vm1518, %v1120, -inf
        %v1548 = vsel %vm1518, %v1224, -inf
        %v1549 = vmax.f32 %v1547, %v1548
        %v1550 = vsel %vm1518, %v1328, -inf
        %v1551 = vmax.f32 %v1549, %v1550
        %v1552 = vsel %vm1518, %v1432, -inf
        %v1553 = vmax.f32 %v1551, %v1552
        %v1554 = vsel %vm1518, %v1123, -inf
        %v1555 = vsel %vm1518, %v1227, -inf
        %v1556 = vmax.f32 %v1554, %v1555
        %v1557 = vsel %vm1518, %v1331, -inf
        %v1558 = vmax.f32 %v1556, %v1557
        %v1559 = vsel %vm1518, %v1435, -inf
        %v1560 = vmax.f32 %v1558, %v1559
        %v1561 = vsel %vm1518, %v1128, -inf
        %v1562 = vsel %vm1518, %v1232, -inf
        %v1563 = vmax.f32 %v1561, %v1562
        %v1564 = vsel %vm1518, %v1336, -inf
        %v1565 = vmax.f32 %v1563, %v1564
        %v1566 = vsel %vm1518, %v1440, -inf
        %v1567 = vmax.f32 %v1565, %v1566
        %v1568 = vsel %vm1518, %v1131, -inf
        %v1569 = vsel %vm1518, %v1235, -inf
        %v1570 = vmax.f32 %v1568, %v1569
        %v1571 = vsel %vm1518, %v1339, -inf
        %v1572 = vmax.f32 %v1570, %v1571
        %v1573 = vsel %vm1518, %v1443, -inf
        %v1574 = vmax.f32 %v1572, %v1573
        %v1575 = vsel %vm1518, %v1136, -inf
        %v1576 = vsel %vm1518, %v1240, -inf
        %v1577 = vmax.f32 %v1575, %v1576
        %v1578 = vsel %vm1518, %v1344, -inf
        %v1579 = vmax.f32 %v1577, %v1578
        %v1580 = vsel %vm1518, %v1448, -inf
        %v1581 = vmax.f32 %v1579, %v1580
        %v1582 = vsel %vm1518, %v1139, -inf
        %v1583 = vsel %vm1518, %v1243, -inf
        %v1584 = vmax.f32 %v1582, %v1583
        %v1585 = vsel %vm1518, %v1347, -inf
        %v1586 = vmax.f32 %v1584, %v1585
        %v1587 = vsel %vm1518, %v1451, -inf
        %v1588 = vmax.f32 %v1586, %v1587
        %v1589 = vsel %vm1518, %v1144, -inf
        %v1590 = vsel %vm1518, %v1248, -inf
        %v1591 = vmax.f32 %v1589, %v1590
        %v1592 = vsel %vm1518, %v1352, -inf
        %v1593 = vmax.f32 %v1591, %v1592
        %v1594 = vsel %vm1518, %v1456, -inf
        %v1595 = vmax.f32 %v1593, %v1594
        %v1596 = vsel %vm1518, %v1147, -inf
        %v1597 = vsel %vm1518, %v1251, -inf
        %v1598 = vmax.f32 %v1596, %v1597
        %v1599 = vsel %vm1518, %v1355, -inf
        %v1600 = vmax.f32 %v1598, %v1599
        %v1601 = vsel %vm1518, %v1459, -inf
        %v1602 = vmax.f32 %v1600, %v1601
        %v1603 = vsel %vm1518, %v1152, -inf
        %v1604 = vsel %vm1518, %v1256, -inf
        %v1605 = vmax.f32 %v1603, %v1604
        %v1606 = vsel %vm1518, %v1360, -inf
        %v1607 = vmax.f32 %v1605, %v1606
        %v1608 = vsel %vm1518, %v1464, -inf
        %v1609 = vmax.f32 %v1607, %v1608
        %v1610 = vsel %vm1518, %v1155, -inf
        %v1611 = vsel %vm1518, %v1259, -inf
        %v1612 = vmax.f32 %v1610, %v1611
        %v1613 = vsel %vm1518, %v1363, -inf
        %v1614 = vmax.f32 %v1612, %v1613
        %v1615 = vsel %vm1518, %v1467, -inf
        %v1616 = vmax.f32 %v1614, %v1615
        %v1617 = vsel %vm1518, %v1160, -inf
        %v1618 = vsel %vm1518, %v1264, -inf
        %v1619 = vmax.f32 %v1617, %v1618
        %v1620 = vsel %vm1518, %v1368, -inf
        %v1621 = vmax.f32 %v1619, %v1620
        %v1622 = vsel %vm1518, %v1472, -inf
        %v1623 = vmax.f32 %v1621, %v1622
        %v1624 = vsel %vm1518, %v1163, -inf
        %v1625 = vsel %vm1518, %v1267, -inf
        %v1626 = vmax.f32 %v1624, %v1625
        %v1627 = vsel %vm1518, %v1371, -inf
        %v1628 = vmax.f32 %v1626, %v1627
        %v1629 = vsel %vm1518, %v1475, -inf
        %v1630 = vmax.f32 %v1628, %v1629
        %v1631 = vsel %vm1518, %v1168, -inf
        %v1632 = vsel %vm1518, %v1272, -inf
        %v1633 = vmax.f32 %v1631, %v1632
        %v1634 = vsel %vm1518, %v1376, -inf
        %v1635 = vmax.f32 %v1633, %v1634
        %v1636 = vsel %vm1518, %v1480, -inf
        %v1637 = vmax.f32 %v1635, %v1636
        %v1638 = vsel %vm1518, %v1171, -inf
        %v1639 = vsel %vm1518, %v1275, -inf
        %v1640 = vmax.f32 %v1638, %v1639
        %v1641 = vsel %vm1518, %v1379, -inf
        %v1642 = vmax.f32 %v1640, %v1641
        %v1643 = vsel %vm1518, %v1483, -inf
        %v1644 = vmax.f32 %v1642, %v1643
        %v1645 = vsel %vm1518, %v1176, -inf
        %v1646 = vsel %vm1518, %v1280, -inf
        %v1647 = vmax.f32 %v1645, %v1646
        %v1648 = vsel %vm1518, %v1384, -inf
        %v1649 = vmax.f32 %v1647, %v1648
        %v1650 = vsel %vm1518, %v1488, -inf
        %v1651 = vmax.f32 %v1649, %v1650
        %v1652 = vsel %vm1518, %v1179, -inf
        %v1653 = vsel %vm1518, %v1283, -inf
        %v1654 = vmax.f32 %v1652, %v1653
        %v1655 = vsel %vm1518, %v1387, -inf
        %v1656 = vmax.f32 %v1654, %v1655
        %v1657 = vsel %vm1518, %v1491, -inf
        %v1658 = vmax.f32 %v1656, %v1657
        %v1659 = vsel %vm1518, %v1184, -inf
        %v1660 = vsel %vm1518, %v1288, -inf
        %v1661 = vmax.f32 %v1659, %v1660
        %v1662 = vsel %vm1518, %v1392, -inf
        %v1663 = vmax.f32 %v1661, %v1662
        %v1664 = vsel %vm1518, %v1496, -inf
        %v1665 = vmax.f32 %v1663, %v1664
        %v1666 = vsel %vm1518, %v1187, -inf
        %v1667 = vsel %vm1518, %v1291, -inf
        %v1668 = vmax.f32 %v1666, %v1667
        %v1669 = vsel %vm1518, %v1395, -inf
        %v1670 = vmax.f32 %v1668, %v1669
        %v1671 = vsel %vm1518, %v1499, -inf
        %v1672 = vmax.f32 %v1670, %v1671
        %v1673 = vsel %vm1518, %v1192, -inf
        %v1674 = vsel %vm1518, %v1296, -inf
        %v1675 = vmax.f32 %v1673, %v1674
        %v1676 = vsel %vm1518, %v1400, -inf
        %v1677 = vmax.f32 %v1675, %v1676
        %v1678 = vsel %vm1518, %v1504, -inf
        %v1679 = vmax.f32 %v1677, %v1678
        %v1680 = vsel %vm1518, %v1195, -inf
        %v1681 = vsel %vm1518, %v1299, -inf
        %v1682 = vmax.f32 %v1680, %v1681
        %v1683 = vsel %vm1518, %v1403, -inf
        %v1684 = vmax.f32 %v1682, %v1683
        %v1685 = vsel %vm1518, %v1507, -inf
        %v1686 = vmax.f32 %v1684, %v1685
        %v1687 = vsel %vm1518, %v1200, -inf
        %v1688 = vsel %vm1518, %v1304, -inf
        %v1689 = vmax.f32 %v1687, %v1688
        %v1690 = vsel %vm1518, %v1408, -inf
        %v1691 = vmax.f32 %v1689, %v1690
        %v1692 = vsel %vm1518, %v1512, -inf
        %v1693 = vmax.f32 %v1691, %v1692
        %v1694 = vsel %vm1518, %v1203, -inf
        %v1695 = vsel %vm1518, %v1307, -inf
        %v1696 = vmax.f32 %v1694, %v1695
        %v1697 = vsel %vm1518, %v1411, -inf
        %v1698 = vmax.f32 %v1696, %v1697
        %v1699 = vsel %vm1518, %v1515, -inf
        %v1700 = vmax.f32 %v1698, %v1699
        %v1701 = vld [vmem:[%s2] sm:$0x1]
        %v1703 = vlaneseq
        %v1704 = vshrl.u32 %v1703, 7
        %v1705 = vsub.s32 0, %v1704
        %v1706 = vrot.slane %v1701, %v1705
        %v1708 = vadd.f32 %v1525, %v1706
        %v1709 = vadd.f32 %v1532, %v1706
        %v1710 = vadd.f32 %v1539, %v1706
        %v1711 = vadd.f32 %v1546, %v1706
        %v1712 = vadd.f32 %v1553, %v1706
        %v1713 = vadd.f32 %v1560, %v1706
        %v1714 = vadd.f32 %v1567, %v1706
        %v1715 = vadd.f32 %v1574, %v1706
        %v1716 = vadd.f32 %v1581, %v1706
        %v1717 = vadd.f32 %v1588, %v1706
        %v1718 = vadd.f32 %v1595, %v1706
        %v1719 = vadd.f32 %v1602, %v1706
        %v1720 = vadd.f32 %v1609, %v1706
        %v1721 = vadd.f32 %v1616, %v1706
        %v1722 = vadd.f32 %v1623, %v1706
        %v1723 = vadd.f32 %v1630, %v1706
        %v1724 = vadd.f32 %v1637, %v1706
        %v1725 = vadd.f32 %v1644, %v1706
        %v1726 = vadd.f32 %v1651, %v1706
        %v1727 = vadd.f32 %v1658, %v1706
        %v1728 = vadd.f32 %v1665, %v1706
        %v1729 = vadd.f32 %v1672, %v1706
        %v1730 = vadd.f32 %v1679, %v1706
        %v1731 = vadd.f32 %v1686, %v1706
        %v1732 = vadd.f32 %v1693, %v1706
        %v1733 = vadd.f32 %v1700, %v1706
        %v1734 = vmax.f32 %v1708, 0.0
        %v1735 = vmax.f32 %v1709, 0.0
        %v1736 = vmax.f32 %v1710, 0.0
        %v1737 = vmax.f32 %v1711, 0.0
        %v1738 = vmax.f32 %v1712, 0.0
        %v1739 = vmax.f32 %v1713, 0.0
        %v1740 = vmax.f32 %v1714, 0.0
        %v1741 = vmax.f32 %v1715, 0.0
        %v1742 = vmax.f32 %v1716, 0.0
        %v1743 = vmax.f32 %v1717, 0.0
        %v1744 = vmax.f32 %v1718, 0.0
        %v1745 = vmax.f32 %v1719, 0.0
        %v1746 = vmax.f32 %v1720, 0.0
        %v1747 = vmax.f32 %v1721, 0.0
        %v1748 = vmax.f32 %v1722, 0.0
        %v1749 = vmax.f32 %v1723, 0.0
        %v1750 = vmax.f32 %v1724, 0.0
        %v1751 = vmax.f32 %v1725, 0.0
        %v1752 = vmax.f32 %v1726, 0.0
        %v1753 = vmax.f32 %v1727, 0.0
        %v1754 = vmax.f32 %v1728, 0.0
        %v1755 = vmax.f32 %v1729, 0.0
        %v1756 = vmax.f32 %v1730, 0.0
        %v1757 = vmax.f32 %v1731, 0.0
        %v1758 = vmax.f32 %v1732, 0.0
        %v1759 = vmax.f32 %v1733, 0.0
        %v1760 = vpack.c.bf16 %v1735, %v1734
        %v1761 = vpack.c.bf16 %v1737, %v1736
        %v1762 = vpack.c.bf16 %v1739, %v1738
        %v1763 = vpack.c.bf16 %v1741, %v1740
        %v1764 = vpack.c.bf16 %v1743, %v1742
        %v1765 = vpack.c.bf16 %v1745, %v1744
        %v1766 = vpack.c.bf16 %v1747, %v1746
        %v1767 = vpack.c.bf16 %v1749, %v1748
        %v1768 = vpack.c.bf16 %v1751, %v1750
        %v1769 = vpack.c.bf16 %v1753, %v1752
        %v1770 = vpack.c.bf16 %v1755, %v1754
        %v1771 = vpack.c.bf16 %v1757, %v1756
        %v1772 = vpack.c.bf16 %v1759, %v1758
        %v1786 = vunpack.c.l.b16 %v1760
        %v1787 = vunpack.c.h.b16 %v1760
        %v1788 = vunpack.c.l.b16 %v1761
        %v1789 = vunpack.c.h.b16 %v1761
        %v1790 = vunpack.c.l.b16 %v1762
        %v1791 = vunpack.c.h.b16 %v1762
        %v1792 = vunpack.c.l.b16 %v1763
        %v1793 = vunpack.c.h.b16 %v1763
        %v1794 = vunpack.c.l.b16 %v1764
        %v1795 = vunpack.c.h.b16 %v1764
        %v1796 = vunpack.c.l.b16 %v1765
        %v1797 = vunpack.c.h.b16 %v1765
        %v1798 = vunpack.c.l.b16 %v1766
        %v1799 = vunpack.c.h.b16 %v1766
        %v1800 = vunpack.c.l.b16 %v1767
        %v1801 = vunpack.c.h.b16 %v1767
        %v1802 = vunpack.c.l.b16 %v1768
        %v1803 = vunpack.c.h.b16 %v1768
        %v1804 = vunpack.c.l.b16 %v1769
        %v1805 = vunpack.c.h.b16 %v1769
        %v1806 = vunpack.c.l.b16 %v1770
        %v1807 = vunpack.c.h.b16 %v1770
        %v1808 = vunpack.c.l.b16 %v1771
        %v1809 = vunpack.c.h.b16 %v1771
        %v1810 = vunpack.c.l.b16 %v1772
        %v1811 = vunpack.c.h.b16 %v1772
        %v1812 = vpack.c.b16 %v1786, %v1786
        %v1813 = vpack.c.b16 %v1787, %v1787
        %v1814 = vpack.c.b16 %v1788, %v1788
        %v1815 = vpack.c.b16 %v1789, %v1789
        %v1816 = vpack.c.b16 %v1790, %v1790
        %v1817 = vpack.c.b16 %v1791, %v1791
        %v1818 = vpack.c.b16 %v1792, %v1792
        %v1819 = vpack.c.b16 %v1793, %v1793
        %v1820 = vpack.c.b16 %v1794, %v1794
        %v1821 = vpack.c.b16 %v1795, %v1795
        %v1822 = vpack.c.b16 %v1796, %v1796
        %v1823 = vpack.c.b16 %v1797, %v1797
        %v1824 = vpack.c.b16 %v1798, %v1798
        %v1825 = vpack.c.b16 %v1799, %v1799
        %v1826 = vpack.c.b16 %v1800, %v1800
        %v1827 = vpack.c.b16 %v1801, %v1801
        %v1828 = vpack.c.b16 %v1802, %v1802
        %v1829 = vpack.c.b16 %v1803, %v1803
        %v1830 = vpack.c.b16 %v1804, %v1804
        %v1831 = vpack.c.b16 %v1805, %v1805
        %v1832 = vpack.c.b16 %v1806, %v1806
        %v1833 = vpack.c.b16 %v1807, %v1807
        %v1834 = vpack.c.b16 %v1808, %v1808
        %v1835 = vpack.c.b16 %v1809, %v1809
        %v1836 = vpack.c.b16 %v1810, %v1810
        %v1837 = vpack.c.b16 %v1811, %v1811
        %vm1864 = vcmask 60416
        %1865 = vst.msk [vmem:[%s577] sm:$0xf] %vm1864, %v1812
        %1866 = vst.msk [vmem:[%s577 + $0x4] sm:$0xf] %vm1864, %v1813
        %1867 = vst.msk [vmem:[%s577 + $0x8] sm:$0xf] %vm1864, %v1814
        %1868 = vst.msk [vmem:[%s577 + $0xc] sm:$0xf] %vm1864, %v1815
        %1869 = vst.msk [vmem:[%s577 + $0x10] sm:$0xf] %vm1864, %v1816
        %1870 = vst.msk [vmem:[%s577 + $0x14] sm:$0xf] %vm1864, %v1817
        %1871 = vst.msk [vmem:[%s577 + $0x18] sm:$0xf] %vm1864, %v1818
        %1872 = vst.msk [vmem:[%s577 + $0x1c] sm:$0xf] %vm1864, %v1819
        %1873 = vst.msk [vmem:[%s577 + $0x20] sm:$0xf] %vm1864, %v1820
        %1874 = vst.msk [vmem:[%s577 + $0x24] sm:$0xf] %vm1864, %v1821
        %1875 = vst.msk [vmem:[%s577 + $0x28] sm:$0xf] %vm1864, %v1822
        %1876 = vst.msk [vmem:[%s577 + $0x2c] sm:$0xf] %vm1864, %v1823
        %1877 = vst.msk [vmem:[%s577 + $0x30] sm:$0xf] %vm1864, %v1824
        %1878 = vst.msk [vmem:[%s577 + $0x34] sm:$0xf] %vm1864, %v1825
        %1879 = vst.msk [vmem:[%s577 + $0x38] sm:$0xf] %vm1864, %v1826
        %1880 = vst.msk [vmem:[%s577 + $0x3c] sm:$0xf] %vm1864, %v1827
        %1881 = vst.msk [vmem:[%s577 + $0x40] sm:$0xf] %vm1864, %v1828
        %1882 = vst.msk [vmem:[%s577 + $0x44] sm:$0xf] %vm1864, %v1829
        %1883 = vst.msk [vmem:[%s577 + $0x48] sm:$0xf] %vm1864, %v1830
        %1884 = vst.msk [vmem:[%s577 + $0x4c] sm:$0xf] %vm1864, %v1831
        %1885 = vst.msk [vmem:[%s577 + $0x50] sm:$0xf] %vm1864, %v1832
        %1886 = vst.msk [vmem:[%s577 + $0x54] sm:$0xf] %vm1864, %v1833
        %1887 = vst.msk [vmem:[%s577 + $0x58] sm:$0xf] %vm1864, %v1834
        %1888 = vst.msk [vmem:[%s577 + $0x5c] sm:$0xf] %vm1864, %v1835
        %1889 = vst.msk [vmem:[%s577 + $0x60] sm:$0xf] %vm1864, %v1836
        %1890 = vst.msk [vmem:[%s577 + $0x64] sm:$0xf] %vm1864, %v1837
        %s1891 = sand.u32 %s90, 1
        %s1892 = sand.u32 %s90, 1
        %s1893 = smul.addr %s1892, 104
        %s1894 = scalar_lea.vmem [#allocation3], %s1893
        // Predicated region
        $region95: #{forward.3} parent=89 // pred_check
          %p1895 = pneg %p100
        $region96: #{forward.3} parent=89 // pred_check_branch
          %1897 = sbr.rel (%p1895) target = $region98
        $region97: #{forward.3} parent=89 // pred_region
          %s1898 = smul.u32 26, %s14
          %s1899 = ssub.s32 49, %s1898
          %p1900 = scmp.lt.s32.totalorder %s1899, 26
          %s1901 = scalar_select %p1900, %s1899, 26
          %s1902 = smul.u32 64, %s1901
          %p1903 = scmp.ne.s32.totalorder 0, %s1902
          %s1904 = smul.addr %s1898, 4
          %s1905 = scalar_lea.vmem %s3, %s1904
          // Predicated region
          $region99: #{forward.3} parent=97 // pred_check
            %p1906 = pneg %p1903
          $region100: #{forward.3} parent=97 // pred_check_branch
            %1908 = sbr.rel (%p1906) target = $region102
          $region101: #{forward.3} parent=97 // pred_region
            // Predicated region
            $region103: #{forward.3} parent=101 // pred_check
              _
            $region104: #{forward.3} parent=101 // pred_check_branch
              %1910 = sbr.rel target = $region106
            $region105: #{forward.3} parent=101 // pred_region
              // Predicated region
              $region125: #{forward.3} parent=105 // pred_check
                _
              $region126: #{forward.3} parent=105 // pred_check_branch
                %2010 = sbr.rel (0) target = $region128
              $region127: #{forward.3} parent=105 // pred_region
                %s2012 = sdiv.u32.pop %s1901, 26
                %s2013 = srem.u32.pop %s1901, 26
                // While loop
                $region129: #{forward.3} parent=127 // loop_pre_header
                  _
                $region130: #{forward.3} parent=127 // loop_header
                  %s2015 = sphi 0, %s2017
                  %p2016 = scmp.ge.s32.totalorder %s2015, %s2012
                  %s2020 = sphi 0, %s2077
                  %s2021 = sphi %s1894, %s2080
                  %s2022 = sphi %s1905, %s2081
                $region131: #{forward.3} parent=127 // loop_header_branch
                  %2019 = sbr.rel (%p2016) target = $region135
                $region132: #{forward.3} parent=127 // loop_body
                  %v2023 = vld [vmem:[%s2021] sm:$0xf]
                  %2024 = vst [vmem:[%s2022] sm:$0xf] %v2023
                  %v2025 = vld [vmem:[%s2021 + $0x4] sm:$0xf]
                  %2026 = vst [vmem:[%s2022 + $0x4] sm:$0xf] %v2025
                  %v2027 = vld [vmem:[%s2021 + $0x8] sm:$0xf]
                  %2028 = vst [vmem:[%s2022 + $0x8] sm:$0xf] %v2027
                  %v2029 = vld [vmem:[%s2021 + $0xc] sm:$0xf]
                  %2030 = vst [vmem:[%s2022 + $0xc] sm:$0xf] %v2029
                  %v2031 = vld [vmem:[%s2021 + $0x10] sm:$0xf]
                  %2032 = vst [vmem:[%s2022 + $0x10] sm:$0xf] %v2031
                  %v2033 = vld [vmem:[%s2021 + $0x14] sm:$0xf]
                  %2034 = vst [vmem:[%s2022 + $0x14] sm:$0xf] %v2033
                  %v2035 = vld [vmem:[%s2021 + $0x18] sm:$0xf]
                  %2036 = vst [vmem:[%s2022 + $0x18] sm:$0xf] %v2035
                  %v2037 = vld [vmem:[%s2021 + $0x1c] sm:$0xf]
                  %2038 = vst [vmem:[%s2022 + $0x1c] sm:$0xf] %v2037
                  %v2039 = vld [vmem:[%s2021 + $0x20] sm:$0xf]
                  %2040 = vst [vmem:[%s2022 + $0x20] sm:$0xf] %v2039
                  %v2041 = vld [vmem:[%s2021 + $0x24] sm:$0xf]
                  %2042 = vst [vmem:[%s2022 + $0x24] sm:$0xf] %v2041
                  %v2043 = vld [vmem:[%s2021 + $0x28] sm:$0xf]
                  %2044 = vst [vmem:[%s2022 + $0x28] sm:$0xf] %v2043
                  %v2045 = vld [vmem:[%s2021 + $0x2c] sm:$0xf]
                  %2046 = vst [vmem:[%s2022 + $0x2c] sm:$0xf] %v2045
                  %v2047 = vld [vmem:[%s2021 + $0x30] sm:$0xf]
                  %2048 = vst [vmem:[%s2022 + $0x30] sm:$0xf] %v2047
                  %v2049 = vld [vmem:[%s2021 + $0x34] sm:$0xf]
                  %2050 = vst [vmem:[%s2022 + $0x34] sm:$0xf] %v2049
                  %v2051 = vld [vmem:[%s2021 + $0x38] sm:$0xf]
                  %2052 = vst [vmem:[%s2022 + $0x38] sm:$0xf] %v2051
                  %v2053 = vld [vmem:[%s2021 + $0x3c] sm:$0xf]
                  %2054 = vst [vmem:[%s2022 + $0x3c] sm:$0xf] %v2053
                  %v2055 = vld [vmem:[%s2021 + $0x40] sm:$0xf]
                  %2056 = vst [vmem:[%s2022 + $0x40] sm:$0xf] %v2055
                  %v2057 = vld [vmem:[%s2021 + $0x44] sm:$0xf]
                  %2058 = vst [vmem:[%s2022 + $0x44] sm:$0xf] %v2057
                  %v2059 = vld [vmem:[%s2021 + $0x48] sm:$0xf]
                  %2060 = vst [vmem:[%s2022 + $0x48] sm:$0xf] %v2059
                  %v2061 = vld [vmem:[%s2021 + $0x4c] sm:$0xf]
                  %2062 = vst [vmem:[%s2022 + $0x4c] sm:$0xf] %v2061
                  %v2063 = vld [vmem:[%s2021 + $0x50] sm:$0xf]
                  %2064 = vst [vmem:[%s2022 + $0x50] sm:$0xf] %v2063
                  %v2065 = vld [vmem:[%s2021 + $0x54] sm:$0xf]
                  %2066 = vst [vmem:[%s2022 + $0x54] sm:$0xf] %v2065
                  %v2067 = vld [vmem:[%s2021 + $0x58] sm:$0xf]
                  %2068 = vst [vmem:[%s2022 + $0x58] sm:$0xf] %v2067
                  %v2069 = vld [vmem:[%s2021 + $0x5c] sm:$0xf]
                  %2070 = vst [vmem:[%s2022 + $0x5c] sm:$0xf] %v2069
                  %v2071 = vld [vmem:[%s2021 + $0x60] sm:$0xf]
                  %2072 = vst [vmem:[%s2022 + $0x60] sm:$0xf] %v2071
                  %v2073 = vld [vmem:[%s2021 + $0x64] sm:$0xf]
                  %2074 = vst [vmem:[%s2022 + $0x64] sm:$0xf] %v2073
                  %s2075 = sadd.s32 1, %s2020
                  %p2076 = scmp.ge.s32.totalorder %s2075, %s2012
                  %s2077 = scalar_select %p2076, 0, %s2075
                  %s2078 = smul.u32 %s2077, 104
                  %s2079 = smul.u32 %s2077, 104
                  %s2080 = scalar_lea.vmem %s1894, %s2078 [#allocation3]
                  %s2081 = scalar_lea.vmem %s1905, %s2079
                $region133: #{forward.3} parent=127 // loop_footer
                  %s2017 = sadd.s32 %s2015, 1
                $region134: #{forward.3} parent=127 // loop_footer_branch
                  %2014 = sbr.rel target = $region130
                $region135: #{forward.3} parent=127 // loop_exit
                  _
                %s2082 = sdiv.u32.pop %s1901, 26
                %s2083 = srem.u32.pop %s1901, 26
                %s2084 = smul.u32 %s2082, 26
                %s2085 = smul.u32 4, %s2084
                %s2086 = scalar_lea.vmem %s1894, %s2085 [#allocation3]
                %s2087 = smul.u32 4, %s2084
                %s2088 = scalar_lea.vmem %s1905, %s2087
                // While loop
                $region136: #{forward.3} parent=127 // loop_pre_header
                  _
                $region137: #{forward.3} parent=127 // loop_header
                  %s2090 = sphi 0, %s2092
                  %p2091 = scmp.ge.s32.totalorder %s2090, %s2083
                  %s2095 = sphi 0, %s2102
                  %s2096 = sphi %s2086, %s2105
                  %s2097 = sphi %s2088, %s2106
                $region138: #{forward.3} parent=127 // loop_header_branch
                  %2094 = sbr.rel (%p2091) target = $region142
                $region139: #{forward.3} parent=127 // loop_body
                  %v2098 = vld [vmem:[%s2096] sm:$0xf]
                  %2099 = vst [vmem:[%s2097] sm:$0xf] %v2098
                  %s2100 = sadd.s32 1, %s2095
                  %p2101 = scmp.ge.s32.totalorder %s2100, %s2083
                  %s2102 = scalar_select %p2101, 0, %s2100
                  %s2103 = smul.u32 %s2102, 4
                  %s2104 = smul.u32 %s2102, 4
                  %s2105 = scalar_lea.vmem %s2086, %s2103 [#allocation3]
                  %s2106 = scalar_lea.vmem %s2088, %s2104
                $region140: #{forward.3} parent=127 // loop_footer
                  %s2092 = sadd.s32 %s2090, 1
                $region141: #{forward.3} parent=127 // loop_footer_branch
                  %2089 = sbr.rel target = $region137
                $region142: #{forward.3} parent=127 // loop_exit
                  _
              $region128: #{forward.3} parent=105 // pred_fallthru
                _
            $region106: #{forward.3} parent=101 // pred_fallthru
              _
            // Predicated region
            $region107: #{forward.3} parent=101 // pred_check
              _
            $region108: #{forward.3} parent=101 // pred_check_branch
              %1912 = sbr.rel (0) target = $region110
            $region109: #{forward.3} parent=101 // pred_region
              %s1914 = sdiv.u32.pop %s1901, 26
              %s1915 = srem.u32.pop %s1901, 26
              // While loop
              $region111: #{forward.3} parent=109 // loop_pre_header
                _
              $region112: #{forward.3} parent=109 // loop_header
                %s1917 = sphi 0, %s1919
                %p1918 = scmp.ge.s32.totalorder %s1917, %s1914
                %s1922 = sphi 0, %s1979
                %s1923 = sphi %s1894, %s1982
                %s1924 = sphi %s1905, %s1983
              $region113: #{forward.3} parent=109 // loop_header_branch
                %1921 = sbr.rel (%p1918) target = $region117
              $region114: #{forward.3} parent=109 // loop_body
                %v1925 = vld [vmem:[%s1923] sm:$0xf]
                %1926 = vst [vmem:[%s1924] sm:$0xf] %v1925
                %v1927 = vld [vmem:[%s1923 + $0x4] sm:$0xf]
                %1928 = vst [vmem:[%s1924 + $0x4] sm:$0xf] %v1927
                %v1929 = vld [vmem:[%s1923 + $0x8] sm:$0xf]
                %1930 = vst [vmem:[%s1924 + $0x8] sm:$0xf] %v1929
                %v1931 = vld [vmem:[%s1923 + $0xc] sm:$0xf]
                %1932 = vst [vmem:[%s1924 + $0xc] sm:$0xf] %v1931
                %v1933 = vld [vmem:[%s1923 + $0x10] sm:$0xf]
                %1934 = vst [vmem:[%s1924 + $0x10] sm:$0xf] %v1933
                %v1935 = vld [vmem:[%s1923 + $0x14] sm:$0xf]
                %1936 = vst [vmem:[%s1924 + $0x14] sm:$0xf] %v1935
                %v1937 = vld [vmem:[%s1923 + $0x18] sm:$0xf]
                %1938 = vst [vmem:[%s1924 + $0x18] sm:$0xf] %v1937
                %v1939 = vld [vmem:[%s1923 + $0x1c] sm:$0xf]
                %1940 = vst [vmem:[%s1924 + $0x1c] sm:$0xf] %v1939
                %v1941 = vld [vmem:[%s1923 + $0x20] sm:$0xf]
                %1942 = vst [vmem:[%s1924 + $0x20] sm:$0xf] %v1941
                %v1943 = vld [vmem:[%s1923 + $0x24] sm:$0xf]
                %1944 = vst [vmem:[%s1924 + $0x24] sm:$0xf] %v1943
                %v1945 = vld [vmem:[%s1923 + $0x28] sm:$0xf]
                %1946 = vst [vmem:[%s1924 + $0x28] sm:$0xf] %v1945
                %v1947 = vld [vmem:[%s1923 + $0x2c] sm:$0xf]
                %1948 = vst [vmem:[%s1924 + $0x2c] sm:$0xf] %v1947
                %v1949 = vld [vmem:[%s1923 + $0x30] sm:$0xf]
                %1950 = vst [vmem:[%s1924 + $0x30] sm:$0xf] %v1949
                %v1951 = vld [vmem:[%s1923 + $0x34] sm:$0xf]
                %1952 = vst [vmem:[%s1924 + $0x34] sm:$0xf] %v1951
                %v1953 = vld [vmem:[%s1923 + $0x38] sm:$0xf]
                %1954 = vst [vmem:[%s1924 + $0x38] sm:$0xf] %v1953
                %v1955 = vld [vmem:[%s1923 + $0x3c] sm:$0xf]
                %1956 = vst [vmem:[%s1924 + $0x3c] sm:$0xf] %v1955
                %v1957 = vld [vmem:[%s1923 + $0x40] sm:$0xf]
                %1958 = vst [vmem:[%s1924 + $0x40] sm:$0xf] %v1957
                %v1959 = vld [vmem:[%s1923 + $0x44] sm:$0xf]
                %1960 = vst [vmem:[%s1924 + $0x44] sm:$0xf] %v1959
                %v1961 = vld [vmem:[%s1923 + $0x48] sm:$0xf]
                %1962 = vst [vmem:[%s1924 + $0x48] sm:$0xf] %v1961
                %v1963 = vld [vmem:[%s1923 + $0x4c] sm:$0xf]
                %1964 = vst [vmem:[%s1924 + $0x4c] sm:$0xf] %v1963
                %v1965 = vld [vmem:[%s1923 + $0x50] sm:$0xf]
                %1966 = vst [vmem:[%s1924 + $0x50] sm:$0xf] %v1965
                %v1967 = vld [vmem:[%s1923 + $0x54] sm:$0xf]
                %1968 = vst [vmem:[%s1924 + $0x54] sm:$0xf] %v1967
                %v1969 = vld [vmem:[%s1923 + $0x58] sm:$0xf]
                %1970 = vst [vmem:[%s1924 + $0x58] sm:$0xf] %v1969
                %v1971 = vld [vmem:[%s1923 + $0x5c] sm:$0xf]
                %1972 = vst [vmem:[%s1924 + $0x5c] sm:$0xf] %v1971
                %v1973 = vld [vmem:[%s1923 + $0x60] sm:$0xf]
                %1974 = vst [vmem:[%s1924 + $0x60] sm:$0xf] %v1973
                %v1975 = vld [vmem:[%s1923 + $0x64] sm:$0xf]
                %1976 = vst [vmem:[%s1924 + $0x64] sm:$0xf] %v1975
                %s1977 = sadd.s32 1, %s1922
                %p1978 = scmp.ge.s32.totalorder %s1977, %s1914
                %s1979 = scalar_select %p1978, 0, %s1977
                %s1980 = smul.u32 %s1979, 104
                %s1981 = smul.u32 %s1979, 104
                %s1982 = scalar_lea.vmem %s1894, %s1980 [#allocation3]
                %s1983 = scalar_lea.vmem %s1905, %s1981
              $region115: #{forward.3} parent=109 // loop_footer
                %s1919 = sadd.s32 %s1917, 1
              $region116: #{forward.3} parent=109 // loop_footer_branch
                %1916 = sbr.rel target = $region112
              $region117: #{forward.3} parent=109 // loop_exit
                _
              %s1984 = sdiv.u32.pop %s1901, 26
              %s1985 = srem.u32.pop %s1901, 26
              %s1986 = smul.u32 %s1984, 26
              %s1987 = smul.u32 4, %s1986
              %s1988 = scalar_lea.vmem %s1894, %s1987 [#allocation3]
              %s1989 = smul.u32 4, %s1986
              %s1990 = scalar_lea.vmem %s1905, %s1989
              // While loop
              $region118: #{forward.3} parent=109 // loop_pre_header
                _
              $region119: #{forward.3} parent=109 // loop_header
                %s1992 = sphi 0, %s1994
                %p1993 = scmp.ge.s32.totalorder %s1992, %s1985
                %s1997 = sphi 0, %s2004
                %s1998 = sphi %s1988, %s2007
                %s1999 = sphi %s1990, %s2008
              $region120: #{forward.3} parent=109 // loop_header_branch
                %1996 = sbr.rel (%p1993) target = $region124
              $region121: #{forward.3} parent=109 // loop_body
                %v2000 = vld [vmem:[%s1998] sm:$0xf]
                %2001 = vst [vmem:[%s1999] sm:$0xf] %v2000
                %s2002 = sadd.s32 1, %s1997
                %p2003 = scmp.ge.s32.totalorder %s2002, %s1985
                %s2004 = scalar_select %p2003, 0, %s2002
                %s2005 = smul.u32 %s2004, 4
                %s2006 = smul.u32 %s2004, 4
                %s2007 = scalar_lea.vmem %s1988, %s2005 [#allocation3]
                %s2008 = scalar_lea.vmem %s1990, %s2006
              $region122: #{forward.3} parent=109 // loop_footer
                %s1994 = sadd.s32 %s1992, 1
              $region123: #{forward.3} parent=109 // loop_footer_branch
                %1991 = sbr.rel target = $region119
              $region124: #{forward.3} parent=109 // loop_exit
                _
            $region110: #{forward.3} parent=101 // pred_fallthru
              _
          $region102: #{forward.3} parent=97 // pred_fallthru
            _
          %2107 = vnop
        $region98: #{forward.3} parent=89 // pred_fallthru
          _
      $region90: #{forward.3} parent=5 // pred_fallthru
        _
      %p2108 = scmp.le.s32.totalorder 2, %s9
      // Predicated region
      $region143: #{forward.3} parent=5 // pred_check
        %p2109 = pneg %p2108
      $region144: #{forward.3} parent=5 // pred_check_branch
        %2111 = sbr.rel (%p2109) target = $region146
      $region145: #{forward.3} parent=5 // pred_region
        %s2112 = ssub.s32 %s9, 2
        // Predicated region
        $region147: #{forward.3} parent=145 // pred_check
          %p2113 = pneg %p106
        $region148: #{forward.3} parent=145 // pred_check_branch
          %2115 = sbr.rel (%p2113) target = $region150
        $region149: #{forward.3} parent=145 // pred_region
          %s2116 = sand.u32 %s91, 1
          %s2117 = sand.u32 %s91, 1
          %s2118 = smul.addr %s2117, 104
          %s2119 = scalar_lea.vmem [#allocation3], %s2118
        $region150: #{forward.3} parent=145 // pred_fallthru
          _
      $region146: #{forward.3} parent=5 // pred_fallthru
        _
    $region6: #{forward.3} parent=1 // loop_footer
      %s13 = sadd.s32 1, %s9
    $region7: #{forward.3} parent=1 // loop_footer_branch
      %8 = sbr.rel target = $region3
    $region8: #{forward.3} parent=1 // loop_exit
      _

// kernel: forward.4
$region0: #{forward.4}
  #allocation0 [shape = 'u32[]', space=smem, size = 0x4, offset = 0x4, fixed_abs, tag = 'smem constant byte address 0x4 - core index']
  #allocation1 [shape = 'u32[144,128]{1,0:T(1,128)}', space=vmem, size = 0x12000, scoped, tag = 'internal scratch']
  %s0 = inlined_call_operand.vmem [shape: bf16[4,50,256], index: 0, kind: input, shape index: {}]
  %s1 = inlined_call_operand.vmem [shape: bf16[256,16], index: 1, kind: input, shape index: {}]
  %s2 = inlined_call_operand.vmem [shape: f32[1,16], index: 2, kind: input, shape index: {}]
  %s3 = inlined_call_operand.vmem [shape: bf16[50,16], index: 3, kind: output, shape index: {}]
  %s4 = sld [smem:[#allocation0]]
  $region141: #{forward.4} parent=0
    _
  %s6 = ssub.s32 1, %s4
  %s7 = scalar_select 0, %s6, %s4
  $region1: #{forward.4} parent=0
    #allocation2 [shape = 'u8[131072]{0}', space=vmem, size = 0x20000, scoped, tag = 'input window, operand 0']
    #allocation3 [shape = 'u8[16384]{0}', space=vmem, size = 0x4000, scoped, tag = 'output window, operand 0']
    loop: start=0, step=1, limit=4
    $region2: #{forward.4} parent=1 // loop_pre_header
      _
    $region3: #{forward.4} parent=1 // loop_header
      %s9 = sphi 0, %s13
      %p10 = scmp.ge.s32.totalorder %s9, 4
      %s19 = sphi 0, %s21
      %s22 = sphi 0, %s19
      %s23 = sphi 0, %s22
      %s39 = sphi 0, %s23
      %s43 = sphi 0, %s43
      %s45 = sphi 0, %s43
      %s46 = sphi 0, %s45
      %s60 = sphi 0, %s46
      %s64 = sphi 0, %s64
      %s66 = sphi 0, %s64
      %s67 = sphi 0, %s66
      %s81 = sphi 0, %s67
      %s87 = sphi 0, %s89
      %s90 = sphi 0, %s87
      %s91 = sphi 0, %s90
      %s107 = sphi 0, %s91
    $region4: #{forward.4} parent=1 // loop_header_branch
      %12 = sbr.rel (%p10) target = $region8
    $region5: #{forward.4} parent=1 // loop_body
      %s14 = ssub.s32 %s9, 1
      %s15 = ssub.s32 %s9, 2
      %s16 = sadd.s32 %s9, 1
      %s17 = ssub.s32 %s9, %s16
      %p18 = scmp.eq.s32.totalorder %s17, 0
      %s20 = sadd.s32 %s19, 1
      %s21 = scalar_select %p18, %s19, %s20
      %p24 = pneg %p18
      %p25 = scmp.eq.s32.totalorder %s9, 1
      %p26 = por %p24, %p25
      %p27 = scmp.ne.s32.totalorder %s19, %s22
      %p28 = scmp.eq.s32.totalorder %s9, 0
      %p29 = por %p27, %p28
      %p30 = scmp.ne.s32.totalorder %s19, %s22
      %p31 = scmp.eq.s32.totalorder %s14, 1
      %p32 = por %p30, %p31
      %p33 = scmp.ne.s32.totalorder %s22, %s23
      %p34 = scmp.eq.s32.totalorder %s14, 0
      %p35 = por %p33, %p34
      %p36 = scmp.ne.s32.totalorder %s22, %s23
      %p37 = scmp.eq.s32.totalorder %s15, 1
      %p38 = por %p36, %p37
      %p40 = scmp.ne.s32.totalorder %s23, %s39
      %p41 = scmp.eq.s32.totalorder %s15, 0
      %p42 = por %p40, %p41
      %s44 = sadd.s32 %s43, 1
      %p47 = scmp.eq.s32.totalorder %s9, 1
      %p48 = scmp.ne.s32.totalorder %s43, %s45
      %p49 = scmp.eq.s32.totalorder %s9, 0
      %p50 = por %p48, %p49
      %p51 = scmp.ne.s32.totalorder %s43, %s45
      %p52 = scmp.eq.s32.totalorder %s14, 1
      %p53 = por %p51, %p52
      %p54 = scmp.ne.s32.totalorder %s45, %s46
      %p55 = scmp.eq.s32.totalorder %s14, 0
      %p56 = por %p54, %p55
      %p57 = scmp.ne.s32.totalorder %s45, %s46
      %p58 = scmp.eq.s32.totalorder %s15, 1
      %p59 = por %p57, %p58
      %p61 = scmp.ne.s32.totalorder %s46, %s60
      %p62 = scmp.eq.s32.totalorder %s15, 0
      %p63 = por %p61, %p62
      %s65 = sadd.s32 %s64, 1
      %p68 = scmp.eq.s32.totalorder %s9, 1
      %p69 = scmp.ne.s32.totalorder %s64, %s66
      %p70 = scmp.eq.s32.totalorder %s9, 0
      %p71 = por %p69, %p70
      %p72 = scmp.ne.s32.totalorder %s64, %s66
      %p73 = scmp.eq.s32.totalorder %s14, 1
      %p74 = por %p72, %p73
      %p75 = scmp.ne.s32.totalorder %s66, %s67
      %p76 = scmp.eq.s32.totalorder %s14, 0
      %p77 = por %p75, %p76
      %p78 = scmp.ne.s32.totalorder %s66, %s67
      %p79 = scmp.eq.s32.totalorder %s15, 1
      %p80 = por %p78, %p79
      %p82 = scmp.ne.s32.totalorder %s67, %s81
      %p83 = scmp.eq.s32.totalorder %s15, 0
      %p84 = por %p82, %p83
      %s85 = ssub.s32 %s9, %s16
      %p86 = scmp.eq.s32.totalorder %s85, 0
      %s88 = sadd.s32 %s87, 1
      %s89 = scalar_select %p86, %s87, %s88
      %p92 = pneg %p86
      %p93 = scmp.eq.s32.totalorder %s9, 1
      %p94 = por %p92, %p93
      %p95 = scmp.ne.s32.totalorder %s87, %s90
      %p96 = scmp.eq.s32.totalorder %s9, 0
      %p97 = por %p95, %p96
      %p98 = scmp.ne.s32.totalorder %s87, %s90
      %p99 = scmp.eq.s32.totalorder %s14, 1
      %p100 = por %p98, %p99
      %p101 = scmp.ne.s32.totalorder %s90, %s91
      %p102 = scmp.eq.s32.totalorder %s14, 0
      %p103 = por %p101, %p102
      %p104 = scmp.ne.s32.totalorder %s90, %s91
      %p105 = scmp.eq.s32.totalorder %s15, 1
      %p106 = por %p104, %p105
      %p108 = scmp.ne.s32.totalorder %s91, %s107
      %p109 = scmp.eq.s32.totalorder %s15, 0
      %p110 = por %p108, %p109
      %p111 = scmp.le.s32.totalorder 1, %s9
      %p112 = scmp.lt.s32.totalorder %s9, 3
      %p113 = pnand %p111, %p112
      %p114 = pneg %p113
      // Predicated region
      $region9: #{forward.4} parent=5 // pred_check
        _
      $region10: #{forward.4} parent=5 // pred_check_branch
        %116 = sbr.rel (%p113) target = $region12
      $region11: #{forward.4} parent=5 // pred_region
        %s117 = ssub.s32 %s9, 1
        // Predicated region
        $region13: #{forward.4} parent=11 // pred_check
          %p118 = pneg %p56
        $region14: #{forward.4} parent=11 // pred_check_branch
          %120 = sbr.rel (%p118) target = $region16
        $region15: #{forward.4} parent=11 // pred_region
          _
        $region16: #{forward.4} parent=11 // pred_fallthru
          _
        // Predicated region
        $region17: #{forward.4} parent=11 // pred_check
          %p121 = pneg %p77
        $region18: #{forward.4} parent=11 // pred_check_branch
          %123 = sbr.rel (%p121) target = $region20
        $region19: #{forward.4} parent=11 // pred_region
          _
        $region20: #{forward.4} parent=11 // pred_fallthru
          _
      $region12: #{forward.4} parent=5 // pred_fallthru
        _
      %p124 = scmp.lt.s32.totalorder %s9, 2
      // Predicated region
      $region21: #{forward.4} parent=5 // pred_check
        %p125 = pneg %p124
      $region22: #{forward.4} parent=5 // pred_check_branch
        %127 = sbr.rel (%p125) target = $region24
      $region23: #{forward.4} parent=5 // pred_region
        // Predicated region
        $region25: #{forward.4} parent=23 // pred_check
          %p128 = pneg %p29
        $region26: #{forward.4} parent=23 // pred_check_branch
          %130 = sbr.rel (%p128) target = $region28
        $region27: #{forward.4} parent=23 // pred_region
          %s131 = sand.u32 %s19, 1
          %s132 = sand.u32 %s19, 1
          %s133 = smul.addr %s132, 128
          %s134 = scalar_lea.vmem [#allocation2], %s133
          %s135 = smul.u32 4, %s9
          %s136 = ssub.s32 7, %s135
          %p137 = scmp.lt.s32.totalorder %s136, 4
          %s138 = scalar_select %p137, %s136, 4
          %s139 = smul.u32 256, %s138
          %s140 = smul.u32 %s139, 2
          %p141 = scmp.ne.s32.totalorder 0, %s140
          %s142 = smul.addr %s135, 2
          %s143 = smul.addr %s142, 4
          %s144 = scalar_lea.vmem %s0, %s143
          // Predicated region
          $region29: #{forward.4} parent=27 // pred_check
            %p145 = pneg %p141
          $region30: #{forward.4} parent=27 // pred_check_branch
            %147 = sbr.rel (%p145) target = $region32
          $region31: #{forward.4} parent=27 // pred_region
            // Predicated region
            $region33: #{forward.4} parent=31 // pred_check
              _
            $region34: #{forward.4} parent=31 // pred_check_branch
              %149 = sbr.rel (0) target = $region36
            $region35: #{forward.4} parent=31 // pred_region
              // Predicated region
              $region55: #{forward.4} parent=35 // pred_check
                _
              $region56: #{forward.4} parent=35 // pred_check_branch
                %234 = sbr.rel (0) target = $region58
              $region57: #{forward.4} parent=35 // pred_region
                %s235 = sshrl.u32 %s138, 2
                // While loop
                $region59: #{forward.4} parent=57 // loop_pre_header
                  _
                $region60: #{forward.4} parent=57 // loop_header
                  %s237 = sphi 0, %s239
                  %p238 = scmp.ge.s32.totalorder %s237, %s235
                  %s242 = sphi 0, %s279
                  %s243 = sphi %s144, %s282
                  %s244 = sphi %s134, %s283
                $region61: #{forward.4} parent=57 // loop_header_branch
                  %241 = sbr.rel (%p238) target = $region65
                $region62: #{forward.4} parent=57 // loop_body
                  %v245 = vld [vmem:[%s243] sm:$0xff]
                  %246 = vst [vmem:[%s244] sm:$0xff] %v245
                  %v247 = vld [vmem:[%s243 + $0x8] sm:$0xff]
                  %248 = vst [vmem:[%s244 + $0x8] sm:$0xff] %v247
                  %v249 = vld [vmem:[%s243 + $0x10] sm:$0xff]
                  %250 = vst [vmem:[%s244 + $0x10] sm:$0xff] %v249
                  %v251 = vld [vmem:[%s243 + $0x18] sm:$0xff]
                  %252 = vst [vmem:[%s244 + $0x18] sm:$0xff] %v251
                  %v253 = vld [vmem:[%s243 + $0x38] sm:$0xff]
                  %254 = vst [vmem:[%s244 + $0x20] sm:$0xff] %v253
                  %v255 = vld [vmem:[%s243 + $0x40] sm:$0xff]
                  %256 = vst [vmem:[%s244 + $0x28] sm:$0xff] %v255
                  %v257 = vld [vmem:[%s243 + $0x48] sm:$0xff]
                  %258 = vst [vmem:[%s244 + $0x30] sm:$0xff] %v257
                  %v259 = vld [vmem:[%s243 + $0x50] sm:$0xff]
                  %260 = vst [vmem:[%s244 + $0x38] sm:$0xff] %v259
                  %v261 = vld [vmem:[%s243 + $0x70] sm:$0xff]
                  %262 = vst [vmem:[%s244 + $0x40] sm:$0xff] %v261
                  %v263 = vld [vmem:[%s243 + $0x78] sm:$0xff]
                  %264 = vst [vmem:[%s244 + $0x48] sm:$0xff] %v263
                  %v265 = vld [vmem:[%s243 + $0x80] sm:$0xff]
                  %266 = vst [vmem:[%s244 + $0x50] sm:$0xff] %v265
                  %v267 = vld [vmem:[%s243 + $0x88] sm:$0xff]
                  %268 = vst [vmem:[%s244 + $0x58] sm:$0xff] %v267
                  %v269 = vld [vmem:[%s243 + $0xa8] sm:$0xff]
                  %270 = vst [vmem:[%s244 + $0x60] sm:$0xff] %v269
                  %v271 = vld [vmem:[%s243 + $0xb0] sm:$0xff]
                  %272 = vst [vmem:[%s244 + $0x68] sm:$0xff] %v271
                  %v273 = vld [vmem:[%s243 + $0xb8] sm:$0xff]
                  %274 = vst [vmem:[%s244 + $0x70] sm:$0xff] %v273
                  %v275 = vld [vmem:[%s243 + $0xc0] sm:$0xff]
                  %276 = vst [vmem:[%s244 + $0x78] sm:$0xff] %v275
                  %s277 = sadd.s32 1, %s242
                  %p278 = scmp.ge.s32.totalorder %s277, %s235
                  %s279 = scalar_select %p278, 0, %s277
                  %s280 = smul.u32 %s279, 32
                  %s281 = smul.u32 %s279, 32
                  %s282 = scalar_lea.vmem %s144, %s280
                  %s283 = scalar_lea.vmem %s134, %s281 [#allocation2]
                $region63: #{forward.4} parent=57 // loop_footer
                  %s239 = sadd.s32 %s237, 1
                $region64: #{forward.4} parent=57 // loop_footer_branch
                  %236 = sbr.rel target = $region60
                $region65: #{forward.4} parent=57 // loop_exit
                  _
                %s284 = sshrl.u32 %s138, 2
                %s285 = sand.u32 %s138, 3
                %s286 = smul.u32 %s284, 4
                %s287 = smul.u32 8, %s286
                %s288 = scalar_lea.vmem %s144, %s287
                %s289 = smul.u32 8, %s286
                %s290 = scalar_lea.vmem %s134, %s289 [#allocation2]
                // While loop
                $region66: #{forward.4} parent=57 // loop_pre_header
                  _
                $region67: #{forward.4} parent=57 // loop_header
                  %s292 = sphi 0, %s294
                  %p293 = scmp.ge.s32.totalorder %s292, %s285
                  %s297 = sphi 0, %s310
                  %s298 = sphi %s288, %s313
                  %s299 = sphi %s290, %s314
                $region68: #{forward.4} parent=57 // loop_header_branch
                  %296 = sbr.rel (%p293) target = $region72
                $region69: #{forward.4} parent=57 // loop_body
                  %v300 = vld [vmem:[%s298] sm:$0xff]
                  %301 = vst [vmem:[%s299] sm:$0xff] %v300
                  %v302 = vld [vmem:[%s298 + $0x38] sm:$0xff]
                  %303 = vst [vmem:[%s299 + $0x20] sm:$0xff] %v302
                  %v304 = vld [vmem:[%s298 + $0x70] sm:$0xff]
                  %305 = vst [vmem:[%s299 + $0x40] sm:$0xff] %v304
                  %v306 = vld [vmem:[%s298 + $0xa8] sm:$0xff]
                  %307 = vst [vmem:[%s299 + $0x60] sm:$0xff] %v306
                  %s308 = sadd.s32 1, %s297
                  %p309 = scmp.ge.s32.totalorder %s308, %s285
                  %s310 = scalar_select %p309, 0, %s308
                  %s311 = smul.u32 %s310, 8
                  %s312 = smul.u32 %s310, 8
                  %s313 = scalar_lea.vmem %s288, %s311
                  %s314 = scalar_lea.vmem %s290, %s312 [#allocation2]
                $region70: #{forward.4} parent=57 // loop_footer
                  %s294 = sadd.s32 %s292, 1
                $region71: #{forward.4} parent=57 // loop_footer_branch
                  %291 = sbr.rel target = $region67
                $region72: #{forward.4} parent=57 // loop_exit
                  _
              $region58: #{forward.4} parent=35 // pred_fallthru
                _
              // Predicated region
              $region73: #{forward.4} parent=35 // pred_check
                _
              $region74: #{forward.4} parent=35 // pred_check_branch
                %316 = sbr.rel target = $region76
              $region75: #{forward.4} parent=35 // pred_region
                _
              $region76: #{forward.4} parent=35 // pred_fallthru
                _
            $region36: #{forward.4} parent=31 // pred_fallthru
              _
            // Predicated region
            $region37: #{forward.4} parent=31 // pred_check
              _
            $region38: #{forward.4} parent=31 // pred_check_branch
              %151 = sbr.rel target = $region40
            $region39: #{forward.4} parent=31 // pred_region
              %s153 = sshrl.u32 %s138, 2
              // While loop
              $region41: #{forward.4} parent=39 // loop_pre_header
                _
              $region42: #{forward.4} parent=39 // loop_header
                %s155 = sphi 0, %s157
                %p156 = scmp.ge.s32.totalorder %s155, %s153
                %s160 = sphi 0, %s197
                %s161 = sphi %s144, %s200
                %s162 = sphi %s134, %s201
              $region43: #{forward.4} parent=39 // loop_header_branch
                %159 = sbr.rel (%p156) target = $region47
              $region44: #{forward.4} parent=39 // loop_body
                %v163 = vld [vmem:[%s161] sm:$0xff]
                %164 = vst [vmem:[%s162] sm:$0xff] %v163
                %v165 = vld [vmem:[%s161 + $0x8] sm:$0xff]
                %166 = vst [vmem:[%s162 + $0x8] sm:$0xff] %v165
                %v167 = vld [vmem:[%s161 + $0x10] sm:$0xff]
                %168 = vst [vmem:[%s162 + $0x10] sm:$0xff] %v167
                %v169 = vld [vmem:[%s161 + $0x18] sm:$0xff]
                %170 = vst [vmem:[%s162 + $0x18] sm:$0xff] %v169
                %v171 = vld [vmem:[%s161 + $0x38] sm:$0xff]
                %172 = vst [vmem:[%s162 + $0x20] sm:$0xff] %v171
                %v173 = vld [vmem:[%s161 + $0x40] sm:$0xff]
                %174 = vst [vmem:[%s162 + $0x28] sm:$0xff] %v173
                %v175 = vld [vmem:[%s161 + $0x48] sm:$0xff]
                %176 = vst [vmem:[%s162 + $0x30] sm:$0xff] %v175
                %v177 = vld [vmem:[%s161 + $0x50] sm:$0xff]
                %178 = vst [vmem:[%s162 + $0x38] sm:$0xff] %v177
                %v179 = vld [vmem:[%s161 + $0x70] sm:$0xff]
                %180 = vst [vmem:[%s162 + $0x40] sm:$0xff] %v179
                %v181 = vld [vmem:[%s161 + $0x78] sm:$0xff]
                %182 = vst [vmem:[%s162 + $0x48] sm:$0xff] %v181
                %v183 = vld [vmem:[%s161 + $0x80] sm:$0xff]
                %184 = vst [vmem:[%s162 + $0x50] sm:$0xff] %v183
                %v185 = vld [vmem:[%s161 + $0x88] sm:$0xff]
                %186 = vst [vmem:[%s162 + $0x58] sm:$0xff] %v185
                %v187 = vld [vmem:[%s161 + $0xa8] sm:$0xff]
                %188 = vst [vmem:[%s162 + $0x60] sm:$0xff] %v187
                %v189 = vld [vmem:[%s161 + $0xb0] sm:$0xff]
                %190 = vst [vmem:[%s162 + $0x68] sm:$0xff] %v189
                %v191 = vld [vmem:[%s161 + $0xb8] sm:$0xff]
                %192 = vst [vmem:[%s162 + $0x70] sm:$0xff] %v191
                %v193 = vld [vmem:[%s161 + $0xc0] sm:$0xff]
                %194 = vst [vmem:[%s162 + $0x78] sm:$0xff] %v193
                %s195 = sadd.s32 1, %s160
                %p196 = scmp.ge.s32.totalorder %s195, %s153
                %s197 = scalar_select %p196, 0, %s195
                %s198 = smul.u32 %s197, 32
                %s199 = smul.u32 %s197, 32
                %s200 = scalar_lea.vmem %s144, %s198
                %s201 = scalar_lea.vmem %s134, %s199 [#allocation2]
              $region45: #{forward.4} parent=39 // loop_footer
                %s157 = sadd.s32 %s155, 1
              $region46: #{forward.4} parent=39 // loop_footer_branch
                %154 = sbr.rel target = $region42
              $region47: #{forward.4} parent=39 // loop_exit
                _
              %s202 = sshrl.u32 %s138, 2
              %s203 = sand.u32 %s138, 3
              %s204 = smul.u32 %s202, 4
              %s205 = smul.u32 8, %s204
              %s206 = scalar_lea.vmem %s144, %s205
              %s207 = smul.u32 8, %s204
              %s208 = scalar_lea.vmem %s134, %s207 [#allocation2]
              // While loop
              $region48: #{forward.4} parent=39 // loop_pre_header
                _
              $region49: #{forward.4} parent=39 // loop_header
                %s210 = sphi 0, %s212
                %p211 = scmp.ge.s32.totalorder %s210, %s203
                %s215 = sphi 0, %s228
                %s216 = sphi %s206, %s231
                %s217 = sphi %s208, %s232
              $region50: #{forward.4} parent=39 // loop_header_branch
                %214 = sbr.rel (%p211) target = $region54
              $region51: #{forward.4} parent=39 // loop_body
                %v218 = vld [vmem:[%s216] sm:$0xff]
                %219 = vst [vmem:[%s217] sm:$0xff] %v218
                %v220 = vld [vmem:[%s216 + $0x38] sm:$0xff]
                %221 = vst [vmem:[%s217 + $0x20] sm:$0xff] %v220
                %v222 = vld [vmem:[%s216 + $0x70] sm:$0xff]
                %223 = vst [vmem:[%s217 + $0x40] sm:$0xff] %v222
                %v224 = vld [vmem:[%s216 + $0xa8] sm:$0xff]
                %225 = vst [vmem:[%s217 + $0x60] sm:$0xff] %v224
                %s226 = sadd.s32 1, %s215
                %p227 = scmp.ge.s32.totalorder %s226, %s203
                %s228 = scalar_select %p227, 0, %s226
                %s229 = smul.u32 %s228, 8
                %s230 = smul.u32 %s228, 8
                %s231 = scalar_lea.vmem %s206, %s229
                %s232 = scalar_lea.vmem %s208, %s230 [#allocation2]
              $region52: #{forward.4} parent=39 // loop_footer
                %s212 = sadd.s32 %s210, 1
              $region53: #{forward.4} parent=39 // loop_footer_branch
                %209 = sbr.rel target = $region49
              $region54: #{forward.4} parent=39 // loop_exit
                _
            $region40: #{forward.4} parent=31 // pred_fallthru
              _
          $region32: #{forward.4} parent=27 // pred_fallthru
            _
          %317 = vnop
        $region28: #{forward.4} parent=23 // pred_fallthru
          _
      $region24: #{forward.4} parent=5 // pred_fallthru
        _
      %p318 = scmp.le.s32.totalorder 1, %s9
      %p319 = scmp.lt.s32.totalorder %s9, 3
      %p320 = pnand %p318, %p319
      %p321 = pneg %p320
      // Predicated region
      $region77: #{forward.4} parent=5 // pred_check
        _
      $region78: #{forward.4} parent=5 // pred_check_branch
        %323 = sbr.rel (%p320) target = $region80
      $region79: #{forward.4} parent=5 // pred_region
        %s324 = ssub.s32 %s9, 1
        %s325 = sand.u32 %s22, 1
        %s326 = sand.u32 %s22, 1
        %s327 = smul.addr %s326, 128
        %s328 = scalar_lea.vmem [#allocation2], %s327
        // Predicated region
        $region81: #{forward.4} parent=79 // pred_check
          %p329 = pneg %p35
        $region82: #{forward.4} parent=79 // pred_check_branch
          %331 = sbr.rel (%p329) target = $region84
        $region83: #{forward.4} parent=79 // pred_region
          _
        $region84: #{forward.4} parent=79 // pred_fallthru
          _
        %s332 = sand.u32 %s22, 1
        %s333 = sand.u32 %s22, 1
        %s334 = smul.addr %s333, 128
        %s335 = scalar_lea.vmem [#allocation2], %s334
        %p336 = pneg %p35
        %p337 = pneg %p32
        %p338 = pneg %p56
        %p339 = pneg %p53
        %p340 = pneg %p77
        %p341 = pneg %p74
        %p342 = pneg %p103
        %p343 = pneg %p100
        %s344 = sand.u32 %s90, 1
        %s345 = sand.u32 %s90, 1
        %s346 = smul.addr %s345, 16
        %s347 = scalar_lea.vmem [#allocation3], %s346
        %s348 = smul.u32 4, %s14
        %s349 = ssub.s32 7, %s348
        %p350 = scmp.lt.s32.totalorder %s349, 4
        %s351 = scalar_select %p350, %s349, 4
        %s352 = smul.u32 256, %s351
        %s353 = smul.u32 %s352, 2
        %s354 = smul.u32 4, %s14
        %s355 = ssub.s32 7, %s354
        %p356 = scmp.lt.s32.totalorder %s355, 4
        %s357 = scalar_select %p356, %s355, 4
        %s358 = smul.u32 64, %s357
        %v360 = vld [vmem:[%s1] sm:$0xf]
        %v361 = vld [vmem:[%s1 + $0x4] sm:$0xf]
        %v362 = vld [vmem:[%s1 + $0x8] sm:$0xf]
        %v363 = vld [vmem:[%s1 + $0xc] sm:$0xf]
        %v364 = vld [vmem:[%s1 + $0x10] sm:$0xf]
        %v365 = vld [vmem:[%s1 + $0x14] sm:$0xf]
        %v366 = vld [vmem:[%s1 + $0x18] sm:$0xf]
        %v367 = vld [vmem:[%s1 + $0x1c] sm:$0xf]
        %v368 = vld [vmem:[%s1 + $0x20] sm:$0xf]
        %v369 = vld [vmem:[%s1 + $0x24] sm:$0xf]
        %v370 = vld [vmem:[%s1 + $0x28] sm:$0xf]
        %v371 = vld [vmem:[%s1 + $0x2c] sm:$0xf]
        %v372 = vld [vmem:[%s1 + $0x30] sm:$0xf]
        %v373 = vld [vmem:[%s1 + $0x34] sm:$0xf]
        %v374 = vld [vmem:[%s1 + $0x38] sm:$0xf]
        %v375 = vld [vmem:[%s1 + $0x3c] sm:$0xf]
        %v376 = vld [vmem:[%s1 + $0x40] sm:$0xf]
        %v377 = vld [vmem:[%s1 + $0x44] sm:$0xf]
        %v378 = vld [vmem:[%s1 + $0x48] sm:$0xf]
        %v379 = vld [vmem:[%s1 + $0x4c] sm:$0xf]
        %v380 = vld [vmem:[%s1 + $0x50] sm:$0xf]
        %v381 = vld [vmem:[%s1 + $0x54] sm:$0xf]
        %v382 = vld [vmem:[%s1 + $0x58] sm:$0xf]
        %v383 = vld [vmem:[%s1 + $0x5c] sm:$0xf]
        %v384 = vld [vmem:[%s1 + $0x60] sm:$0xf]
        %v385 = vld [vmem:[%s1 + $0x64] sm:$0xf]
        %v386 = vld [vmem:[%s1 + $0x68] sm:$0xf]
        %v387 = vld [vmem:[%s1 + $0x6c] sm:$0xf]
        %v388 = vld [vmem:[%s1 + $0x70] sm:$0xf]
        %v389 = vld [vmem:[%s1 + $0x74] sm:$0xf]
        %v390 = vld [vmem:[%s1 + $0x78] sm:$0xf]
        %v391 = vld [vmem:[%s1 + $0x7c] sm:$0xf]
        %v392 = vld [vmem:[%s328] sm:$0xff]
        %v393 = vld [vmem:[%s328 + $0x8] sm:$0xff]
        %v394 = vld [vmem:[%s328 + $0x10] sm:$0xff]
        %v395 = vld [vmem:[%s328 + $0x18] sm:$0xff]
        %v396 = vld [vmem:[%s328 + $0x20] sm:$0xff]
        %v397 = vld [vmem:[%s328 + $0x28] sm:$0xff]
        %v398 = vld [vmem:[%s328 + $0x30] sm:$0xff]
        %v399 = vld [vmem:[%s328 + $0x38] sm:$0xff]
        %v400 = vld [vmem:[%s328 + $0x40] sm:$0xff]
        %v401 = vld [vmem:[%s328 + $0x48] sm:$0xff]
        %v402 = vld [vmem:[%s328 + $0x50] sm:$0xff]
        %v403 = vld [vmem:[%s328 + $0x58] sm:$0xff]
        %v404 = vld [vmem:[%s328 + $0x60] sm:$0xff]
        %v405 = vld [vmem:[%s328 + $0x68] sm:$0xff]
        %v406 = vld [vmem:[%s328 + $0x70] sm:$0xff]
        %v407 = vld [vmem:[%s328 + $0x78] sm:$0xff]
        %v424 = vunpack.c.l.b16 %v392
        %v425 = vunpack.c.h.b16 %v392
        %v426 = vunpack.c.l.b16 %v393
        %v427 = vunpack.c.h.b16 %v393
        %v428 = vunpack.c.l.b16 %v394
        %v429 = vunpack.c.h.b16 %v394
        %v430 = vunpack.c.l.b16 %v395
        %v431 = vunpack.c.h.b16 %v395
        %v432 = vunpack.c.l.b16 %v396
        %v433 = vunpack.c.h.b16 %v396
        %v434 = vunpack.c.l.b16 %v397
        %v435 = vunpack.c.h.b16 %v397
        %v436 = vunpack.c.l.b16 %v398
        %v437 = vunpack.c.h.b16 %v398
        %v438 = vunpack.c.l.b16 %v399
        %v439 = vunpack.c.h.b16 %v399
        %v440 = vunpack.c.l.b16 %v400
        %v441 = vunpack.c.h.b16 %v400
        %v442 = vunpack.c.l.b16 %v401
        %v443 = vunpack.c.h.b16 %v401
        %v444 = vunpack.c.l.b16 %v402
        %v445 = vunpack.c.h.b16 %v402
        %v446 = vunpack.c.l.b16 %v403
        %v447 = vunpack.c.h.b16 %v403
        %v448 = vunpack.c.l.b16 %v404
        %v449 = vunpack.c.h.b16 %v404
        %v450 = vunpack.c.l.b16 %v405
        %v451 = vunpack.c.h.b16 %v405
        %v452 = vunpack.c.l.b16 %v406
        %v453 = vunpack.c.h.b16 %v406
        %v454 = vunpack.c.l.b16 %v407
        %v455 = vunpack.c.h.b16 %v407
        %v456 = vpack.c.b16 %v426, %v424
        %v457 = vpack.c.b16 %v427, %v425
        %v458 = vpack.c.b16 %v430, %v428
        %v459 = vpack.c.b16 %v431, %v429
        %v460 = vpack.c.b16 %v434, %v432
        %v461 = vpack.c.b16 %v435, %v433
        %v462 = vpack.c.b16 %v438, %v436
        %v463 = vpack.c.b16 %v439, %v437
        %v464 = vpack.c.b16 %v442, %v440
        %v465 = vpack.c.b16 %v443, %v441
        %v466 = vpack.c.b16 %v446, %v444
        %v467 = vpack.c.b16 %v447, %v445
        %v468 = vpack.c.b16 %v450, %v448
        %v469 = vpack.c.b16 %v451, %v449
        %v470 = vpack.c.b16 %v454, %v452
        %v471 = vpack.c.b16 %v455, %v453
        %v520 = vunpack.c.l.b16 %v360
        %v521 = vunpack.c.l.b16 %v361
        %v522 = vunpack.c.l.b16 %v362
        %v523 = vunpack.c.l.b16 %v363
        %v524 = vunpack.c.l.b16 %v364
        %v525 = vunpack.c.l.b16 %v365
        %v526 = vunpack.c.l.b16 %v366
        %v527 = vunpack.c.l.b16 %v367
        %v528 = vunpack.c.l.b16 %v368
        %v529 = vunpack.c.l.b16 %v369
        %v530 = vunpack.c.l.b16 %v370
        %v531 = vunpack.c.l.b16 %v371
        %v532 = vunpack.c.l.b16 %v372
        %v533 = vunpack.c.l.b16 %v373
        %v534 = vunpack.c.l.b16 %v374
        %v535 = vunpack.c.l.b16 %v375
        %v536 = vunpack.c.l.b16 %v376
        %v537 = vunpack.c.l.b16 %v377
        %v538 = vunpack.c.l.b16 %v378
        %v539 = vunpack.c.l.b16 %v379
        %v540 = vunpack.c.l.b16 %v380
        %v541 = vunpack.c.l.b16 %v381
        %v542 = vunpack.c.l.b16 %v382
        %v543 = vunpack.c.l.b16 %v383
        %v544 = vunpack.c.l.b16 %v384
        %v545 = vunpack.c.l.b16 %v385
        %v546 = vunpack.c.l.b16 %v386
        %v547 = vunpack.c.l.b16 %v387
        %v548 = vunpack.c.l.b16 %v388
        %v549 = vunpack.c.l.b16 %v389
        %v550 = vunpack.c.l.b16 %v390
        %v551 = vunpack.c.l.b16 %v391
        %v552 = vpack.c.b16 %v521, %v520
        %v553 = vpack.c.b16 %v523, %v522
        %v554 = vpack.c.b16 %v525, %v524
        %v555 = vpack.c.b16 %v527, %v526
        %v556 = vpack.c.b16 %v529, %v528
        %v557 = vpack.c.b16 %v531, %v530
        %v558 = vpack.c.b16 %v533, %v532
        %v559 = vpack.c.b16 %v535, %v534
        %v560 = vpack.c.b16 %v537, %v536
        %v561 = vpack.c.b16 %v539, %v538
        %v562 = vpack.c.b16 %v541, %v540
        %v563 = vpack.c.b16 %v543, %v542
        %v564 = vpack.c.b16 %v545, %v544
        %v565 = vpack.c.b16 %v547, %v546
        %v566 = vpack.c.b16 %v549, %v548
        %v567 = vpack.c.b16 %v551, %v550
        %584 = vmatprep.subr.bf16.mxu0 0
        %585 = vmatpush1.bf16.msra.mxu0 %v552
        %586 = vmatprep.subr.bf16.mxu0 0
        %587 = vmatpush1.bf16.msra.mxu0 %v553
        %588 = vmatprep.subr.bf16.mxu0 0
        %589 = vmatpush1.bf16.msra.mxu0 %v554
        %590 = vmatprep.subr.bf16.mxu0 0
        %591 = vmatpush1.bf16.msra.mxu0 %v555
        %592 = vmatprep.subr.bf16.mxu0 0
        %593 = vmatpush1.bf16.msra.mxu0 %v556
        %594 = vmatprep.subr.bf16.mxu0 0
        %595 = vmatpush1.bf16.msra.mxu0 %v557
        %596 = vmatprep.subr.bf16.mxu0 0
        %597 = vmatpush1.bf16.msra.mxu0 %v558
        %598 = vmatprep.subr.bf16.mxu0 0
        %599 = vmatpush1.bf16.msra.mxu0 %v559
        %600 = vmatprep.subr.bf16.mxu0 0
        %601 = vmatpush1.bf16.msra.mxu0 %v560
        %602 = vmatprep.subr.bf16.mxu0 0
        %603 = vmatpush1.bf16.msra.mxu0 %v561
        %604 = vmatprep.subr.bf16.mxu0 0
        %605 = vmatpush1.bf16.msra.mxu0 %v562
        %606 = vmatprep.subr.bf16.mxu0 0
        %607 = vmatpush1.bf16.msra.mxu0 %v563
        %608 = vmatprep.subr.bf16.mxu0 0
        %609 = vmatpush1.bf16.msra.mxu0 %v564
        %610 = vmatprep.subr.bf16.mxu0 0
        %611 = vmatpush1.bf16.msra.mxu0 %v565
        %612 = vmatprep.subr.bf16.mxu0 0
        %613 = vmatpush1.bf16.msra.mxu0 %v566
        %614 = vmatprep.subr.bf16.mxu0 0
        %615 = vmatpush1.bf16.msra.mxu0 %v567
        %616 = vmatprep.mubr.bf16.mxu0 %v457
        %617 = vmatmul.mubr.bf16.gmra.mrb[0].mxu0 %v456
        %v618 = vpop.f32.mrb[0].mxu0
        %v619 = vadd.f32 0.0, %v618
        %v620 = vpop.f32.mrb[0].mxu0
        %v621 = vpop.f32.mrb[0].mxu0
        %v622 = vadd.f32 0.0, %v621
        %v623 = vpop.f32.mrb[0].mxu0
        %624 = vmatprep.mubr.bf16.mxu0 %v459
        %625 = vmatmul.mubr.bf16.gmra.mrb[0].mxu0 %v458
        %v626 = vpop.f32.mrb[0].mxu0
        %v627 = vadd.f32 0.0, %v626
        %v628 = vpop.f32.mrb[0].mxu0
        %v629 = vpop.f32.mrb[0].mxu0
        %v630 = vadd.f32 0.0, %v629
        %v631 = vpop.f32.mrb[0].mxu0
        %632 = vmatprep.mubr.bf16.mxu0 %v461
        %633 = vmatmul.mubr.bf16.gmra.mrb[0].mxu0 %v460
        %v634 = vpop.f32.mrb[0].mxu0
        %v635 = vadd.f32 0.0, %v634
        %v636 = vpop.f32.mrb[0].mxu0
        %v637 = vpop.f32.mrb[0].mxu0
        %v638 = vadd.f32 0.0, %v637
        %v639 = vpop.f32.mrb[0].mxu0
        %640 = vmatprep.mubr.bf16.mxu0 %v463
        %641 = vmatmul.mubr.bf16.gmra.mrb[0].mxu0 %v462
        %v642 = vpop.f32.mrb[0].mxu0
        %v643 = vadd.f32 0.0, %v642
        %v644 = vpop.f32.mrb[0].mxu0
        %v645 = vpop.f32.mrb[0].mxu0
        %v646 = vadd.f32 0.0, %v645
        %v647 = vpop.f32.mrb[0].mxu0
        %648 = vmatprep.mubr.bf16.mxu0 %v465
        %649 = vmatmul.mubr.bf16.gmra.mrb[0].mxu0 %v464
        %v650 = vpop.f32.mrb[0].mxu0
        %v651 = vadd.f32 0.0, %v650
        %v652 = vpop.f32.mrb[0].mxu0
        %v653 = vpop.f32.mrb[0].mxu0
        %v654 = vadd.f32 0.0, %v653
        %v655 = vpop.f32.mrb[0].mxu0
        %656 = vmatprep.mubr.bf16.mxu0 %v467
        %657 = vmatmul.mubr.bf16.gmra.mrb[0].mxu0 %v466
        %v658 = vpop.f32.mrb[0].mxu0
        %v659 = vadd.f32 0.0, %v658
        %v660 = vpop.f32.mrb[0].mxu0
        %v661 = vpop.f32.mrb[0].mxu0
        %v662 = vadd.f32 0.0, %v661
        %v663 = vpop.f32.mrb[0].mxu0
        %664 = vmatprep.mubr.bf16.mxu0 %v469
        %665 = vmatmul.mubr.bf16.gmra.mrb[0].mxu0 %v468
        %v666 = vpop.f32.mrb[0].mxu0
        %v667 = vadd.f32 0.0, %v666
        %v668 = vpop.f32.mrb[0].mxu0
        %v669 = vpop.f32.mrb[0].mxu0
        %v670 = vadd.f32 0.0, %v669
        %v671 = vpop.f32.mrb[0].mxu0
        %672 = vmatprep.mubr.bf16.mxu0 %v471
        %673 = vmatmul.mubr.bf16.gmra.mrb[0].mxu0 %v470
        %v674 = vpop.f32.mrb[0].mxu0
        %v675 = vadd.f32 0.0, %v674
        %v676 = vpop.f32.mrb[0].mxu0
        %v677 = vpop.f32.mrb[0].mxu0
        %v678 = vadd.f32 0.0, %v677
        %v679 = vpop.f32.mrb[0].mxu0
        %680 = vdwg.mxu0
        %vm681 = vcmask 130048
        %v682 = vsel %vm681, %v619, -inf
        %v683 = vsel %vm681, %v635, -inf
        %v684 = vmax.f32 %v682, %v683
        %v685 = vsel %vm681, %v651, -inf
        %v686 = vmax.f32 %v684, %v685
        %v687 = vsel %vm681, %v667, -inf
        %v688 = vmax.f32 %v686, %v687
        %v689 = vsel %vm681, %v622, -inf
        %v690 = vsel %vm681, %v638, -inf
        %v691 = vmax.f32 %v689, %v690
        %v692 = vsel %vm681, %v654, -inf
        %v693 = vmax.f32 %v691, %v692
        %v694 = vsel %vm681, %v670, -inf
        %v695 = vmax.f32 %v693, %v694
        %v696 = vsel %vm681, %v627, -inf
        %v697 = vsel %vm681, %v643, -inf
        %v698 = vmax.f32 %v696, %v697
        %v699 = vsel %vm681, %v659, -inf
        %v700 = vmax.f32 %v698, %v699
        %v701 = vsel %vm681, %v675, -inf
        %v702 = vmax.f32 %v700, %v701
        %v703 = vsel %vm681, %v630, -inf
        %v704 = vsel %vm681, %v646, -inf
        %v705 = vmax.f32 %v703, %v704
        %v706 = vsel %vm681, %v662, -inf
        %v707 = vmax.f32 %v705, %v706
        %v708 = vsel %vm681, %v678, -inf
        %v709 = vmax.f32 %v707, %v708
        %v710 = vld [vmem:[%s2] sm:$0x1]
        %v712 = vlaneseq
        %v713 = vshrl.u32 %v712, 7
        %v714 = vsub.s32 0, %v713
        %v715 = vrot.slane %v710, %v714
        %v717 = vadd.f32 %v688, %v715
        %v718 = vadd.f32 %v695, %v715
        %v719 = vadd.f32 %v702, %v715
        %v720 = vadd.f32 %v709, %v715
        %v721 = vmax.f32 %v717, 0.0
        %v722 = vmax.f32 %v718, 0.0
        %v723 = vmax.f32 %v719, 0.0
        %v724 = vmax.f32 %v720, 0.0
        %v725 = vpack.c.bf16 %v722, %v721
        %v726 = vpack.c.bf16 %v724, %v723
        %v729 = vunpack.c.l.b16 %v725
        %v730 = vunpack.c.h.b16 %v725
        %v731 = vunpack.c.l.b16 %v726
        %v732 = vunpack.c.h.b16 %v726
        %v733 = vpack.c.b16 %v729, %v729
        %v734 = vpack.c.b16 %v730, %v730
        %v735 = vpack.c.b16 %v731, %v731
        %v736 = vpack.c.b16 %v732, %v732
        %vm741 = vcmask 125952
        %742 = vst.msk [vmem:[%s347] sm:$0xf] %vm741, %v733
        %743 = vst.msk [vmem:[%s347 + $0x4] sm:$0xf] %vm741, %v734
        %744 = vst.msk [vmem:[%s347 + $0x8] sm:$0xf] %vm741, %v735
        %745 = vst.msk [vmem:[%s347 + $0xc] sm:$0xf] %vm741, %v736
        %s746 = sand.u32 %s90, 1
        %s747 = sand.u32 %s90, 1
        %s748 = smul.addr %s747, 16
        %s749 = scalar_lea.vmem [#allocation3], %s748
        // Predicated region
        $region85: #{forward.4} parent=79 // pred_check
          %p750 = pneg %p100
        $region86: #{forward.4} parent=79 // pred_check_branch
          %752 = sbr.rel (%p750) target = $region88
        $region87: #{forward.4} parent=79 // pred_region
          %s753 = smul.u32 4, %s14
          %s754 = ssub.s32 7, %s753
          %p755 = scmp.lt.s32.totalorder %s754, 4
          %s756 = scalar_select %p755, %s754, 4
          %s757 = smul.u32 64, %s756
          %p758 = scmp.ne.s32.totalorder 0, %s757
          %s759 = smul.addr %s753, 4
          %s760 = scalar_lea.vmem %s3, %s759
          // Predicated region
          $region89: #{forward.4} parent=87 // pred_check
            %p761 = pneg %p758
          $region90: #{forward.4} parent=87 // pred_check_branch
            %763 = sbr.rel (%p761) target = $region92
          $region91: #{forward.4} parent=87 // pred_region
            // Predicated region
            $region93: #{forward.4} parent=91 // pred_check
              _
            $region94: #{forward.4} parent=91 // pred_check_branch
              %765 = sbr.rel target = $region96
            $region95: #{forward.4} parent=91 // pred_region
              // Predicated region
              $region115: #{forward.4} parent=95 // pred_check
                _
              $region116: #{forward.4} parent=95 // pred_check_branch
                %820 = sbr.rel (0) target = $region118
              $region117: #{forward.4} parent=95 // pred_region
                %s822 = sshrl.u32 %s756, 2
                // While loop
                $region119: #{forward.4} parent=117 // loop_pre_header
                  _
                $region120: #{forward.4} parent=117 // loop_header
                  %s824 = sphi 0, %s826
                  %p825 = scmp.ge.s32.totalorder %s824, %s822
                  %s829 = sphi 0, %s842
                  %s830 = sphi %s749, %s845
                  %s831 = sphi %s760, %s846
                $region121: #{forward.4} parent=117 // loop_header_branch
                  %828 = sbr.rel (%p825) target = $region125
                $region122: #{forward.4} parent=117 // loop_body
                  %v832 = vld [vmem:[%s830] sm:$0xf]
                  %833 = vst [vmem:[%s831] sm:$0xf] %v832
                  %v834 = vld [vmem:[%s830 + $0x4] sm:$0xf]
                  %835 = vst [vmem:[%s831 + $0x4] sm:$0xf] %v834
                  %v836 = vld [vmem:[%s830 + $0x8] sm:$0xf]
                  %837 = vst [vmem:[%s831 + $0x8] sm:$0xf] %v836
                  %v838 = vld [vmem:[%s830 + $0xc] sm:$0xf]
                  %839 = vst [vmem:[%s831 + $0xc] sm:$0xf] %v838
                  %s840 = sadd.s32 1, %s829
                  %p841 = scmp.ge.s32.totalorder %s840, %s822
                  %s842 = scalar_select %p841, 0, %s840
                  %s843 = smul.u32 %s842, 16
                  %s844 = smul.u32 %s842, 16
                  %s845 = scalar_lea.vmem %s749, %s843 [#allocation3]
                  %s846 = scalar_lea.vmem %s760, %s844
                $region123: #{forward.4} parent=117 // loop_footer
                  %s826 = sadd.s32 %s824, 1
                $region124: #{forward.4} parent=117 // loop_footer_branch
                  %823 = sbr.rel target = $region120
                $region125: #{forward.4} parent=117 // loop_exit
                  _
                %s847 = sshrl.u32 %s756, 2
                %s848 = sand.u32 %s756, 3
                %s849 = smul.u32 %s847, 4
                %s850 = smul.u32 4, %s849
                %s851 = scalar_lea.vmem %s749, %s850 [#allocation3]
                %s852 = smul.u32 4, %s849
                %s853 = scalar_lea.vmem %s760, %s852
                // While loop
                $region126: #{forward.4} parent=117 // loop_pre_header
                  _
                $region127: #{forward.4} parent=117 // loop_header
                  %s855 = sphi 0, %s857
                  %p856 = scmp.ge.s32.totalorder %s855, %s848
                  %s860 = sphi 0, %s867
                  %s861 = sphi %s851, %s870
                  %s862 = sphi %s853, %s871
                $region128: #{forward.4} parent=117 // loop_header_branch
                  %859 = sbr.rel (%p856) target = $region132
                $region129: #{forward.4} parent=117 // loop_body
                  %v863 = vld [vmem:[%s861] sm:$0xf]
                  %864 = vst [vmem:[%s862] sm:$0xf] %v863
                  %s865 = sadd.s32 1, %s860
                  %p866 = scmp.ge.s32.totalorder %s865, %s848
                  %s867 = scalar_select %p866, 0, %s865
                  %s868 = smul.u32 %s867, 4
                  %s869 = smul.u32 %s867, 4
                  %s870 = scalar_lea.vmem %s851, %s868 [#allocation3]
                  %s871 = scalar_lea.vmem %s853, %s869
                $region130: #{forward.4} parent=117 // loop_footer
                  %s857 = sadd.s32 %s855, 1
                $region131: #{forward.4} parent=117 // loop_footer_branch
                  %854 = sbr.rel target = $region127
                $region132: #{forward.4} parent=117 // loop_exit
                  _
              $region118: #{forward.4} parent=95 // pred_fallthru
                _
            $region96: #{forward.4} parent=91 // pred_fallthru
              _
            // Predicated region
            $region97: #{forward.4} parent=91 // pred_check
              _
            $region98: #{forward.4} parent=91 // pred_check_branch
              %767 = sbr.rel (0) target = $region100
            $region99: #{forward.4} parent=91 // pred_region
              %s769 = sshrl.u32 %s756, 2
              // While loop
              $region101: #{forward.4} parent=99 // loop_pre_header
                _
              $region102: #{forward.4} parent=99 // loop_header
                %s771 = sphi 0, %s773
                %p772 = scmp.ge.s32.totalorder %s771, %s769
                %s776 = sphi 0, %s789
                %s777 = sphi %s749, %s792
                %s778 = sphi %s760, %s793
              $region103: #{forward.4} parent=99 // loop_header_branch
                %775 = sbr.rel (%p772) target = $region107
              $region104: #{forward.4} parent=99 // loop_body
                %v779 = vld [vmem:[%s777] sm:$0xf]
                %780 = vst [vmem:[%s778] sm:$0xf] %v779
                %v781 = vld [vmem:[%s777 + $0x4] sm:$0xf]
                %782 = vst [vmem:[%s778 + $0x4] sm:$0xf] %v781
                %v783 = vld [vmem:[%s777 + $0x8] sm:$0xf]
                %784 = vst [vmem:[%s778 + $0x8] sm:$0xf] %v783
                %v785 = vld [vmem:[%s777 + $0xc] sm:$0xf]
                %786 = vst [vmem:[%s778 + $0xc] sm:$0xf] %v785
                %s787 = sadd.s32 1, %s776
                %p788 = scmp.ge.s32.totalorder %s787, %s769
                %s789 = scalar_select %p788, 0, %s787
                %s790 = smul.u32 %s789, 16
                %s791 = smul.u32 %s789, 16
                %s792 = scalar_lea.vmem %s749, %s790 [#allocation3]
                %s793 = scalar_lea.vmem %s760, %s791
              $region105: #{forward.4} parent=99 // loop_footer
                %s773 = sadd.s32 %s771, 1
              $region106: #{forward.4} parent=99 // loop_footer_branch
                %770 = sbr.rel target = $region102
              $region107: #{forward.4} parent=99 // loop_exit
                _
              %s794 = sshrl.u32 %s756, 2
              %s795 = sand.u32 %s756, 3
              %s796 = smul.u32 %s794, 4
              %s797 = smul.u32 4, %s796
              %s798 = scalar_lea.vmem %s749, %s797 [#allocation3]
              %s799 = smul.u32 4, %s796
              %s800 = scalar_lea.vmem %s760, %s799
              // While loop
              $region108: #{forward.4} parent=99 // loop_pre_header
                _
              $region109: #{forward.4} parent=99 // loop_header
                %s802 = sphi 0, %s804
                %p803 = scmp.ge.s32.totalorder %s802, %s795
                %s807 = sphi 0, %s814
                %s808 = sphi %s798, %s817
                %s809 = sphi %s800, %s818
              $region110: #{forward.4} parent=99 // loop_header_branch
                %806 = sbr.rel (%p803) target = $region114
              $region111: #{forward.4} parent=99 // loop_body
                %v810 = vld [vmem:[%s808] sm:$0xf]
                %811 = vst [vmem:[%s809] sm:$0xf] %v810
                %s812 = sadd.s32 1, %s807
                %p813 = scmp.ge.s32.totalorder %s812, %s795
                %s814 = scalar_select %p813, 0, %s812
                %s815 = smul.u32 %s814, 4
                %s816 = smul.u32 %s814, 4
                %s817 = scalar_lea.vmem %s798, %s815 [#allocation3]
                %s818 = scalar_lea.vmem %s800, %s816
              $region112: #{forward.4} parent=99 // loop_footer
                %s804 = sadd.s32 %s802, 1
              $region113: #{forward.4} parent=99 // loop_footer_branch
                %801 = sbr.rel target = $region109
              $region114: #{forward.4} parent=99 // loop_exit
                _
            $region100: #{forward.4} parent=91 // pred_fallthru
              _
          $region92: #{forward.4} parent=87 // pred_fallthru
            _
          %872 = vnop
        $region88: #{forward.4} parent=79 // pred_fallthru
          _
      $region80: #{forward.4} parent=5 // pred_fallthru
        _
      %p873 = scmp.le.s32.totalorder 2, %s9
      // Predicated region
      $region133: #{forward.4} parent=5 // pred_check
        %p874 = pneg %p873
      $region134: #{forward.4} parent=5 // pred_check_branch
        %876 = sbr.rel (%p874) target = $region136
      $region135: #{forward.4} parent=5 // pred_region
        %s877 = ssub.s32 %s9, 2
        // Predicated region
        $region137: #{forward.4} parent=135 // pred_check
          %p878 = pneg %p106
        $region138: #{forward.4} parent=135 // pred_check_branch
          %880 = sbr.rel (%p878) target = $region140
        $region139: #{forward.4} parent=135 // pred_region
          %s881 = sand.u32 %s91, 1
          %s882 = sand.u32 %s91, 1
          %s883 = smul.addr %s882, 16
          %s884 = scalar_lea.vmem [#allocation3], %s883
        $region140: #{forward.4} parent=135 // pred_fallthru
          _
      $region136: #{forward.4} parent=5 // pred_fallthru
        _
    $region6: #{forward.4} parent=1 // loop_footer
      %s13 = sadd.s32 1, %s9
    $region7: #{forward.4} parent=1 // loop_footer_branch
      %8 = sbr.rel target = $region3
    $region8: #{forward.4} parent=1 // loop_exit
      _

// kernel: forward.5
$region0: #{forward.5}
  #allocation0 [shape = 'u32[]', space=smem, size = 0x4, offset = 0x4, fixed_abs, tag = 'smem constant byte address 0x4 - core index']
  #allocation1 [shape = 'u32[144,128]{1,0:T(1,128)}', space=vmem, size = 0x12000, scoped, tag = 'internal scratch']
  %s0 = inlined_call_operand.vmem [shape: bf16[2,400], index: 0, kind: input, shape index: {}]
  %s1 = inlined_call_operand.vmem [shape: bf16[400,128], index: 1, kind: input, shape index: {}]
  %s2 = inlined_call_operand.vmem [shape: f32[1,128], index: 2, kind: input, shape index: {}]
  %s3 = inlined_call_operand.vmem [shape: bf16[128,128], index: 3, kind: input, shape index: {}]
  %s4 = inlined_call_operand.vmem [shape: f32[1,128], index: 4, kind: input, shape index: {}]
  %s5 = inlined_call_operand.vmem [shape: bf16[128,10], index: 5, kind: input, shape index: {}]
  %s6 = inlined_call_operand.vmem [shape: f32[1,10], index: 6, kind: input, shape index: {}]
  %s7 = inlined_call_operand.hbm [shape: f32[2,10], index: 7, kind: output, shape index: {}]
  %s8 = sld [smem:[#allocation0]]
  $region38: #{forward.5} parent=0
    _
  %s10 = ssub.s32 1, %s8
  %s11 = scalar_select 0, %s10, %s8
  $region1: #{forward.5} parent=0
    #allocation2 [shape = 'u8[1024]{0}', space=vmem, size = 0x400, scoped, tag = 'output window, operand 0, single buffered']
    #allocation3 [shape = 's32[1]{0}', space=sflag, size = 0x4, scoped, tag = 'scoped memory for forward.5']
    %12 = vsyncpa [#allocation3], 0
    // Predicated region
    $region2: #{forward.5} parent=1 // pred_check
      _
    $region3: #{forward.5} parent=1 // pred_check_branch
      %14 = sbr.rel (0) target = $region5
    $region4: #{forward.5} parent=1 // pred_region
      _
    $region5: #{forward.5} parent=1 // pred_fallthru
      _
    // Predicated region
    $region6: #{forward.5} parent=1 // pred_check
      _
    $region7: #{forward.5} parent=1 // pred_check_branch
      %16 = sbr.rel (0) target = $region9
    $region8: #{forward.5} parent=1 // pred_region
      _
    $region9: #{forward.5} parent=1 // pred_fallthru
      _
    // Predicated region
    $region10: #{forward.5} parent=1 // pred_check
      _
    $region11: #{forward.5} parent=1 // pred_check_branch
      %18 = sbr.rel (0) target = $region13
    $region12: #{forward.5} parent=1 // pred_region
      _
    $region13: #{forward.5} parent=1 // pred_fallthru
      _
    // Predicated region
    $region14: #{forward.5} parent=1 // pred_check
      _
    $region15: #{forward.5} parent=1 // pred_check_branch
      %20 = sbr.rel (0) target = $region17
    $region16: #{forward.5} parent=1 // pred_region
      _
    $region17: #{forward.5} parent=1 // pred_fallthru
      _
    // Predicated region
    $region18: #{forward.5} parent=1 // pred_check
      _
    $region19: #{forward.5} parent=1 // pred_check_branch
      %22 = sbr.rel (0) target = $region21
    $region20: #{forward.5} parent=1 // pred_region
      _
    $region21: #{forward.5} parent=1 // pred_fallthru
      _
    // Predicated region
    $region22: #{forward.5} parent=1 // pred_check
      _
    $region23: #{forward.5} parent=1 // pred_check_branch
      %24 = sbr.rel (0) target = $region25
    $region24: #{forward.5} parent=1 // pred_region
      _
    $region25: #{forward.5} parent=1 // pred_fallthru
      _
    // Predicated region
    $region26: #{forward.5} parent=1 // pred_check
      _
    $region27: #{forward.5} parent=1 // pred_check_branch
      %26 = sbr.rel (0) target = $region29
    $region28: #{forward.5} parent=1 // pred_region
      _
    $region29: #{forward.5} parent=1 // pred_fallthru
      _
    %v28 = vld [vmem:[%s0] sm:$0xf]
    %v29 = vld [vmem:[%s1] sm:$0xf]
    %v30 = vld [vmem:[%s1 + $0x4] sm:$0xf]
    %v31 = vld [vmem:[%s1 + $0x8] sm:$0xf]
    %v32 = vld [vmem:[%s1 + $0xc] sm:$0xf]
    %v33 = vld [vmem:[%s1 + $0x10] sm:$0xf]
    %v34 = vld [vmem:[%s1 + $0x14] sm:$0xf]
    %v35 = vld [vmem:[%s1 + $0x18] sm:$0xf]
    %v36 = vld [vmem:[%s1 + $0x1c] sm:$0xf]
    %v37 = vld [vmem:[%s1 + $0x20] sm:$0xf]
    %v38 = vld [vmem:[%s1 + $0x24] sm:$0xf]
    %v39 = vld [vmem:[%s1 + $0x28] sm:$0xf]
    %v40 = vld [vmem:[%s1 + $0x2c] sm:$0xf]
    %v41 = vld [vmem:[%s1 + $0x30] sm:$0xf]
    %v42 = vld [vmem:[%s1 + $0x34] sm:$0xf]
    %v43 = vld [vmem:[%s1 + $0x38] sm:$0xf]
    %v44 = vld [vmem:[%s1 + $0x3c] sm:$0xf]
    %v45 = vld [vmem:[%s1 + $0x40] sm:$0xf]
    %v46 = vld [vmem:[%s1 + $0x44] sm:$0xf]
    %v47 = vld [vmem:[%s1 + $0x48] sm:$0xf]
    %v48 = vld [vmem:[%s1 + $0x4c] sm:$0xf]
    %v49 = vld [vmem:[%s1 + $0x50] sm:$0xf]
    %v50 = vld [vmem:[%s1 + $0x54] sm:$0xf]
    %v51 = vld [vmem:[%s1 + $0x58] sm:$0xf]
    %v52 = vld [vmem:[%s1 + $0x5c] sm:$0xf]
    %v53 = vld [vmem:[%s1 + $0x60] sm:$0xf]
    %v54 = vld [vmem:[%s1 + $0x64] sm:$0xf]
    %v55 = vld [vmem:[%s1 + $0x68] sm:$0xf]
    %v56 = vld [vmem:[%s1 + $0x6c] sm:$0xf]
    %v57 = vld [vmem:[%s1 + $0x70] sm:$0xf]
    %v58 = vld [vmem:[%s1 + $0x74] sm:$0xf]
    %v59 = vld [vmem:[%s1 + $0x78] sm:$0xf]
    %v60 = vld [vmem:[%s1 + $0x7c] sm:$0xf]
    %v61 = vld [vmem:[%s1 + $0x80] sm:$0xf]
    %v62 = vld [vmem:[%s1 + $0x84] sm:$0xf]
    %v63 = vld [vmem:[%s1 + $0x88] sm:$0xf]
    %v64 = vld [vmem:[%s1 + $0x8c] sm:$0xf]
    %v65 = vld [vmem:[%s1 + $0x90] sm:$0xf]
    %v66 = vld [vmem:[%s1 + $0x94] sm:$0xf]
    %v67 = vld [vmem:[%s1 + $0x98] sm:$0xf]
    %v68 = vld [vmem:[%s1 + $0x9c] sm:$0xf]
    %v69 = vld [vmem:[%s1 + $0xa0] sm:$0xf]
    %v70 = vld [vmem:[%s1 + $0xa4] sm:$0xf]
    %v71 = vld [vmem:[%s1 + $0xa8] sm:$0xf]
    %v72 = vld [vmem:[%s1 + $0xac] sm:$0xf]
    %v73 = vld [vmem:[%s1 + $0xb0] sm:$0xf]
    %v74 = vld [vmem:[%s1 + $0xb4] sm:$0xf]
    %v75 = vld [vmem:[%s1 + $0xb8] sm:$0xf]
    %v76 = vld [vmem:[%s1 + $0xbc] sm:$0xf]
    %v77 = vld [vmem:[%s1 + $0xc0] sm:$0xf]
    %v78 = vld [vmem:[%s1 + $0xc4] sm:$0xf]
    %v79 = vld [vmem:[%s2] sm:$0x1]
    %v81 = vlaneseq
    %v82 = vshrl.u32 %v81, 7
    %v83 = vsub.s32 0, %v82
    %v84 = vrot.slane %v79, %v83
    %v88 = vunpack.c.l.s4 1966171168
    %v89 = vunpack.c.0.s8 %v88
    %v90 = vlaneseq
    %v91 = vshrl.u32 %v90, 7
    %v92 = vsub.s32 %v89, %v91
    %v93 = vrot.slane %v28, %v92
    %v94 = vcombine.high %v93, %v93
    %v96 = vunpack.c.l.s4 1966171168
    %v97 = vunpack.c.0.s8 %v96
    %v98 = vlaneseq
    %v99 = vshrl.u32 %v98, 7
    %v100 = vsub.s32 %v97, %v99
    %v101 = vrot.slane %v93, %v100
    %v103 = vunpack.c.l.s4 1966171168
    %v104 = vunpack.c.0.s8 %v103
    %v105 = vlaneseq
    %v106 = vshrl.u32 %v105, 7
    %v107 = vsub.s32 %v104, %v106
    %v108 = vrot.slane %v94, %v107
    %v109 = vcombine.high %v101, %v101
    %v110 = vcombine.high %v108, %v108
    %v164 = vunpack.c.l.b16 %v29
    %v165 = vunpack.c.l.b16 %v30
    %v166 = vunpack.c.l.b16 %v31
    %v167 = vunpack.c.l.b16 %v32
    %v168 = vunpack.c.l.b16 %v33
    %v169 = vunpack.c.l.b16 %v34
    %v170 = vunpack.c.l.b16 %v35
    %v171 = vunpack.c.l.b16 %v36
    %v172 = vunpack.c.l.b16 %v37
    %v173 = vunpack.c.l.b16 %v38
    %v174 = vunpack.c.l.b16 %v39
    %v175 = vunpack.c.l.b16 %v40
    %v176 = vunpack.c.l.b16 %v41
    %v177 = vunpack.c.l.b16 %v42
    %v178 = vunpack.c.l.b16 %v43
    %v179 = vunpack.c.l.b16 %v44
    %v180 = vunpack.c.l.b16 %v45
    %v181 = vunpack.c.l.b16 %v46
    %v182 = vunpack.c.l.b16 %v47
    %v183 = vunpack.c.l.b16 %v48
    %v184 = vunpack.c.l.b16 %v49
    %v185 = vunpack.c.l.b16 %v50
    %v186 = vunpack.c.l.b16 %v51
    %v187 = vunpack.c.l.b16 %v52
    %v188 = vunpack.c.l.b16 %v53
    %v189 = vunpack.c.l.b16 %v54
    %v190 = vunpack.c.l.b16 %v55
    %v191 = vunpack.c.l.b16 %v56
    %v192 = vunpack.c.l.b16 %v57
    %v193 = vunpack.c.l.b16 %v58
    %v194 = vunpack.c.l.b16 %v59
    %v195 = vunpack.c.l.b16 %v60
    %v196 = vunpack.c.l.b16 %v61
    %v197 = vunpack.c.l.b16 %v62
    %v198 = vunpack.c.l.b16 %v63
    %v199 = vunpack.c.l.b16 %v64
    %v200 = vunpack.c.l.b16 %v65
    %v201 = vunpack.c.l.b16 %v66
    %v202 = vunpack.c.l.b16 %v67
    %v203 = vunpack.c.l.b16 %v68
    %v204 = vunpack.c.l.b16 %v69
    %v205 = vunpack.c.l.b16 %v70
    %v206 = vunpack.c.l.b16 %v71
    %v207 = vunpack.c.l.b16 %v72
    %v208 = vunpack.c.l.b16 %v73
    %v209 = vunpack.c.l.b16 %v74
    %v210 = vunpack.c.l.b16 %v75
    %v211 = vunpack.c.l.b16 %v76
    %v212 = vunpack.c.l.b16 %v77
    %v213 = vunpack.c.l.b16 %v78
    %v214 = vpack.c.b16 %v165, %v164
    %v215 = vpack.c.b16 %v167, %v166
    %v216 = vpack.c.b16 %v169, %v168
    %v217 = vpack.c.b16 %v171, %v170
    %v218 = vpack.c.b16 %v173, %v172
    %v219 = vpack.c.b16 %v175, %v174
    %v220 = vpack.c.b16 %v177, %v176
    %v221 = vpack.c.b16 %v179, %v178
    %v222 = vpack.c.b16 %v181, %v180
    %v223 = vpack.c.b16 %v183, %v182
    %v224 = vpack.c.b16 %v185, %v184
    %v225 = vpack.c.b16 %v187, %v186
    %v226 = vpack.c.b16 %v189, %v188
    %v227 = vpack.c.b16 %v191, %v190
    %v228 = vpack.c.b16 %v193, %v192
    %v229 = vpack.c.b16 %v195, %v194
    %v230 = vpack.c.b16 %v197, %v196
    %v231 = vpack.c.b16 %v199, %v198
    %v232 = vpack.c.b16 %v201, %v200
    %v233 = vpack.c.b16 %v203, %v202
    %v234 = vpack.c.b16 %v205, %v204
    %v235 = vpack.c.b16 %v207, %v206
    %v236 = vpack.c.b16 %v209, %v208
    %v237 = vpack.c.b16 %v211, %v210
    %v238 = vpack.c.b16 %v213, %v212
    %vm264 = vcmask 130048
    %v266 = vsel %vm264, %v110, 0
    %268 = vmatprep.subr.bf16.mxu0 0
    %269 = vmatpush1.bf16.msra.mxu0 %v214
    %270 = vmatprep.subr.bf16.mxu0 0
    %271 = vmatpush1.bf16.msra.mxu0 %v215
    %272 = vmatprep.subr.bf16.mxu0 0
    %273 = vmatpush1.bf16.msra.mxu0 %v216
    %274 = vmatprep.subr.bf16.mxu0 0
    %275 = vmatpush1.bf16.msra.mxu0 %v217
    %276 = vmatprep.subr.bf16.mxu0 0
    %277 = vmatpush1.bf16.msra.mxu0 %v218
    %278 = vmatprep.subr.bf16.mxu0 0
    %279 = vmatpush1.bf16.msra.mxu0 %v219
    %280 = vmatprep.subr.bf16.mxu0 0
    %281 = vmatpush1.bf16.msra.mxu0 %v220
    %282 = vmatprep.subr.bf16.mxu0 0
    %283 = vmatpush1.bf16.msra.mxu0 %v221
    %284 = vmatprep.subr.bf16.mxu0 0
    %285 = vmatpush1.bf16.msra.mxu0 %v222
    %286 = vmatprep.subr.bf16.mxu0 0
    %287 = vmatpush1.bf16.msra.mxu0 %v223
    %288 = vmatprep.subr.bf16.mxu0 0
    %289 = vmatpush1.bf16.msra.mxu0 %v224
    %290 = vmatprep.subr.bf16.mxu0 0
    %291 = vmatpush1.bf16.msra.mxu0 %v225
    %292 = vmatprep.subr.bf16.mxu0 0
    %293 = vmatpush1.bf16.msra.mxu0 %v226
    %294 = vmatprep.subr.bf16.mxu0 0
    %295 = vmatpush1.bf16.msra.mxu0 %v227
    %296 = vmatprep.subr.bf16.mxu0 0
    %297 = vmatpush1.bf16.msra.mxu0 %v228
    %298 = vmatprep.subr.bf16.mxu0 0
    %299 = vmatpush1.bf16.msra.mxu0 %v229
    %300 = vmatprep.mubr.bf16.mxu0 %v108
    %301 = vmatmul.mubr.bf16.gmra.mrb[0].mxu0 %v101
    %v302 = vpop.f32.mrb[0].mxu0
    %v303 = vadd.f32 %v84, %v302
    %v304 = vpop.f32.mrb[0].mxu0
    %v305 = vpop.f32.mrb[0].mxu0
    %v306 = vpop.f32.mrb[0].mxu0
    %307 = vdwg.mxu0
    %308 = vmatprep.subr.bf16.mxu0 0
    %309 = vmatpush1.bf16.msra.mxu0 %v230
    %310 = vmatprep.subr.bf16.mxu0 0
    %311 = vmatpush1.bf16.msra.mxu0 %v231
    %312 = vmatprep.subr.bf16.mxu0 0
    %313 = vmatpush1.bf16.msra.mxu0 %v232
    %314 = vmatprep.subr.bf16.mxu0 0
    %315 = vmatpush1.bf16.msra.mxu0 %v233
    %316 = vmatprep.subr.bf16.mxu0 0
    %317 = vmatpush1.bf16.msra.mxu0 %v234
    %318 = vmatprep.subr.bf16.mxu0 0
    %319 = vmatpush1.bf16.msra.mxu0 %v235
    %320 = vmatprep.subr.bf16.mxu0 0
    %321 = vmatpush1.bf16.msra.mxu0 %v236
    %322 = vmatprep.subr.bf16.mxu0 0
    %323 = vmatpush1.bf16.msra.mxu0 %v237
    %324 = vmatprep.subr.bf16.mxu0 0
    %325 = vmatpush1.bf16.msra.mxu0 %v238
    %326 = vmatprep.subr.bf16.mxu0 0
    %327 = vmatpush1.bf16.msra.mxu0 0
    %328 = vmatprep.subr.bf16.mxu0 0
    %329 = vmatpush1.bf16.msra.mxu0 0
    %330 = vmatprep.subr.bf16.mxu0 0
    %331 = vmatpush1.bf16.msra.mxu0 0
    %332 = vmatprep.subr.bf16.mxu0 0
    %333 = vmatpush1.bf16.msra.mxu0 0
    %334 = vmatprep.subr.bf16.mxu0 0
    %335 = vmatpush1.bf16.msra.mxu0 0
    %336 = vmatprep.subr.bf16.mxu0 0
    %337 = vmatpush1.bf16.msra.mxu0 0
    %338 = vmatprep.subr.bf16.mxu0 0
    %339 = vmatpush1.bf16.msra.mxu0 0
    %340 = vmatprep.mubr.bf16.mxu0 %v266
    %341 = vmatmul.mubr.bf16.gmra.mrb[0].mxu0 %v109
    %v342 = vpop.f32.mrb[0].mxu0
    %v343 = vadd.f32 %v303, %v342
    %v344 = vpop.f32.mrb[0].mxu0
    %v345 = vpop.f32.mrb[0].mxu0
    %v346 = vpop.f32.mrb[0].mxu0
    %347 = vdwg.mxu0
    %v348 = vmax.f32 %v343, 0.0
    %v349 = vpack.c.bf16 %v348, %v348
    %v350 = vld [vmem:[%s3] sm:$0xf]
    %v351 = vld [vmem:[%s3 + $0x4] sm:$0xf]
    %v352 = vld [vmem:[%s3 + $0x8] sm:$0xf]
    %v353 = vld [vmem:[%s3 + $0xc] sm:$0xf]
    %v354 = vld [vmem:[%s3 + $0x10] sm:$0xf]
    %v355 = vld [vmem:[%s3 + $0x14] sm:$0xf]
    %v356 = vld [vmem:[%s3 + $0x18] sm:$0xf]
    %v357 = vld [vmem:[%s3 + $0x1c] sm:$0xf]
    %v358 = vld [vmem:[%s3 + $0x20] sm:$0xf]
    %v359 = vld [vmem:[%s3 + $0x24] sm:$0xf]
    %v360 = vld [vmem:[%s3 + $0x28] sm:$0xf]
    %v361 = vld [vmem:[%s3 + $0x2c] sm:$0xf]
    %v362 = vld [vmem:[%s3 + $0x30] sm:$0xf]
    %v363 = vld [vmem:[%s3 + $0x34] sm:$0xf]
    %v364 = vld [vmem:[%s3 + $0x38] sm:$0xf]
    %v365 = vld [vmem:[%s3 + $0x3c] sm:$0xf]
    %v366 = vld [vmem:[%s4] sm:$0x1]
    %v368 = vlaneseq
    %v369 = vshrl.u32 %v368, 7
    %v370 = vsub.s32 0, %v369
    %v371 = vrot.slane %v366, %v370
    %v389 = vunpack.c.l.b16 %v350
    %v390 = vunpack.c.l.b16 %v351
    %v391 = vunpack.c.l.b16 %v352
    %v392 = vunpack.c.l.b16 %v353
    %v393 = vunpack.c.l.b16 %v354
    %v394 = vunpack.c.l.b16 %v355
    %v395 = vunpack.c.l.b16 %v356
    %v396 = vunpack.c.l.b16 %v357
    %v397 = vunpack.c.l.b16 %v358
    %v398 = vunpack.c.l.b16 %v359
    %v399 = vunpack.c.l.b16 %v360
    %v400 = vunpack.c.l.b16 %v361
    %v401 = vunpack.c.l.b16 %v362
    %v402 = vunpack.c.l.b16 %v363
    %v403 = vunpack.c.l.b16 %v364
    %v404 = vunpack.c.l.b16 %v365
    %v405 = vpack.c.b16 %v390, %v389
    %v406 = vpack.c.b16 %v392, %v391
    %v407 = vpack.c.b16 %v394, %v393
    %v408 = vpack.c.b16 %v396, %v395
    %v409 = vpack.c.b16 %v398, %v397
    %v410 = vpack.c.b16 %v400, %v399
    %v411 = vpack.c.b16 %v402, %v401
    %v412 = vpack.c.b16 %v404, %v403
    %421 = vmatprep.subr.bf16.mxu0 0
    %422 = vmatpush1.bf16.msra.mxu0 %v405
    %423 = vmatprep.subr.bf16.mxu0 0
    %424 = vmatpush1.bf16.msra.mxu0 %v406
    %425 = vmatprep.subr.bf16.mxu0 0
    %426 = vmatpush1.bf16.msra.mxu0 %v407
    %427 = vmatprep.subr.bf16.mxu0 0
    %428 = vmatpush1.bf16.msra.mxu0 %v408
    %429 = vmatprep.subr.bf16.mxu0 0
    %430 = vmatpush1.bf16.msra.mxu0 %v409
    %431 = vmatprep.subr.bf16.mxu0 0
    %432 = vmatpush1.bf16.msra.mxu0 %v410
    %433 = vmatprep.subr.bf16.mxu0 0
    %434 = vmatpush1.bf16.msra.mxu0 %v411
    %435 = vmatprep.subr.bf16.mxu0 0
    %436 = vmatpush1.bf16.msra.mxu0 %v412
    %437 = vmatprep.subr.bf16.mxu0 0
    %438 = vmatpush1.bf16.msra.mxu0 0
    %439 = vmatprep.subr.bf16.mxu0 0
    %440 = vmatpush1.bf16.msra.mxu0 0
    %441 = vmatprep.subr.bf16.mxu0 0
    %442 = vmatpush1.bf16.msra.mxu0 0
    %443 = vmatprep.subr.bf16.mxu0 0
    %444 = vmatpush1.bf16.msra.mxu0 0
    %445 = vmatprep.subr.bf16.mxu0 0
    %446 = vmatpush1.bf16.msra.mxu0 0
    %447 = vmatprep.subr.bf16.mxu0 0
    %448 = vmatpush1.bf16.msra.mxu0 0
    %449 = vmatprep.subr.bf16.mxu0 0
    %450 = vmatpush1.bf16.msra.mxu0 0
    %451 = vmatprep.subr.bf16.mxu0 0
    %452 = vmatpush1.bf16.msra.mxu0 0
    %453 = vmatprep.mubr.bf16.mxu0 0
    %454 = vmatmul.mubr.bf16.gmra.mrb[0].mxu0 %v349
    %v455 = vpop.f32.mrb[0].mxu0
    %v456 = vadd.f32 %v371, %v455
    %v457 = vpop.f32.mrb[0].mxu0
    %v458 = vpop.f32.mrb[0].mxu0
    %v459 = vpop.f32.mrb[0].mxu0
    %460 = vdwg.mxu0
    %v461 = vmax.f32 %v456, 0.0
    %v462 = vpack.c.bf16 %v461, %v461
    %v463 = vld [vmem:[%s5] sm:$0xf]
    %v464 = vld [vmem:[%s5 + $0x4] sm:$0xf]
    %v465 = vld [vmem:[%s5 + $0x8] sm:$0xf]
    %v466 = vld [vmem:[%s5 + $0xc] sm:$0xf]
    %v467 = vld [vmem:[%s5 + $0x10] sm:$0xf]
    %v468 = vld [vmem:[%s5 + $0x14] sm:$0xf]
    %v469 = vld [vmem:[%s5 + $0x18] sm:$0xf]
    %v470 = vld [vmem:[%s5 + $0x1c] sm:$0xf]
    %v471 = vld [vmem:[%s5 + $0x20] sm:$0xf]
    %v472 = vld [vmem:[%s5 + $0x24] sm:$0xf]
    %v473 = vld [vmem:[%s5 + $0x28] sm:$0xf]
    %v474 = vld [vmem:[%s5 + $0x2c] sm:$0xf]
    %v475 = vld [vmem:[%s5 + $0x30] sm:$0xf]
    %v476 = vld [vmem:[%s5 + $0x34] sm:$0xf]
    %v477 = vld [vmem:[%s5 + $0x38] sm:$0xf]
    %v478 = vld [vmem:[%s5 + $0x3c] sm:$0xf]
    %v479 = vld [vmem:[%s6] sm:$0x1]
    %v481 = vlaneseq
    %v482 = vshrl.u32 %v481, 7
    %v483 = vsub.s32 0, %v482
    %v484 = vrot.slane %v479, %v483
    %v502 = vunpack.c.l.b16 %v463
    %v503 = vunpack.c.l.b16 %v464
    %v504 = vunpack.c.l.b16 %v465
    %v505 = vunpack.c.l.b16 %v466
    %v506 = vunpack.c.l.b16 %v467
    %v507 = vunpack.c.l.b16 %v468
    %v508 = vunpack.c.l.b16 %v469
    %v509 = vunpack.c.l.b16 %v470
    %v510 = vunpack.c.l.b16 %v471
    %v511 = vunpack.c.l.b16 %v472
    %v512 = vunpack.c.l.b16 %v473
    %v513 = vunpack.c.l.b16 %v474
    %v514 = vunpack.c.l.b16 %v475
    %v515 = vunpack.c.l.b16 %v476
    %v516 = vunpack.c.l.b16 %v477
    %v517 = vunpack.c.l.b16 %v478
    %v518 = vpack.c.b16 %v503, %v502
    %v519 = vpack.c.b16 %v505, %v504
    %v520 = vpack.c.b16 %v507, %v506
    %v521 = vpack.c.b16 %v509, %v508
    %v522 = vpack.c.b16 %v511, %v510
    %v523 = vpack.c.b16 %v513, %v512
    %v524 = vpack.c.b16 %v515, %v514
    %v525 = vpack.c.b16 %v517, %v516
    %534 = vmatprep.subr.bf16.mxu0 0
    %535 = vmatpush1.bf16.msra.mxu0 %v518
    %536 = vmatprep.subr.bf16.mxu0 0
    %537 = vmatpush1.bf16.msra.mxu0 %v519
    %538 = vmatprep.subr.bf16.mxu0 0
    %539 = vmatpush1.bf16.msra.mxu0 %v520
    %540 = vmatprep.subr.bf16.mxu0 0
    %541 = vmatpush1.bf16.msra.mxu0 %v521
    %542 = vmatprep.subr.bf16.mxu0 0
    %543 = vmatpush1.bf16.msra.mxu0 %v522
    %544 = vmatprep.subr.bf16.mxu0 0
    %545 = vmatpush1.bf16.msra.mxu0 %v523
    %546 = vmatprep.subr.bf16.mxu0 0
    %547 = vmatpush1.bf16.msra.mxu0 %v524
    %548 = vmatprep.subr.bf16.mxu0 0
    %549 = vmatpush1.bf16.msra.mxu0 %v525
    %550 = vmatprep.subr.bf16.mxu0 0
    %551 = vmatpush1.bf16.msra.mxu0 0
    %552 = vmatprep.subr.bf16.mxu0 0
    %553 = vmatpush1.bf16.msra.mxu0 0
    %554 = vmatprep.subr.bf16.mxu0 0
    %555 = vmatpush1.bf16.msra.mxu0 0
    %556 = vmatprep.subr.bf16.mxu0 0
    %557 = vmatpush1.bf16.msra.mxu0 0
    %558 = vmatprep.subr.bf16.mxu0 0
    %559 = vmatpush1.bf16.msra.mxu0 0
    %560 = vmatprep.subr.bf16.mxu0 0
    %561 = vmatpush1.bf16.msra.mxu0 0
    %562 = vmatprep.subr.bf16.mxu0 0
    %563 = vmatpush1.bf16.msra.mxu0 0
    %564 = vmatprep.subr.bf16.mxu0 0
    %565 = vmatpush1.bf16.msra.mxu0 0
    %566 = vmatprep.mubr.bf16.mxu0 0
    %567 = vmatmul.mubr.bf16.gmra.mrb[0].mxu0 %v462
    %v568 = vpop.f32.mrb[0].mxu0
    %v569 = vadd.f32 %v484, %v568
    %v570 = vpop.f32.mrb[0].mxu0
    %v571 = vpop.f32.mrb[0].mxu0
    %v572 = vpop.f32.mrb[0].mxu0
    %573 = vdwg.mxu0
    %vm574 = vcmask 74752
    %575 = vst.msk [vmem:[#allocation2] sm:$0x3] %vm574, %v569
    // Predicated region
    $region30: #{forward.5} parent=1 // pred_check
      _
    $region31: #{forward.5} parent=1 // pred_check_branch
      %577 = sbr.rel (0) target = $region33
    $region32: #{forward.5} parent=1 // pred_region
      %s579 = ssub.s32 32, 32
      %580 = vsyncadd [#allocation3], %s579
      %s582 = sshll.u32 [#allocation2], 4
      %s583 = int_to_ptr.vmem [resolvable:$true] %s582
      %585 = dma.vmem_to_hbm [thread:$0]  %s583, 32, %s7, [#allocation3]
    $region33: #{forward.5} parent=1 // pred_fallthru
      _
    // Predicated region
    $region34: #{forward.5} parent=1 // pred_check
      _
    $region35: #{forward.5} parent=1 // pred_check_branch
      %587 = sbr.rel (0) target = $region37
    $region36: #{forward.5} parent=1 // pred_region
      %588 = dma.done [#allocation3], 32
    $region37: #{forward.5} parent=1 // pred_fallthru
      _
    %589 = vsyncpa [#allocation3], 1

</llo_original>
